<compile_context>
chip_gen: v5e
topology: v5e:2x2
jax: 0.10.0
libtpu: 0.0.40
codegen_flags: <defaults>
</compile_context>

<pallas_src>
import functools

import jax
import jax.numpy as jnp
from jax.experimental import pallas as pl
from jax.experimental.pallas import tpu as pltpu

BN_EPS = 1e-5


def _residual_block_kernel(p1_ref, w1_ref, g1_ref, b1_ref,
                           w2_ref, g2_ref, b2_ref, sc_ref,
                           out_ref, hpad_ref, *, N, Ho, Wo, C):
    """Fused ResidualBlock: conv1+BN1+ReLU -> conv2+BN2 (+shortcut) + ReLU.

    p1_ref  : (M, 9*Cin) bf16  im2col'd conv1 input (wrapper-prepared)
    w1_ref  : (9*Cin, C) bf16  conv1 weight, tap-major (dy, dx, cin)
    w2_ref  : (9*C,   C) bf16  conv2 weight, tap-major (dy, dx, c)
    g*/b*   : (1, C)     f32   BatchNorm affine parameters
    sc_ref  : (M, C)     f32   shortcut branch (identity or subsample+chan-pad)
    out_ref : (M, C)     f32   block output
    hpad_ref: (N, Ho+2, Wo+2, C) f32 VMEM scratch for the padded intermediate
    """
    M = N * Ho * Wo

    # ---- conv1: one MXU matmul, K = 9*Cin (bf16 operands, f32 accumulate) ---
    acc1 = jnp.dot(p1_ref[...], w1_ref[...],
                   preferred_element_type=jnp.float32)

    # ---- BN1 (training-mode batch statistics) + ReLU, all f32 ---------------
    mean1 = jnp.mean(acc1, axis=0, keepdims=True)
    cent1 = acc1 - mean1
    var1 = jnp.mean(cent1 * cent1, axis=0, keepdims=True)
    h = cent1 * jax.lax.rsqrt(var1 + BN_EPS) * g1_ref[...] + b1_ref[...]
    h = jnp.maximum(h, 0.0)

    # ---- zero-pad the intermediate into VMEM scratch (spatial pad = 1) ------
    hpad_ref[...] = jnp.zeros(hpad_ref.shape, hpad_ref.dtype)
    hpad_ref[:, 1:Ho + 1, 1:Wo + 1, :] = h.reshape(N, Ho, Wo, C)

    # ---- conv2: build the (M, 9*C) operand ONCE (lane-axis concat of taps) --
    taps = [hpad_ref[:, dy:dy + Ho, dx:dx + Wo, :]
            for dy in range(3) for dx in range(3)]
    p2 = jnp.concatenate(taps, axis=-1).reshape(M, 9 * C)
    acc2 = jnp.dot(p2.astype(jnp.bfloat16), w2_ref[...],
                   preferred_element_type=jnp.float32)

    # ---- BN2 + residual + ReLU ----------------------------------------------
    mean2 = jnp.mean(acc2, axis=0, keepdims=True)
    cent2 = acc2 - mean2
    var2 = jnp.mean(cent2 * cent2, axis=0, keepdims=True)
    y = cent2 * jax.lax.rsqrt(var2 + BN_EPS) * g2_ref[...] + b2_ref[...]
    out_ref[...] = jnp.maximum(y + sc_ref[...], 0.0)


def _im2col_3x3(x, stride):
    """x: (N, H, W, Cin) -> ((N*Ho*Wo, 9*Cin), Ho, Wo) for a 3x3 pad-1 conv."""
    N, H, W, Cin = x.shape
    Ho = (H + 2 - 3) // stride + 1
    Wo = (W + 2 - 3) // stride + 1
    xp = jnp.pad(x, ((0, 0), (1, 1), (1, 1), (0, 0)))
    taps = [xp[:, dy:dy + (Ho - 1) * stride + 1:stride,
               dx:dx + (Wo - 1) * stride + 1:stride, :]
            for dy in range(3) for dx in range(3)]
    patches = jnp.concatenate(taps, axis=-1)          # (N, Ho, Wo, 9*Cin)
    return patches.reshape(N * Ho * Wo, 9 * Cin), Ho, Wo


def residual_block(x, p, channels, downsample):
    """NHWC residual block matching the PyTorch ResidualBlock forward."""
    N, H, W, Cin = x.shape
    C = channels
    stride = 2 if downsample else 1

    # conv1 im2col: single lane-dense (M, 9*Cin) operand, cast to bf16.
    patches1, Ho, Wo = _im2col_3x3(x, stride)
    M = N * Ho * Wo

    # Shortcut branch (kept in f32): identity, or subsample + channel pad
    # (== F.pad(x[..., ::2, ::2], (0,0,0,0, C//4, C//4)) in NCHW).
    if downsample:
        sc = x[:, ::2, ::2, :]
        pad_c = C // 4
        sc = jnp.pad(sc, ((0, 0), (0, 0), (0, 0), (pad_c, pad_c)))
    else:
        sc = x
    sc = sc.reshape(M, C).astype(jnp.float32)

    # Weights reshaped to tap-major (dy, dx, cin) rows, cast to bf16.
    w1 = p["w1"].reshape(9 * Cin, C).astype(jnp.bfloat16)
    w2 = p["w2"].reshape(9 * C, C).astype(jnp.bfloat16)

    inputs = (
        patches1.astype(jnp.bfloat16), w1,
        p["g1"].reshape(1, C).astype(jnp.float32),
        p["b1"].reshape(1, C).astype(jnp.float32),
        w2,
        p["g2"].reshape(1, C).astype(jnp.float32),
        p["b2"].reshape(1, C).astype(jnp.float32),
        sc,
    )

    kernel = functools.partial(_residual_block_kernel, N=N, Ho=Ho, Wo=Wo, C=C)

    out = pl.pallas_call(
        kernel,
        out_shape=jax.ShapeDtypeStruct((M, C), jnp.float32),
        in_specs=[pl.BlockSpec(memory_space=pltpu.MemorySpace.VMEM)
                  for _ in inputs],
        out_specs=pl.BlockSpec(memory_space=pltpu.MemorySpace.VMEM),
        scratch_shapes=[pltpu.VMEM((N, Ho + 2, Wo + 2, C), jnp.float32)],
    )(*inputs)
    return out.reshape(N, Ho, Wo, C)


def init_params(key, n, variant="alpha"):
    """Deterministic synthetic parameters (shapes follow the PyTorch module)."""
    specs = [(32, True)] + [(32, False)] * (n - 1) + [(64, True)]
    if variant == "beta":
        specs += [(64, False)] * (n - 2)
    params = []
    for ch, down in specs:
        cin = ch // 2 if down else ch
        key, k1, k2, k3, k4, k5, k6 = jax.random.split(key, 7)
        blk = dict(
            w1=jax.random.normal(k1, (3, 3, cin, ch), jnp.float32)
            / jnp.sqrt(9.0 * cin),
            g1=1.0 + 0.1 * jax.random.normal(k2, (ch,), jnp.float32),
            b1=0.1 * jax.random.normal(k3, (ch,), jnp.float32),
            w2=jax.random.normal(k4, (3, 3, ch, ch), jnp.float32)
            / jnp.sqrt(9.0 * ch),
            g2=1.0 + 0.1 * jax.random.normal(k5, (ch,), jnp.float32),
            b2=0.1 * jax.random.normal(k6, (ch,), jnp.float32),
        )
        params.append((blk, ch, down))
    return params


def resnet_processor(x_nchw, params):
    """ResNetProcessor forward. Input/output in NCHW like the PyTorch module."""
    x = jnp.transpose(x_nchw, (0, 2, 3, 1)).astype(jnp.float32)  # NCHW -> NHWC
    for blk, ch, down in params:
        x = residual_block(x, blk, ch, down)
    return jnp.transpose(x, (0, 3, 1, 2))  # NHWC -> NCHW


if __name__ == "__main__":
    key = jax.random.PRNGKey(0)
    kx, kp = jax.random.split(key)

    n = 2
    variant = "alpha"
    # First block is ResidualBlock(32, downsample=True) -> expects 16 input
    # channels. Small deterministic input: NCHW (2, 16, 16, 16).
    x = jax.random.normal(kx, (2, 16, 16, 16), jnp.float32)
    params = init_params(kp, n, variant)

    fwd = jax.jit(lambda inp: resnet_processor(inp, params))
    out = jax.block_until_ready(fwd(x))

    # 16x16 -> /2 -> 8x8 -> /2 -> 4x4, channels 16 -> 32 -> 64.
    assert out.shape == (2, 64, 4, 4), out.shape
    assert jnp.all(jnp.isfinite(out))
    print("KERNEL_OK")
</pallas_src>

<mosaic_0001>
module attributes {stable_mosaic.version = 11 : i64} {
  func.func @_residual_block_kernel(%arg0: memref<128x144xbf16, #tpu.memory_space<vmem>>, %arg1: memref<144x32xbf16, #tpu.memory_space<vmem>>, %arg2: memref<1x32xf32, #tpu.memory_space<vmem>>, %arg3: memref<1x32xf32, #tpu.memory_space<vmem>>, %arg4: memref<288x32xbf16, #tpu.memory_space<vmem>>, %arg5: memref<1x32xf32, #tpu.memory_space<vmem>>, %arg6: memref<1x32xf32, #tpu.memory_space<vmem>>, %arg7: memref<128x32xf32, #tpu.memory_space<vmem>>, %arg8: memref<128x32xf32, #tpu.memory_space<vmem>>, %arg9: memref<2x10x10x32xf32, #tpu.memory_space<vmem>>) attributes {dimension_semantics = [], scalar_prefetch = 0 : i64, scratch_operands = 1 : i64, tpu.core_type = #tpu.core_type<tc>} {
    %c0 = arith.constant 0 : index
    %c0_0 = arith.constant 0 : index
    %0 = vector.load %arg0[%c0, %c0_0] : memref<128x144xbf16, #tpu.memory_space<vmem>>, vector<128x144xbf16>
    %c0_1 = arith.constant 0 : index
    %c0_2 = arith.constant 0 : index
    %1 = vector.load %arg1[%c0_1, %c0_2] : memref<144x32xbf16, #tpu.memory_space<vmem>>, vector<144x32xbf16>
    %cst = arith.constant dense<0.000000e+00> : vector<128x32xf32>
    %2 = tpu.matmul %0, %1, %cst {dimension_numbers = #tpu.dot_dimension_numbers<[1], [0], [0], [1], [0, 0, 1, 1], [], []>} : vector<128x144xbf16>, vector<144x32xbf16>, vector<128x32xf32> -> vector<128x32xf32>
    %cst_3 = arith.constant dense<0.000000e+00> : vector<32xf32>
    %3 = vector.multi_reduction <add>, %2, %cst_3 [0] : vector<128x32xf32> to vector<32xf32>
    %4 = vector.shape_cast %3 : vector<32xf32> to vector<1x32xf32>
    %cst_4 = arith.constant 1.280000e+02 : f32
    %5 = vector.broadcast %cst_4 : f32 to vector<1x32xf32>
    %6 = arith.divf %4, %5 : vector<1x32xf32>
    %7 = vector.broadcast %6 : vector<1x32xf32> to vector<128x32xf32>
    %8 = arith.subf %2, %7 : vector<128x32xf32>
    %9 = arith.mulf %8, %8 : vector<128x32xf32>
    %cst_5 = arith.constant dense<0.000000e+00> : vector<32xf32>
    %10 = vector.multi_reduction <add>, %9, %cst_5 [0] : vector<128x32xf32> to vector<32xf32>
    %11 = vector.shape_cast %10 : vector<32xf32> to vector<1x32xf32>
    %cst_6 = arith.constant 1.280000e+02 : f32
    %12 = vector.broadcast %cst_6 : f32 to vector<1x32xf32>
    %13 = arith.divf %11, %12 : vector<1x32xf32>
    %cst_7 = arith.constant 9.99999974E-6 : f32
    %14 = vector.broadcast %cst_7 : f32 to vector<1x32xf32>
    %15 = arith.addf %13, %14 : vector<1x32xf32>
    %16 = math.rsqrt %15 : vector<1x32xf32>
    %17 = vector.broadcast %16 : vector<1x32xf32> to vector<128x32xf32>
    %18 = arith.mulf %8, %17 : vector<128x32xf32>
    %c0_8 = arith.constant 0 : index
    %c0_9 = arith.constant 0 : index
    %19 = vector.load %arg2[%c0_8, %c0_9] : memref<1x32xf32, #tpu.memory_space<vmem>>, vector<1x32xf32>
    %20 = vector.broadcast %19 : vector<1x32xf32> to vector<128x32xf32>
    %21 = arith.mulf %18, %20 : vector<128x32xf32>
    %c0_10 = arith.constant 0 : index
    %c0_11 = arith.constant 0 : index
    %22 = vector.load %arg3[%c0_10, %c0_11] : memref<1x32xf32, #tpu.memory_space<vmem>>, vector<1x32xf32>
    %23 = vector.broadcast %22 : vector<1x32xf32> to vector<128x32xf32>
    %24 = arith.addf %21, %23 : vector<128x32xf32>
    %cst_12 = arith.constant 0.000000e+00 : f32
    %25 = vector.broadcast %cst_12 : f32 to vector<128x32xf32>
    %26 = arith.maximumf %24, %25 : vector<128x32xf32>
    %cst_13 = arith.constant 0.000000e+00 : f32
    %27 = vector.broadcast %cst_13 : f32 to vector<2x10x10x32xf32>
    %c0_14 = arith.constant 0 : index
    %c0_15 = arith.constant 0 : index
    %c0_16 = arith.constant 0 : index
    %c0_17 = arith.constant 0 : index
    %28 = vector.load %arg9[%c0_14, %c0_15, %c0_16, %c0_17] : memref<2x10x10x32xf32, #tpu.memory_space<vmem>>, vector<2x10x10x32xf32>
    tpu.vector_store %arg9[%c0_14, %c0_15, %c0_16, %c0_17], %27 {strides = array<i32>} : memref<2x10x10x32xf32, #tpu.memory_space<vmem>>, vector<2x10x10x32xf32>,
    %29 = vector.shape_cast %26 : vector<128x32xf32> to vector<2x8x8x32xf32>
    %c0_18 = arith.constant 0 : index
    %c1 = arith.constant 1 : index
    %c1_19 = arith.constant 1 : index
    %c0_20 = arith.constant 0 : index
    %30 = vector.load %arg9[%c0_18, %c1, %c1_19, %c0_20] : memref<2x10x10x32xf32, #tpu.memory_space<vmem>>, vector<2x8x8x32xf32>
    tpu.vector_store %arg9[%c0_18, %c1, %c1_19, %c0_20], %29 {strides = array<i32>} : memref<2x10x10x32xf32, #tpu.memory_space<vmem>>, vector<2x8x8x32xf32>,
    %c0_21 = arith.constant 0 : index
    %c0_22 = arith.constant 0 : index
    %c0_23 = arith.constant 0 : index
    %c0_24 = arith.constant 0 : index
    %31 = vector.load %arg9[%c0_21, %c0_22, %c0_23, %c0_24] : memref<2x10x10x32xf32, #tpu.memory_space<vmem>>, vector<2x8x8x32xf32>
    %c0_25 = arith.constant 0 : index
    %c0_26 = arith.constant 0 : index
    %c1_27 = arith.constant 1 : index
    %c0_28 = arith.constant 0 : index
    %32 = vector.load %arg9[%c0_25, %c0_26, %c1_27, %c0_28] : memref<2x10x10x32xf32, #tpu.memory_space<vmem>>, vector<2x8x8x32xf32>
    %c0_29 = arith.constant 0 : index
    %c0_30 = arith.constant 0 : index
    %c2 = arith.constant 2 : index
    %c0_31 = arith.constant 0 : index
    %33 = vector.load %arg9[%c0_29, %c0_30, %c2, %c0_31] : memref<2x10x10x32xf32, #tpu.memory_space<vmem>>, vector<2x8x8x32xf32>
    %c0_32 = arith.constant 0 : index
    %c1_33 = arith.constant 1 : index
    %c0_34 = arith.constant 0 : index
    %c0_35 = arith.constant 0 : index
    %34 = vector.load %arg9[%c0_32, %c1_33, %c0_34, %c0_35] : memref<2x10x10x32xf32, #tpu.memory_space<vmem>>, vector<2x8x8x32xf32>
    %c0_36 = arith.constant 0 : index
    %c1_37 = arith.constant 1 : index
    %c1_38 = arith.constant 1 : index
    %c0_39 = arith.constant 0 : index
    %35 = vector.load %arg9[%c0_36, %c1_37, %c1_38, %c0_39] : memref<2x10x10x32xf32, #tpu.memory_space<vmem>>, vector<2x8x8x32xf32>
    %c0_40 = arith.constant 0 : index
    %c1_41 = arith.constant 1 : index
    %c2_42 = arith.constant 2 : index
    %c0_43 = arith.constant 0 : index
    %36 = vector.load %arg9[%c0_40, %c1_41, %c2_42, %c0_43] : memref<2x10x10x32xf32, #tpu.memory_space<vmem>>, vector<2x8x8x32xf32>
    %c0_44 = arith.constant 0 : index
    %c2_45 = arith.constant 2 : index
    %c0_46 = arith.constant 0 : index
    %c0_47 = arith.constant 0 : index
    %37 = vector.load %arg9[%c0_44, %c2_45, %c0_46, %c0_47] : memref<2x10x10x32xf32, #tpu.memory_space<vmem>>, vector<2x8x8x32xf32>
    %c0_48 = arith.constant 0 : index
    %c2_49 = arith.constant 2 : index
    %c1_50 = arith.constant 1 : index
    %c0_51 = arith.constant 0 : index
    %38 = vector.load %arg9[%c0_48, %c2_49, %c1_50, %c0_51] : memref<2x10x10x32xf32, #tpu.memory_space<vmem>>, vector<2x8x8x32xf32>
    %c0_52 = arith.constant 0 : index
    %c2_53 = arith.constant 2 : index
    %c2_54 = arith.constant 2 : index
    %c0_55 = arith.constant 0 : index
    %39 = vector.load %arg9[%c0_52, %c2_53, %c2_54, %c0_55] : memref<2x10x10x32xf32, #tpu.memory_space<vmem>>, vector<2x8x8x32xf32>
    %40 = tpu.concatenate %31, %32, %33, %34, %35, %36, %37, %38, %39 in 3 : vector<2x8x8x32xf32>, vector<2x8x8x32xf32>, vector<2x8x8x32xf32>, vector<2x8x8x32xf32>, vector<2x8x8x32xf32>, vector<2x8x8x32xf32>, vector<2x8x8x32xf32>, vector<2x8x8x32xf32>, vector<2x8x8x32xf32> -> vector<2x8x8x288xf32>
    %41 = vector.shape_cast %40 : vector<2x8x8x288xf32> to vector<128x288xf32>
    %42 = arith.truncf %41 : vector<128x288xf32> to vector<128x288xbf16>
    %c0_56 = arith.constant 0 : index
    %c0_57 = arith.constant 0 : index
    %43 = vector.load %arg4[%c0_56, %c0_57] : memref<288x32xbf16, #tpu.memory_space<vmem>>, vector<288x32xbf16>
    %cst_58 = arith.constant dense<0.000000e+00> : vector<128x32xf32>
    %44 = tpu.matmul %42, %43, %cst_58 {dimension_numbers = #tpu.dot_dimension_numbers<[1], [0], [0], [1], [0, 0, 1, 1], [], []>} : vector<128x288xbf16>, vector<288x32xbf16>, vector<128x32xf32> -> vector<128x32xf32>
    %cst_59 = arith.constant dense<0.000000e+00> : vector<32xf32>
    %45 = vector.multi_reduction <add>, %44, %cst_59 [0] : vector<128x32xf32> to vector<32xf32>
    %46 = vector.shape_cast %45 : vector<32xf32> to vector<1x32xf32>
    %cst_60 = arith.constant 1.280000e+02 : f32
    %47 = vector.broadcast %cst_60 : f32 to vector<1x32xf32>
    %48 = arith.divf %46, %47 : vector<1x32xf32>
    %49 = vector.broadcast %48 : vector<1x32xf32> to vector<128x32xf32>
    %50 = arith.subf %44, %49 : vector<128x32xf32>
    %51 = arith.mulf %50, %50 : vector<128x32xf32>
    %cst_61 = arith.constant dense<0.000000e+00> : vector<32xf32>
    %52 = vector.multi_reduction <add>, %51, %cst_61 [0] : vector<128x32xf32> to vector<32xf32>
    %53 = vector.shape_cast %52 : vector<32xf32> to vector<1x32xf32>
    %cst_62 = arith.constant 1.280000e+02 : f32
    %54 = vector.broadcast %cst_62 : f32 to vector<1x32xf32>
    %55 = arith.divf %53, %54 : vector<1x32xf32>
    %cst_63 = arith.constant 9.99999974E-6 : f32
    %56 = vector.broadcast %cst_63 : f32 to vector<1x32xf32>
    %57 = arith.addf %55, %56 : vector<1x32xf32>
    %58 = math.rsqrt %57 : vector<1x32xf32>
    %59 = vector.broadcast %58 : vector<1x32xf32> to vector<128x32xf32>
    %60 = arith.mulf %50, %59 : vector<128x32xf32>
    %c0_64 = arith.constant 0 : index
    %c0_65 = arith.constant 0 : index
    %61 = vector.load %arg5[%c0_64, %c0_65] : memref<1x32xf32, #tpu.memory_space<vmem>>, vector<1x32xf32>
    %62 = vector.broadcast %61 : vector<1x32xf32> to vector<128x32xf32>
    %63 = arith.mulf %60, %62 : vector<128x32xf32>
    %c0_66 = arith.constant 0 : index
    %c0_67 = arith.constant 0 : index
    %64 = vector.load %arg6[%c0_66, %c0_67] : memref<1x32xf32, #tpu.memory_space<vmem>>, vector<1x32xf32>
    %65 = vector.broadcast %64 : vector<1x32xf32> to vector<128x32xf32>
    %66 = arith.addf %63, %65 : vector<128x32xf32>
    %c0_68 = arith.constant 0 : index
    %c0_69 = arith.constant 0 : index
    %67 = vector.load %arg7[%c0_68, %c0_69] : memref<128x32xf32, #tpu.memory_space<vmem>>, vector<128x32xf32>
    %68 = arith.addf %66, %67 : vector<128x32xf32>
    %cst_70 = arith.constant 0.000000e+00 : f32
    %69 = vector.broadcast %cst_70 : f32 to vector<128x32xf32>
    %70 = arith.maximumf %68, %69 : vector<128x32xf32>
    %c0_71 = arith.constant 0 : index
    %c0_72 = arith.constant 0 : index
    %71 = vector.load %arg8[%c0_71, %c0_72] : memref<128x32xf32, #tpu.memory_space<vmem>>, vector<128x32xf32>
    tpu.vector_store %arg8[%c0_71, %c0_72], %70 {strides = array<i32>} : memref<128x32xf32, #tpu.memory_space<vmem>>, vector<128x32xf32>,
    return
  }
}

module attributes {stable_mosaic.version = 11 : i64} {
  func.func @_residual_block_kernel(%arg0: memref<128x288xbf16, #tpu.memory_space<vmem>>, %arg1: memref<288x32xbf16, #tpu.memory_space<vmem>>, %arg2: memref<1x32xf32, #tpu.memory_space<vmem>>, %arg3: memref<1x32xf32, #tpu.memory_space<vmem>>, %arg4: memref<288x32xbf16, #tpu.memory_space<vmem>>, %arg5: memref<1x32xf32, #tpu.memory_space<vmem>>, %arg6: memref<1x32xf32, #tpu.memory_space<vmem>>, %arg7: memref<128x32xf32, #tpu.memory_space<vmem>>, %arg8: memref<128x32xf32, #tpu.memory_space<vmem>>, %arg9: memref<2x10x10x32xf32, #tpu.memory_space<vmem>>) attributes {dimension_semantics = [], scalar_prefetch = 0 : i64, scratch_operands = 1 : i64, tpu.core_type = #tpu.core_type<tc>} {
    %c0 = arith.constant 0 : index
    %c0_0 = arith.constant 0 : index
    %0 = vector.load %arg0[%c0, %c0_0] : memref<128x288xbf16, #tpu.memory_space<vmem>>, vector<128x288xbf16>
    %c0_1 = arith.constant 0 : index
    %c0_2 = arith.constant 0 : index
    %1 = vector.load %arg1[%c0_1, %c0_2] : memref<288x32xbf16, #tpu.memory_space<vmem>>, vector<288x32xbf16>
    %cst = arith.constant dense<0.000000e+00> : vector<128x32xf32>
    %2 = tpu.matmul %0, %1, %cst {dimension_numbers = #tpu.dot_dimension_numbers<[1], [0], [0], [1], [0, 0, 1, 1], [], []>} : vector<128x288xbf16>, vector<288x32xbf16>, vector<128x32xf32> -> vector<128x32xf32>
    %cst_3 = arith.constant dense<0.000000e+00> : vector<32xf32>
    %3 = vector.multi_reduction <add>, %2, %cst_3 [0] : vector<128x32xf32> to vector<32xf32>
    %4 = vector.shape_cast %3 : vector<32xf32> to vector<1x32xf32>
    %cst_4 = arith.constant 1.280000e+02 : f32
    %5 = vector.broadcast %cst_4 : f32 to vector<1x32xf32>
    %6 = arith.divf %4, %5 : vector<1x32xf32>
    %7 = vector.broadcast %6 : vector<1x32xf32> to vector<128x32xf32>
    %8 = arith.subf %2, %7 : vector<128x32xf32>
    %9 = arith.mulf %8, %8 : vector<128x32xf32>
    %cst_5 = arith.constant dense<0.000000e+00> : vector<32xf32>
    %10 = vector.multi_reduction <add>, %9, %cst_5 [0] : vector<128x32xf32> to vector<32xf32>
    %11 = vector.shape_cast %10 : vector<32xf32> to vector<1x32xf32>
    %cst_6 = arith.constant 1.280000e+02 : f32
    %12 = vector.broadcast %cst_6 : f32 to vector<1x32xf32>
    %13 = arith.divf %11, %12 : vector<1x32xf32>
    %cst_7 = arith.constant 9.99999974E-6 : f32
    %14 = vector.broadcast %cst_7 : f32 to vector<1x32xf32>
    %15 = arith.addf %13, %14 : vector<1x32xf32>
    %16 = math.rsqrt %15 : vector<1x32xf32>
    %17 = vector.broadcast %16 : vector<1x32xf32> to vector<128x32xf32>
    %18 = arith.mulf %8, %17 : vector<128x32xf32>
    %c0_8 = arith.constant 0 : index
    %c0_9 = arith.constant 0 : index
    %19 = vector.load %arg2[%c0_8, %c0_9] : memref<1x32xf32, #tpu.memory_space<vmem>>, vector<1x32xf32>
    %20 = vector.broadcast %19 : vector<1x32xf32> to vector<128x32xf32>
    %21 = arith.mulf %18, %20 : vector<128x32xf32>
    %c0_10 = arith.constant 0 : index
    %c0_11 = arith.constant 0 : index
    %22 = vector.load %arg3[%c0_10, %c0_11] : memref<1x32xf32, #tpu.memory_space<vmem>>, vector<1x32xf32>
    %23 = vector.broadcast %22 : vector<1x32xf32> to vector<128x32xf32>
    %24 = arith.addf %21, %23 : vector<128x32xf32>
    %cst_12 = arith.constant 0.000000e+00 : f32
    %25 = vector.broadcast %cst_12 : f32 to vector<128x32xf32>
    %26 = arith.maximumf %24, %25 : vector<128x32xf32>
    %cst_13 = arith.constant 0.000000e+00 : f32
    %27 = vector.broadcast %cst_13 : f32 to vector<2x10x10x32xf32>
    %c0_14 = arith.constant 0 : index
    %c0_15 = arith.constant 0 : index
    %c0_16 = arith.constant 0 : index
    %c0_17 = arith.constant 0 : index
    %28 = vector.load %arg9[%c0_14, %c0_15, %c0_16, %c0_17] : memref<2x10x10x32xf32, #tpu.memory_space<vmem>>, vector<2x10x10x32xf32>
    tpu.vector_store %arg9[%c0_14, %c0_15, %c0_16, %c0_17], %27 {strides = array<i32>} : memref<2x10x10x32xf32, #tpu.memory_space<vmem>>, vector<2x10x10x32xf32>,
    %29 = vector.shape_cast %26 : vector<128x32xf32> to vector<2x8x8x32xf32>
    %c0_18 = arith.constant 0 : index
    %c1 = arith.constant 1 : index
    %c1_19 = arith.constant 1 : index
    %c0_20 = arith.constant 0 : index
    %30 = vector.load %arg9[%c0_18, %c1, %c1_19, %c0_20] : memref<2x10x10x32xf32, #tpu.memory_space<vmem>>, vector<2x8x8x32xf32>
    tpu.vector_store %arg9[%c0_18, %c1, %c1_19, %c0_20], %29 {strides = array<i32>} : memref<2x10x10x32xf32, #tpu.memory_space<vmem>>, vector<2x8x8x32xf32>,
    %c0_21 = arith.constant 0 : index
    %c0_22 = arith.constant 0 : index
    %c0_23 = arith.constant 0 : index
    %c0_24 = arith.constant 0 : index
    %31 = vector.load %arg9[%c0_21, %c0_22, %c0_23, %c0_24] : memref<2x10x10x32xf32, #tpu.memory_space<vmem>>, vector<2x8x8x32xf32>
    %c0_25 = arith.constant 0 : index
    %c0_26 = arith.constant 0 : index
    %c1_27 = arith.constant 1 : index
    %c0_28 = arith.constant 0 : index
    %32 = vector.load %arg9[%c0_25, %c0_26, %c1_27, %c0_28] : memref<2x10x10x32xf32, #tpu.memory_space<vmem>>, vector<2x8x8x32xf32>
    %c0_29 = arith.constant 0 : index
    %c0_30 = arith.constant 0 : index
    %c2 = arith.constant 2 : index
    %c0_31 = arith.constant 0 : index
    %33 = vector.load %arg9[%c0_29, %c0_30, %c2, %c0_31] : memref<2x10x10x32xf32, #tpu.memory_space<vmem>>, vector<2x8x8x32xf32>
    %c0_32 = arith.constant 0 : index
    %c1_33 = arith.constant 1 : index
    %c0_34 = arith.constant 0 : index
    %c0_35 = arith.constant 0 : index
    %34 = vector.load %arg9[%c0_32, %c1_33, %c0_34, %c0_35] : memref<2x10x10x32xf32, #tpu.memory_space<vmem>>, vector<2x8x8x32xf32>
    %c0_36 = arith.constant 0 : index
    %c1_37 = arith.constant 1 : index
    %c1_38 = arith.constant 1 : index
    %c0_39 = arith.constant 0 : index
    %35 = vector.load %arg9[%c0_36, %c1_37, %c1_38, %c0_39] : memref<2x10x10x32xf32, #tpu.memory_space<vmem>>, vector<2x8x8x32xf32>
    %c0_40 = arith.constant 0 : index
    %c1_41 = arith.constant 1 : index
    %c2_42 = arith.constant 2 : index
    %c0_43 = arith.constant 0 : index
    %36 = vector.load %arg9[%c0_40, %c1_41, %c2_42, %c0_43] : memref<2x10x10x32xf32, #tpu.memory_space<vmem>>, vector<2x8x8x32xf32>
    %c0_44 = arith.constant 0 : index
    %c2_45 = arith.constant 2 : index
    %c0_46 = arith.constant 0 : index
    %c0_47 = arith.constant 0 : index
    %37 = vector.load %arg9[%c0_44, %c2_45, %c0_46, %c0_47] : memref<2x10x10x32xf32, #tpu.memory_space<vmem>>, vector<2x8x8x32xf32>
    %c0_48 = arith.constant 0 : index
    %c2_49 = arith.constant 2 : index
    %c1_50 = arith.constant 1 : index
    %c0_51 = arith.constant 0 : index
    %38 = vector.load %arg9[%c0_48, %c2_49, %c1_50, %c0_51] : memref<2x10x10x32xf32, #tpu.memory_space<vmem>>, vector<2x8x8x32xf32>
    %c0_52 = arith.constant 0 : index
    %c2_53 = arith.constant 2 : index
    %c2_54 = arith.constant 2 : index
    %c0_55 = arith.constant 0 : index
    %39 = vector.load %arg9[%c0_52, %c2_53, %c2_54, %c0_55] : memref<2x10x10x32xf32, #tpu.memory_space<vmem>>, vector<2x8x8x32xf32>
    %40 = tpu.concatenate %31, %32, %33, %34, %35, %36, %37, %38, %39 in 3 : vector<2x8x8x32xf32>, vector<2x8x8x32xf32>, vector<2x8x8x32xf32>, vector<2x8x8x32xf32>, vector<2x8x8x32xf32>, vector<2x8x8x32xf32>, vector<2x8x8x32xf32>, vector<2x8x8x32xf32>, vector<2x8x8x32xf32> -> vector<2x8x8x288xf32>
    %41 = vector.shape_cast %40 : vector<2x8x8x288xf32> to vector<128x288xf32>
    %42 = arith.truncf %41 : vector<128x288xf32> to vector<128x288xbf16>
    %c0_56 = arith.constant 0 : index
    %c0_57 = arith.constant 0 : index
    %43 = vector.load %arg4[%c0_56, %c0_57] : memref<288x32xbf16, #tpu.memory_space<vmem>>, vector<288x32xbf16>
    %cst_58 = arith.constant dense<0.000000e+00> : vector<128x32xf32>
    %44 = tpu.matmul %42, %43, %cst_58 {dimension_numbers = #tpu.dot_dimension_numbers<[1], [0], [0], [1], [0, 0, 1, 1], [], []>} : vector<128x288xbf16>, vector<288x32xbf16>, vector<128x32xf32> -> vector<128x32xf32>
    %cst_59 = arith.constant dense<0.000000e+00> : vector<32xf32>
    %45 = vector.multi_reduction <add>, %44, %cst_59 [0] : vector<128x32xf32> to vector<32xf32>
    %46 = vector.shape_cast %45 : vector<32xf32> to vector<1x32xf32>
    %cst_60 = arith.constant 1.280000e+02 : f32
    %47 = vector.broadcast %cst_60 : f32 to vector<1x32xf32>
    %48 = arith.divf %46, %47 : vector<1x32xf32>
    %49 = vector.broadcast %48 : vector<1x32xf32> to vector<128x32xf32>
    %50 = arith.subf %44, %49 : vector<128x32xf32>
    %51 = arith.mulf %50, %50 : vector<128x32xf32>
    %cst_61 = arith.constant dense<0.000000e+00> : vector<32xf32>
    %52 = vector.multi_reduction <add>, %51, %cst_61 [0] : vector<128x32xf32> to vector<32xf32>
    %53 = vector.shape_cast %52 : vector<32xf32> to vector<1x32xf32>
    %cst_62 = arith.constant 1.280000e+02 : f32
    %54 = vector.broadcast %cst_62 : f32 to vector<1x32xf32>
    %55 = arith.divf %53, %54 : vector<1x32xf32>
    %cst_63 = arith.constant 9.99999974E-6 : f32
    %56 = vector.broadcast %cst_63 : f32 to vector<1x32xf32>
    %57 = arith.addf %55, %56 : vector<1x32xf32>
    %58 = math.rsqrt %57 : vector<1x32xf32>
    %59 = vector.broadcast %58 : vector<1x32xf32> to vector<128x32xf32>
    %60 = arith.mulf %50, %59 : vector<128x32xf32>
    %c0_64 = arith.constant 0 : index
    %c0_65 = arith.constant 0 : index
    %61 = vector.load %arg5[%c0_64, %c0_65] : memref<1x32xf32, #tpu.memory_space<vmem>>, vector<1x32xf32>
    %62 = vector.broadcast %61 : vector<1x32xf32> to vector<128x32xf32>
    %63 = arith.mulf %60, %62 : vector<128x32xf32>
    %c0_66 = arith.constant 0 : index
    %c0_67 = arith.constant 0 : index
    %64 = vector.load %arg6[%c0_66, %c0_67] : memref<1x32xf32, #tpu.memory_space<vmem>>, vector<1x32xf32>
    %65 = vector.broadcast %64 : vector<1x32xf32> to vector<128x32xf32>
    %66 = arith.addf %63, %65 : vector<128x32xf32>
    %c0_68 = arith.constant 0 : index
    %c0_69 = arith.constant 0 : index
    %67 = vector.load %arg7[%c0_68, %c0_69] : memref<128x32xf32, #tpu.memory_space<vmem>>, vector<128x32xf32>
    %68 = arith.addf %66, %67 : vector<128x32xf32>
    %cst_70 = arith.constant 0.000000e+00 : f32
    %69 = vector.broadcast %cst_70 : f32 to vector<128x32xf32>
    %70 = arith.maximumf %68, %69 : vector<128x32xf32>
    %c0_71 = arith.constant 0 : index
    %c0_72 = arith.constant 0 : index
    %71 = vector.load %arg8[%c0_71, %c0_72] : memref<128x32xf32, #tpu.memory_space<vmem>>, vector<128x32xf32>
    tpu.vector_store %arg8[%c0_71, %c0_72], %70 {strides = array<i32>} : memref<128x32xf32, #tpu.memory_space<vmem>>, vector<128x32xf32>,
    return
  }
}

module attributes {stable_mosaic.version = 11 : i64} {
  func.func @_residual_block_kernel(%arg0: memref<32x288xbf16, #tpu.memory_space<vmem>>, %arg1: memref<288x64xbf16, #tpu.memory_space<vmem>>, %arg2: memref<1x64xf32, #tpu.memory_space<vmem>>, %arg3: memref<1x64xf32, #tpu.memory_space<vmem>>, %arg4: memref<576x64xbf16, #tpu.memory_space<vmem>>, %arg5: memref<1x64xf32, #tpu.memory_space<vmem>>, %arg6: memref<1x64xf32, #tpu.memory_space<vmem>>, %arg7: memref<32x64xf32, #tpu.memory_space<vmem>>, %arg8: memref<32x64xf32, #tpu.memory_space<vmem>>, %arg9: memref<2x6x6x64xf32, #tpu.memory_space<vmem>>) attributes {dimension_semantics = [], scalar_prefetch = 0 : i64, scratch_operands = 1 : i64, tpu.core_type = #tpu.core_type<tc>} {
    %c0 = arith.constant 0 : index
    %c0_0 = arith.constant 0 : index
    %0 = vector.load %arg0[%c0, %c0_0] : memref<32x288xbf16, #tpu.memory_space<vmem>>, vector<32x288xbf16>
    %c0_1 = arith.constant 0 : index
    %c0_2 = arith.constant 0 : index
    %1 = vector.load %arg1[%c0_1, %c0_2] : memref<288x64xbf16, #tpu.memory_space<vmem>>, vector<288x64xbf16>
    %cst = arith.constant dense<0.000000e+00> : vector<32x64xf32>
    %2 = tpu.matmul %0, %1, %cst {dimension_numbers = #tpu.dot_dimension_numbers<[1], [0], [0], [1], [0, 0, 1, 1], [], []>} : vector<32x288xbf16>, vector<288x64xbf16>, vector<32x64xf32> -> vector<32x64xf32>
    %cst_3 = arith.constant dense<0.000000e+00> : vector<64xf32>
    %3 = vector.multi_reduction <add>, %2, %cst_3 [0] : vector<32x64xf32> to vector<64xf32>
    %4 = vector.shape_cast %3 : vector<64xf32> to vector<1x64xf32>
    %cst_4 = arith.constant 3.200000e+01 : f32
    %5 = vector.broadcast %cst_4 : f32 to vector<1x64xf32>
    %6 = arith.divf %4, %5 : vector<1x64xf32>
    %7 = vector.broadcast %6 : vector<1x64xf32> to vector<32x64xf32>
    %8 = arith.subf %2, %7 : vector<32x64xf32>
    %9 = arith.mulf %8, %8 : vector<32x64xf32>
    %cst_5 = arith.constant dense<0.000000e+00> : vector<64xf32>
    %10 = vector.multi_reduction <add>, %9, %cst_5 [0] : vector<32x64xf32> to vector<64xf32>
    %11 = vector.shape_cast %10 : vector<64xf32> to vector<1x64xf32>
    %cst_6 = arith.constant 3.200000e+01 : f32
    %12 = vector.broadcast %cst_6 : f32 to vector<1x64xf32>
    %13 = arith.divf %11, %12 : vector<1x64xf32>
    %cst_7 = arith.constant 9.99999974E-6 : f32
    %14 = vector.broadcast %cst_7 : f32 to vector<1x64xf32>
    %15 = arith.addf %13, %14 : vector<1x64xf32>
    %16 = math.rsqrt %15 : vector<1x64xf32>
    %17 = vector.broadcast %16 : vector<1x64xf32> to vector<32x64xf32>
    %18 = arith.mulf %8, %17 : vector<32x64xf32>
    %c0_8 = arith.constant 0 : index
    %c0_9 = arith.constant 0 : index
    %19 = vector.load %arg2[%c0_8, %c0_9] : memref<1x64xf32, #tpu.memory_space<vmem>>, vector<1x64xf32>
    %20 = vector.broadcast %19 : vector<1x64xf32> to vector<32x64xf32>
    %21 = arith.mulf %18, %20 : vector<32x64xf32>
    %c0_10 = arith.constant 0 : index
    %c0_11 = arith.constant 0 : index
    %22 = vector.load %arg3[%c0_10, %c0_11] : memref<1x64xf32, #tpu.memory_space<vmem>>, vector<1x64xf32>
    %23 = vector.broadcast %22 : vector<1x64xf32> to vector<32x64xf32>
    %24 = arith.addf %21, %23 : vector<32x64xf32>
    %cst_12 = arith.constant 0.000000e+00 : f32
    %25 = vector.broadcast %cst_12 : f32 to vector<32x64xf32>
    %26 = arith.maximumf %24, %25 : vector<32x64xf32>
    %cst_13 = arith.constant 0.000000e+00 : f32
    %27 = vector.broadcast %cst_13 : f32 to vector<2x6x6x64xf32>
    %c0_14 = arith.constant 0 : index
    %c0_15 = arith.constant 0 : index
    %c0_16 = arith.constant 0 : index
    %c0_17 = arith.constant 0 : index
    %28 = vector.load %arg9[%c0_14, %c0_15, %c0_16, %c0_17] : memref<2x6x6x64xf32, #tpu.memory_space<vmem>>, vector<2x6x6x64xf32>
    tpu.vector_store %arg9[%c0_14, %c0_15, %c0_16, %c0_17], %27 {strides = array<i32>} : memref<2x6x6x64xf32, #tpu.memory_space<vmem>>, vector<2x6x6x64xf32>,
    %29 = vector.shape_cast %26 : vector<32x64xf32> to vector<2x4x4x64xf32>
    %c0_18 = arith.constant 0 : index
    %c1 = arith.constant 1 : index
    %c1_19 = arith.constant 1 : index
    %c0_20 = arith.constant 0 : index
    %30 = vector.load %arg9[%c0_18, %c1, %c1_19, %c0_20] : memref<2x6x6x64xf32, #tpu.memory_space<vmem>>, vector<2x4x4x64xf32>
    tpu.vector_store %arg9[%c0_18, %c1, %c1_19, %c0_20], %29 {strides = array<i32>} : memref<2x6x6x64xf32, #tpu.memory_space<vmem>>, vector<2x4x4x64xf32>,
    %c0_21 = arith.constant 0 : index
    %c0_22 = arith.constant 0 : index
    %c0_23 = arith.constant 0 : index
    %c0_24 = arith.constant 0 : index
    %31 = vector.load %arg9[%c0_21, %c0_22, %c0_23, %c0_24] : memref<2x6x6x64xf32, #tpu.memory_space<vmem>>, vector<2x4x4x64xf32>
    %c0_25 = arith.constant 0 : index
    %c0_26 = arith.constant 0 : index
    %c1_27 = arith.constant 1 : index
    %c0_28 = arith.constant 0 : index
    %32 = vector.load %arg9[%c0_25, %c0_26, %c1_27, %c0_28] : memref<2x6x6x64xf32, #tpu.memory_space<vmem>>, vector<2x4x4x64xf32>
    %c0_29 = arith.constant 0 : index
    %c0_30 = arith.constant 0 : index
    %c2 = arith.constant 2 : index
    %c0_31 = arith.constant 0 : index
    %33 = vector.load %arg9[%c0_29, %c0_30, %c2, %c0_31] : memref<2x6x6x64xf32, #tpu.memory_space<vmem>>, vector<2x4x4x64xf32>
    %c0_32 = arith.constant 0 : index
    %c1_33 = arith.constant 1 : index
    %c0_34 = arith.constant 0 : index
    %c0_35 = arith.constant 0 : index
    %34 = vector.load %arg9[%c0_32, %c1_33, %c0_34, %c0_35] : memref<2x6x6x64xf32, #tpu.memory_space<vmem>>, vector<2x4x4x64xf32>
    %c0_36 = arith.constant 0 : index
    %c1_37 = arith.constant 1 : index
    %c1_38 = arith.constant 1 : index
    %c0_39 = arith.constant 0 : index
    %35 = vector.load %arg9[%c0_36, %c1_37, %c1_38, %c0_39] : memref<2x6x6x64xf32, #tpu.memory_space<vmem>>, vector<2x4x4x64xf32>
    %c0_40 = arith.constant 0 : index
    %c1_41 = arith.constant 1 : index
    %c2_42 = arith.constant 2 : index
    %c0_43 = arith.constant 0 : index
    %36 = vector.load %arg9[%c0_40, %c1_41, %c2_42, %c0_43] : memref<2x6x6x64xf32, #tpu.memory_space<vmem>>, vector<2x4x4x64xf32>
    %c0_44 = arith.constant 0 : index
    %c2_45 = arith.constant 2 : index
    %c0_46 = arith.constant 0 : index
    %c0_47 = arith.constant 0 : index
    %37 = vector.load %arg9[%c0_44, %c2_45, %c0_46, %c0_47] : memref<2x6x6x64xf32, #tpu.memory_space<vmem>>, vector<2x4x4x64xf32>
    %c0_48 = arith.constant 0 : index
    %c2_49 = arith.constant 2 : index
    %c1_50 = arith.constant 1 : index
    %c0_51 = arith.constant 0 : index
    %38 = vector.load %arg9[%c0_48, %c2_49, %c1_50, %c0_51] : memref<2x6x6x64xf32, #tpu.memory_space<vmem>>, vector<2x4x4x64xf32>
    %c0_52 = arith.constant 0 : index
    %c2_53 = arith.constant 2 : index
    %c2_54 = arith.constant 2 : index
    %c0_55 = arith.constant 0 : index
    %39 = vector.load %arg9[%c0_52, %c2_53, %c2_54, %c0_55] : memref<2x6x6x64xf32, #tpu.memory_space<vmem>>, vector<2x4x4x64xf32>
    %40 = tpu.concatenate %31, %32, %33, %34, %35, %36, %37, %38, %39 in 3 : vector<2x4x4x64xf32>, vector<2x4x4x64xf32>, vector<2x4x4x64xf32>, vector<2x4x4x64xf32>, vector<2x4x4x64xf32>, vector<2x4x4x64xf32>, vector<2x4x4x64xf32>, vector<2x4x4x64xf32>, vector<2x4x4x64xf32> -> vector<2x4x4x576xf32>
    %41 = vector.shape_cast %40 : vector<2x4x4x576xf32> to vector<32x576xf32>
    %42 = arith.truncf %41 : vector<32x576xf32> to vector<32x576xbf16>
    %c0_56 = arith.constant 0 : index
    %c0_57 = arith.constant 0 : index
    %43 = vector.load %arg4[%c0_56, %c0_57] : memref<576x64xbf16, #tpu.memory_space<vmem>>, vector<576x64xbf16>
    %cst_58 = arith.constant dense<0.000000e+00> : vector<32x64xf32>
    %44 = tpu.matmul %42, %43, %cst_58 {dimension_numbers = #tpu.dot_dimension_numbers<[1], [0], [0], [1], [0, 0, 1, 1], [], []>} : vector<32x576xbf16>, vector<576x64xbf16>, vector<32x64xf32> -> vector<32x64xf32>
    %cst_59 = arith.constant dense<0.000000e+00> : vector<64xf32>
    %45 = vector.multi_reduction <add>, %44, %cst_59 [0] : vector<32x64xf32> to vector<64xf32>
    %46 = vector.shape_cast %45 : vector<64xf32> to vector<1x64xf32>
    %cst_60 = arith.constant 3.200000e+01 : f32
    %47 = vector.broadcast %cst_60 : f32 to vector<1x64xf32>
    %48 = arith.divf %46, %47 : vector<1x64xf32>
    %49 = vector.broadcast %48 : vector<1x64xf32> to vector<32x64xf32>
    %50 = arith.subf %44, %49 : vector<32x64xf32>
    %51 = arith.mulf %50, %50 : vector<32x64xf32>
    %cst_61 = arith.constant dense<0.000000e+00> : vector<64xf32>
    %52 = vector.multi_reduction <add>, %51, %cst_61 [0] : vector<32x64xf32> to vector<64xf32>
    %53 = vector.shape_cast %52 : vector<64xf32> to vector<1x64xf32>
    %cst_62 = arith.constant 3.200000e+01 : f32
    %54 = vector.broadcast %cst_62 : f32 to vector<1x64xf32>
    %55 = arith.divf %53, %54 : vector<1x64xf32>
    %cst_63 = arith.constant 9.99999974E-6 : f32
    %56 = vector.broadcast %cst_63 : f32 to vector<1x64xf32>
    %57 = arith.addf %55, %56 : vector<1x64xf32>
    %58 = math.rsqrt %57 : vector<1x64xf32>
    %59 = vector.broadcast %58 : vector<1x64xf32> to vector<32x64xf32>
    %60 = arith.mulf %50, %59 : vector<32x64xf32>
    %c0_64 = arith.constant 0 : index
    %c0_65 = arith.constant 0 : index
    %61 = vector.load %arg5[%c0_64, %c0_65] : memref<1x64xf32, #tpu.memory_space<vmem>>, vector<1x64xf32>
    %62 = vector.broadcast %61 : vector<1x64xf32> to vector<32x64xf32>
    %63 = arith.mulf %60, %62 : vector<32x64xf32>
    %c0_66 = arith.constant 0 : index
    %c0_67 = arith.constant 0 : index
    %64 = vector.load %arg6[%c0_66, %c0_67] : memref<1x64xf32, #tpu.memory_space<vmem>>, vector<1x64xf32>
    %65 = vector.broadcast %64 : vector<1x64xf32> to vector<32x64xf32>
    %66 = arith.addf %63, %65 : vector<32x64xf32>
    %c0_68 = arith.constant 0 : index
    %c0_69 = arith.constant 0 : index
    %67 = vector.load %arg7[%c0_68, %c0_69] : memref<32x64xf32, #tpu.memory_space<vmem>>, vector<32x64xf32>
    %68 = arith.addf %66, %67 : vector<32x64xf32>
    %cst_70 = arith.constant 0.000000e+00 : f32
    %69 = vector.broadcast %cst_70 : f32 to vector<32x64xf32>
    %70 = arith.maximumf %68, %69 : vector<32x64xf32>
    %c0_71 = arith.constant 0 : index
    %c0_72 = arith.constant 0 : index
    %71 = vector.load %arg8[%c0_71, %c0_72] : memref<32x64xf32, #tpu.memory_space<vmem>>, vector<32x64xf32>
    tpu.vector_store %arg8[%c0_71, %c0_72], %70 {strides = array<i32>} : memref<32x64xf32, #tpu.memory_space<vmem>>, vector<32x64xf32>,
    return
  }
}

</mosaic_0001>

<llo_original>
// kernel: _lambda_.3
$region0: #{_lambda_.3}
  #allocation0 [shape = 'u32[]', space=smem, size = 0x4, offset = 0x4, fixed_abs, tag = 'smem constant byte address 0x4 - core index']
  #allocation1 [shape = 'u32[72,128]{1,0:T(1,128)}', space=vmem, size = 0x9000, scoped, tag = 'internal scratch']
  #allocation2 [shape = 'f32[2,10,10,32]{3,2,1,0:T(8,128)}', space=vmem, size = 0x28000, scoped, tag = 'scratch operand']
  %s0 = inlined_call_operand.vmem [shape: bf16[128,144], index: 0, kind: input, shape index: {}]
  %s1 = inlined_call_operand.vmem [shape: bf16[144,32], index: 1, kind: input, shape index: {}]
  %s2 = inlined_call_operand.vmem [shape: f32[1,32], index: 2, kind: input, shape index: {}]
  %s3 = inlined_call_operand.vmem [shape: f32[1,32], index: 3, kind: input, shape index: {}]
  %s4 = inlined_call_operand.vmem [shape: bf16[288,32], index: 4, kind: input, shape index: {}]
  %s5 = inlined_call_operand.vmem [shape: f32[1,32], index: 5, kind: input, shape index: {}]
  %s6 = inlined_call_operand.vmem [shape: f32[1,32], index: 6, kind: input, shape index: {}]
  %s7 = inlined_call_operand.vmem [shape: f32[128,32], index: 7, kind: input, shape index: {}]
  %s8 = inlined_call_operand.vmem [shape: f32[128,32], index: 8, kind: output, shape index: {}]
  %s9 = sld [smem:[#allocation0]]
  $region42: #{_lambda_.3} parent=0
    _
  %s11 = ssub.s32 1, %s9
  %s12 = scalar_select 0, %s11, %s9
  // Predicated region
  $region2: #{_lambda_.3} parent=0 // pred_check
    _
  $region3: #{_lambda_.3} parent=0 // pred_check_branch
    %14 = sbr.rel (0) target = $region5
  $region4: #{_lambda_.3} parent=0 // pred_region
    _
  $region5: #{_lambda_.3} parent=0 // pred_fallthru
    _
  // Predicated region
  $region6: #{_lambda_.3} parent=0 // pred_check
    _
  $region7: #{_lambda_.3} parent=0 // pred_check_branch
    %16 = sbr.rel (0) target = $region9
  $region8: #{_lambda_.3} parent=0 // pred_region
    _
  $region9: #{_lambda_.3} parent=0 // pred_fallthru
    _
  // Predicated region
  $region10: #{_lambda_.3} parent=0 // pred_check
    _
  $region11: #{_lambda_.3} parent=0 // pred_check_branch
    %18 = sbr.rel (0) target = $region13
  $region12: #{_lambda_.3} parent=0 // pred_region
    _
  $region13: #{_lambda_.3} parent=0 // pred_fallthru
    _
  // Predicated region
  $region14: #{_lambda_.3} parent=0 // pred_check
    _
  $region15: #{_lambda_.3} parent=0 // pred_check_branch
    %20 = sbr.rel (0) target = $region17
  $region16: #{_lambda_.3} parent=0 // pred_region
    _
  $region17: #{_lambda_.3} parent=0 // pred_fallthru
    _
  // Predicated region
  $region18: #{_lambda_.3} parent=0 // pred_check
    _
  $region19: #{_lambda_.3} parent=0 // pred_check_branch
    %22 = sbr.rel (0) target = $region21
  $region20: #{_lambda_.3} parent=0 // pred_region
    _
  $region21: #{_lambda_.3} parent=0 // pred_fallthru
    _
  // Predicated region
  $region22: #{_lambda_.3} parent=0 // pred_check
    _
  $region23: #{_lambda_.3} parent=0 // pred_check_branch
    %24 = sbr.rel (0) target = $region25
  $region24: #{_lambda_.3} parent=0 // pred_region
    _
  $region25: #{_lambda_.3} parent=0 // pred_fallthru
    _
  // Predicated region
  $region26: #{_lambda_.3} parent=0 // pred_check
    _
  $region27: #{_lambda_.3} parent=0 // pred_check_branch
    %26 = sbr.rel (0) target = $region29
  $region28: #{_lambda_.3} parent=0 // pred_region
    _
  $region29: #{_lambda_.3} parent=0 // pred_fallthru
    _
  // Predicated region
  $region30: #{_lambda_.3} parent=0 // pred_check
    _
  $region31: #{_lambda_.3} parent=0 // pred_check_branch
    %28 = sbr.rel (0) target = $region33
  $region32: #{_lambda_.3} parent=0 // pred_region
    _
  $region33: #{_lambda_.3} parent=0 // pred_fallthru
    _
  %v30 = vld [vmem:[%s0] sm:$0xff]
  %v31 = vld [vmem:[%s0 + $0x8] sm:$0xff]
  %v32 = vld [vmem:[%s0 + $0x10] sm:$0xff]
  %v33 = vld [vmem:[%s0 + $0x18] sm:$0xff]
  %v34 = vld [vmem:[%s0 + $0x20] sm:$0xff]
  %v35 = vld [vmem:[%s0 + $0x28] sm:$0xff]
  %v36 = vld [vmem:[%s0 + $0x30] sm:$0xff]
  %v37 = vld [vmem:[%s0 + $0x38] sm:$0xff]
  %v38 = vld [vmem:[%s0 + $0x40] sm:$0xff]
  %v39 = vld [vmem:[%s0 + $0x48] sm:$0xff]
  %v40 = vld [vmem:[%s0 + $0x50] sm:$0xff]
  %v41 = vld [vmem:[%s0 + $0x58] sm:$0xff]
  %v42 = vld [vmem:[%s0 + $0x60] sm:$0xff]
  %v43 = vld [vmem:[%s0 + $0x68] sm:$0xff]
  %v44 = vld [vmem:[%s0 + $0x70] sm:$0xff]
  %v45 = vld [vmem:[%s0 + $0x78] sm:$0xff]
  %v46 = vld [vmem:[%s1] sm:$0xf]
  %v47 = vld [vmem:[%s1 + $0x4] sm:$0xf]
  %v48 = vld [vmem:[%s1 + $0x8] sm:$0xf]
  %v49 = vld [vmem:[%s1 + $0xc] sm:$0xf]
  %v50 = vld [vmem:[%s1 + $0x10] sm:$0xf]
  %v51 = vld [vmem:[%s1 + $0x14] sm:$0xf]
  %v52 = vld [vmem:[%s1 + $0x18] sm:$0xf]
  %v53 = vld [vmem:[%s1 + $0x1c] sm:$0xf]
  %v54 = vld [vmem:[%s1 + $0x20] sm:$0xf]
  %v55 = vld [vmem:[%s1 + $0x24] sm:$0xf]
  %v56 = vld [vmem:[%s1 + $0x28] sm:$0xf]
  %v57 = vld [vmem:[%s1 + $0x2c] sm:$0xf]
  %v58 = vld [vmem:[%s1 + $0x30] sm:$0xf]
  %v59 = vld [vmem:[%s1 + $0x34] sm:$0xf]
  %v60 = vld [vmem:[%s1 + $0x38] sm:$0xf]
  %v61 = vld [vmem:[%s1 + $0x3c] sm:$0xf]
  %v62 = vld [vmem:[%s1 + $0x40] sm:$0xf]
  %v63 = vld [vmem:[%s1 + $0x44] sm:$0xf]
  %v80 = vunpack.c.l.b16 %v30
  %v81 = vunpack.c.h.b16 %v30
  %v82 = vunpack.c.l.b16 %v31
  %v83 = vunpack.c.h.b16 %v31
  %v84 = vunpack.c.l.b16 %v32
  %v85 = vunpack.c.h.b16 %v32
  %v86 = vunpack.c.l.b16 %v33
  %v87 = vunpack.c.h.b16 %v33
  %v88 = vunpack.c.l.b16 %v34
  %v89 = vunpack.c.h.b16 %v34
  %v90 = vunpack.c.l.b16 %v35
  %v91 = vunpack.c.h.b16 %v35
  %v92 = vunpack.c.l.b16 %v36
  %v93 = vunpack.c.h.b16 %v36
  %v94 = vunpack.c.l.b16 %v37
  %v95 = vunpack.c.h.b16 %v37
  %v96 = vunpack.c.l.b16 %v38
  %v97 = vunpack.c.h.b16 %v38
  %v98 = vunpack.c.l.b16 %v39
  %v99 = vunpack.c.h.b16 %v39
  %v100 = vunpack.c.l.b16 %v40
  %v101 = vunpack.c.h.b16 %v40
  %v102 = vunpack.c.l.b16 %v41
  %v103 = vunpack.c.h.b16 %v41
  %v104 = vunpack.c.l.b16 %v42
  %v105 = vunpack.c.h.b16 %v42
  %v106 = vunpack.c.l.b16 %v43
  %v107 = vunpack.c.h.b16 %v43
  %v108 = vunpack.c.l.b16 %v44
  %v109 = vunpack.c.h.b16 %v44
  %v110 = vunpack.c.l.b16 %v45
  %v111 = vunpack.c.h.b16 %v45
  %v112 = vpack.c.b16 %v82, %v80
  %v113 = vpack.c.b16 %v83, %v81
  %v114 = vpack.c.b16 %v86, %v84
  %v115 = vpack.c.b16 %v87, %v85
  %v116 = vpack.c.b16 %v90, %v88
  %v117 = vpack.c.b16 %v91, %v89
  %v118 = vpack.c.b16 %v94, %v92
  %v119 = vpack.c.b16 %v95, %v93
  %v120 = vpack.c.b16 %v98, %v96
  %v121 = vpack.c.b16 %v99, %v97
  %v122 = vpack.c.b16 %v102, %v100
  %v123 = vpack.c.b16 %v103, %v101
  %v124 = vpack.c.b16 %v106, %v104
  %v125 = vpack.c.b16 %v107, %v105
  %v126 = vpack.c.b16 %v110, %v108
  %v127 = vpack.c.b16 %v111, %v109
  %v154 = vunpack.c.l.b16 %v46
  %v155 = vunpack.c.l.b16 %v47
  %v156 = vunpack.c.l.b16 %v48
  %v157 = vunpack.c.l.b16 %v49
  %v158 = vunpack.c.l.b16 %v50
  %v159 = vunpack.c.l.b16 %v51
  %v160 = vunpack.c.l.b16 %v52
  %v161 = vunpack.c.l.b16 %v53
  %v162 = vunpack.c.l.b16 %v54
  %v163 = vunpack.c.l.b16 %v55
  %v164 = vunpack.c.l.b16 %v56
  %v165 = vunpack.c.l.b16 %v57
  %v166 = vunpack.c.l.b16 %v58
  %v167 = vunpack.c.l.b16 %v59
  %v168 = vunpack.c.l.b16 %v60
  %v169 = vunpack.c.l.b16 %v61
  %v170 = vunpack.c.l.b16 %v62
  %v171 = vunpack.c.l.b16 %v63
  %v172 = vpack.c.b16 %v155, %v154
  %v173 = vpack.c.b16 %v157, %v156
  %v174 = vpack.c.b16 %v159, %v158
  %v175 = vpack.c.b16 %v161, %v160
  %v176 = vpack.c.b16 %v163, %v162
  %v177 = vpack.c.b16 %v165, %v164
  %v178 = vpack.c.b16 %v167, %v166
  %v179 = vpack.c.b16 %v169, %v168
  %v180 = vpack.c.b16 %v171, %v170
  %vm190 = vcmask 130048
  %v192 = vsel %vm190, %v113, 0
  %v195 = vsel %vm190, %v115, 0
  %v198 = vsel %vm190, %v117, 0
  %v201 = vsel %vm190, %v119, 0
  %v204 = vsel %vm190, %v121, 0
  %v207 = vsel %vm190, %v123, 0
  %v210 = vsel %vm190, %v125, 0
  %v213 = vsel %vm190, %v127, 0
  %215 = vmatpush.bf16.msra.mxu0 %v179
  %216 = vmatpush.bf16.msra.mxu0 %v178
  %217 = vmatpush.bf16.msra.mxu0 %v177
  %218 = vmatpush.bf16.msra.mxu0 %v176
  %219 = vmatpush.bf16.msra.mxu0 %v175
  %220 = vmatpush.bf16.msra.mxu0 %v174
  %221 = vmatpush.bf16.msra.mxu0 %v173
  %222 = vmatpush.bf16.msra.mxu0 %v172
  %223 = vmatmul.bf16.gmra.mxu0 %v112
  %v224 = vpop.f32.mrf.mxu0
  %v225 = vadd.f32 0.0, %v224
  %v226 = vpop.f32.mrf.mxu0
  %v227 = vadd.f32 0.0, %v226
  %228 = vmatmul.bf16.gmra.mxu0 %v114
  %v229 = vpop.f32.mrf.mxu0
  %v230 = vadd.f32 0.0, %v229
  %v231 = vpop.f32.mrf.mxu0
  %v232 = vadd.f32 0.0, %v231
  %233 = vmatmul.bf16.gmra.mxu0 %v116
  %v234 = vpop.f32.mrf.mxu0
  %v235 = vadd.f32 0.0, %v234
  %v236 = vpop.f32.mrf.mxu0
  %v237 = vadd.f32 0.0, %v236
  %238 = vmatmul.bf16.gmra.mxu0 %v118
  %v239 = vpop.f32.mrf.mxu0
  %v240 = vadd.f32 0.0, %v239
  %v241 = vpop.f32.mrf.mxu0
  %v242 = vadd.f32 0.0, %v241
  %243 = vmatmul.bf16.gmra.mxu0 %v120
  %v244 = vpop.f32.mrf.mxu0
  %v245 = vadd.f32 0.0, %v244
  %v246 = vpop.f32.mrf.mxu0
  %v247 = vadd.f32 0.0, %v246
  %248 = vmatmul.bf16.gmra.mxu0 %v122
  %v249 = vpop.f32.mrf.mxu0
  %v250 = vadd.f32 0.0, %v249
  %v251 = vpop.f32.mrf.mxu0
  %v252 = vadd.f32 0.0, %v251
  %253 = vmatmul.bf16.gmra.mxu0 %v124
  %v254 = vpop.f32.mrf.mxu0
  %v255 = vadd.f32 0.0, %v254
  %v256 = vpop.f32.mrf.mxu0
  %v257 = vadd.f32 0.0, %v256
  %258 = vmatmul.bf16.gmra.mxu0 %v126
  %v259 = vpop.f32.mrf.mxu0
  %v260 = vadd.f32 0.0, %v259
  %v261 = vpop.f32.mrf.mxu0
  %v262 = vadd.f32 0.0, %v261
  %263 = vdwg.mxu0
  %264 = vmatpush.bf16.msra.mxu0 0
  %265 = vmatpush.bf16.msra.mxu0 0
  %266 = vmatpush.bf16.msra.mxu0 0
  %267 = vmatpush.bf16.msra.mxu0 0
  %268 = vmatpush.bf16.msra.mxu0 0
  %269 = vmatpush.bf16.msra.mxu0 0
  %270 = vmatpush.bf16.msra.mxu0 0
  %271 = vmatpush.bf16.msra.mxu0 %v180
  %272 = vmatmul.bf16.gmra.mxu0 %v192
  %v273 = vpop.f32.mrf.mxu0
  %v274 = vadd.f32 %v225, %v273
  %v275 = vpop.f32.mrf.mxu0
  %v276 = vadd.f32 %v227, %v275
  %277 = vmatmul.bf16.gmra.mxu0 %v195
  %v278 = vpop.f32.mrf.mxu0
  %v279 = vadd.f32 %v230, %v278
  %v280 = vpop.f32.mrf.mxu0
  %v281 = vadd.f32 %v232, %v280
  %282 = vmatmul.bf16.gmra.mxu0 %v198
  %v283 = vpop.f32.mrf.mxu0
  %v284 = vadd.f32 %v235, %v283
  %v285 = vpop.f32.mrf.mxu0
  %v286 = vadd.f32 %v237, %v285
  %287 = vmatmul.bf16.gmra.mxu0 %v201
  %v288 = vpop.f32.mrf.mxu0
  %v289 = vadd.f32 %v240, %v288
  %v290 = vpop.f32.mrf.mxu0
  %v291 = vadd.f32 %v242, %v290
  %292 = vmatmul.bf16.gmra.mxu0 %v204
  %v293 = vpop.f32.mrf.mxu0
  %v294 = vadd.f32 %v245, %v293
  %v295 = vpop.f32.mrf.mxu0
  %v296 = vadd.f32 %v247, %v295
  %297 = vmatmul.bf16.gmra.mxu0 %v207
  %v298 = vpop.f32.mrf.mxu0
  %v299 = vadd.f32 %v250, %v298
  %v300 = vpop.f32.mrf.mxu0
  %v301 = vadd.f32 %v252, %v300
  %302 = vmatmul.bf16.gmra.mxu0 %v210
  %v303 = vpop.f32.mrf.mxu0
  %v304 = vadd.f32 %v255, %v303
  %v305 = vpop.f32.mrf.mxu0
  %v306 = vadd.f32 %v257, %v305
  %307 = vmatmul.bf16.gmra.mxu0 %v213
  %v308 = vpop.f32.mrf.mxu0
  %v309 = vadd.f32 %v260, %v308
  %v310 = vpop.f32.mrf.mxu0
  %v311 = vadd.f32 %v262, %v310
  %312 = vdwg.mxu0
  %vm313 = vcmask 261120
  %v314 = vsel %vm313, %v274, 0.0
  %v315 = vsel %vm313, %v276, 0.0
  %v316 = vadd.f32 %v314, %v315
  %v317 = vsel %vm313, %v279, 0.0
  %v318 = vadd.f32 %v316, %v317
  %v319 = vsel %vm313, %v281, 0.0
  %v320 = vadd.f32 %v318, %v319
  %v321 = vsel %vm313, %v284, 0.0
  %v322 = vadd.f32 %v320, %v321
  %v323 = vsel %vm313, %v286, 0.0
  %v324 = vadd.f32 %v322, %v323
  %v325 = vsel %vm313, %v289, 0.0
  %v326 = vadd.f32 %v324, %v325
  %v327 = vsel %vm313, %v291, 0.0
  %v328 = vadd.f32 %v326, %v327
  %v329 = vsel %vm313, %v294, 0.0
  %v330 = vadd.f32 %v328, %v329
  %v331 = vsel %vm313, %v296, 0.0
  %v332 = vadd.f32 %v330, %v331
  %v333 = vsel %vm313, %v299, 0.0
  %v334 = vadd.f32 %v332, %v333
  %v335 = vsel %vm313, %v301, 0.0
  %v336 = vadd.f32 %v334, %v335
  %v337 = vsel %vm313, %v304, 0.0
  %v338 = vadd.f32 %v336, %v337
  %v339 = vsel %vm313, %v306, 0.0
  %v340 = vadd.f32 %v338, %v339
  %v341 = vsel %vm313, %v309, 0.0
  %v342 = vadd.f32 %v340, %v341
  %v343 = vsel %vm313, %v311, 0.0
  %v344 = vadd.f32 %v342, %v343
  %v345 = vrot.slane %v344, 4
  %v346 = vadd.f32 %v344, %v345
  %v347 = vrot.slane %v346, 2
  %v348 = vadd.f32 %v346, %v347
  %v349 = vrot.slane %v348, 1
  %v350 = vadd.f32 %v348, %v349
  %v351 = vrcp.pop 128.0
  %v352 = vmul.f32 128.0, %v351
  %v353 = vsub.f32 1.0, %v352
  %v354 = vmul.f32 %v351, %v353
  %v355 = vadd.f32 %v351, %v354
  %vm356 = vweird.f32 %v351
  %v357 = vsel %vm356, %v351, %v355
  %v358 = vmul.f32 %v350, %v357
  %v359 = vsub.f32 %v274, %v358
  %v360 = vsub.f32 %v276, %v358
  %v361 = vsub.f32 %v279, %v358
  %v362 = vsub.f32 %v281, %v358
  %v363 = vsub.f32 %v284, %v358
  %v364 = vsub.f32 %v286, %v358
  %v365 = vsub.f32 %v289, %v358
  %v366 = vsub.f32 %v291, %v358
  %v367 = vsub.f32 %v294, %v358
  %v368 = vsub.f32 %v296, %v358
  %v369 = vsub.f32 %v299, %v358
  %v370 = vsub.f32 %v301, %v358
  %v371 = vsub.f32 %v304, %v358
  %v372 = vsub.f32 %v306, %v358
  %v373 = vsub.f32 %v309, %v358
  %v374 = vsub.f32 %v311, %v358
  %v375 = vmul.f32 %v359, %v359
  %v376 = vmul.f32 %v360, %v360
  %v377 = vmul.f32 %v361, %v361
  %v378 = vmul.f32 %v362, %v362
  %v379 = vmul.f32 %v363, %v363
  %v380 = vmul.f32 %v364, %v364
  %v381 = vmul.f32 %v365, %v365
  %v382 = vmul.f32 %v366, %v366
  %v383 = vmul.f32 %v367, %v367
  %v384 = vmul.f32 %v368, %v368
  %v385 = vmul.f32 %v369, %v369
  %v386 = vmul.f32 %v370, %v370
  %v387 = vmul.f32 %v371, %v371
  %v388 = vmul.f32 %v372, %v372
  %v389 = vmul.f32 %v373, %v373
  %v390 = vmul.f32 %v374, %v374
  %v391 = vsel %vm313, %v375, 0.0
  %v392 = vsel %vm313, %v376, 0.0
  %v393 = vadd.f32 %v391, %v392
  %v394 = vsel %vm313, %v377, 0.0
  %v395 = vadd.f32 %v393, %v394
  %v396 = vsel %vm313, %v378, 0.0
  %v397 = vadd.f32 %v395, %v396
  %v398 = vsel %vm313, %v379, 0.0
  %v399 = vadd.f32 %v397, %v398
  %v400 = vsel %vm313, %v380, 0.0
  %v401 = vadd.f32 %v399, %v400
  %v402 = vsel %vm313, %v381, 0.0
  %v403 = vadd.f32 %v401, %v402
  %v404 = vsel %vm313, %v382, 0.0
  %v405 = vadd.f32 %v403, %v404
  %v406 = vsel %vm313, %v383, 0.0
  %v407 = vadd.f32 %v405, %v406
  %v408 = vsel %vm313, %v384, 0.0
  %v409 = vadd.f32 %v407, %v408
  %v410 = vsel %vm313, %v385, 0.0
  %v411 = vadd.f32 %v409, %v410
  %v412 = vsel %vm313, %v386, 0.0
  %v413 = vadd.f32 %v411, %v412
  %v414 = vsel %vm313, %v387, 0.0
  %v415 = vadd.f32 %v413, %v414
  %v416 = vsel %vm313, %v388, 0.0
  %v417 = vadd.f32 %v415, %v416
  %v418 = vsel %vm313, %v389, 0.0
  %v419 = vadd.f32 %v417, %v418
  %v420 = vsel %vm313, %v390, 0.0
  %v421 = vadd.f32 %v419, %v420
  %v422 = vrot.slane %v421, 4
  %v423 = vadd.f32 %v421, %v422
  %v424 = vrot.slane %v423, 2
  %v425 = vadd.f32 %v423, %v424
  %v426 = vrot.slane %v425, 1
  %v427 = vadd.f32 %v425, %v426
  %v428 = vmul.f32 %v427, %v357
  %v429 = vadd.f32 %v428, 1e-05
  %v430 = vrsqrt.pop %v429
  %v431 = vmul.f32 %v430, %v429
  %v432 = vmul.f32 %v431, %v430
  %v433 = vmul.f32 0.5, %v432
  %v434 = vsub.f32 1.5, %v433
  %v435 = vmul.f32 %v430, %v434
  %vm436 = vweird.f32 %v429
  %vm437 = vweird.f32 %v430
  %vm438 = vmor %vm436, %vm437
  %v439 = vsel %vm438, %v430, %v435
  %v440 = vmul.f32 %v359, %v439
  %v441 = vmul.f32 %v360, %v439
  %v442 = vmul.f32 %v361, %v439
  %v443 = vmul.f32 %v362, %v439
  %v444 = vmul.f32 %v363, %v439
  %v445 = vmul.f32 %v364, %v439
  %v446 = vmul.f32 %v365, %v439
  %v447 = vmul.f32 %v366, %v439
  %v448 = vmul.f32 %v367, %v439
  %v449 = vmul.f32 %v368, %v439
  %v450 = vmul.f32 %v369, %v439
  %v451 = vmul.f32 %v370, %v439
  %v452 = vmul.f32 %v371, %v439
  %v453 = vmul.f32 %v372, %v439
  %v454 = vmul.f32 %v373, %v439
  %v455 = vmul.f32 %v374, %v439
  %v456 = vld [vmem:[%s2] sm:$0x1]
  %v458 = vperm.slane %v456, 0
  %v460 = vmul.f32 %v440, %v458
  %v461 = vmul.f32 %v441, %v458
  %v462 = vmul.f32 %v442, %v458
  %v463 = vmul.f32 %v443, %v458
  %v464 = vmul.f32 %v444, %v458
  %v465 = vmul.f32 %v445, %v458
  %v466 = vmul.f32 %v446, %v458
  %v467 = vmul.f32 %v447, %v458
  %v468 = vmul.f32 %v448, %v458
  %v469 = vmul.f32 %v449, %v458
  %v470 = vmul.f32 %v450, %v458
  %v471 = vmul.f32 %v451, %v458
  %v472 = vmul.f32 %v452, %v458
  %v473 = vmul.f32 %v453, %v458
  %v474 = vmul.f32 %v454, %v458
  %v475 = vmul.f32 %v455, %v458
  %v476 = vld [vmem:[%s3] sm:$0x1]
  %v478 = vperm.slane %v476, 0
  %v480 = vadd.f32 %v460, %v478
  %v481 = vadd.f32 %v461, %v478
  %v482 = vadd.f32 %v462, %v478
  %v483 = vadd.f32 %v463, %v478
  %v484 = vadd.f32 %v464, %v478
  %v485 = vadd.f32 %v465, %v478
  %v486 = vadd.f32 %v466, %v478
  %v487 = vadd.f32 %v467, %v478
  %v488 = vadd.f32 %v468, %v478
  %v489 = vadd.f32 %v469, %v478
  %v490 = vadd.f32 %v470, %v478
  %v491 = vadd.f32 %v471, %v478
  %v492 = vadd.f32 %v472, %v478
  %v493 = vadd.f32 %v473, %v478
  %v494 = vadd.f32 %v474, %v478
  %v495 = vadd.f32 %v475, %v478
  %v496 = vmax.f32 %v480, 0.0
  %v497 = vmax.f32 %v481, 0.0
  %v498 = vmax.f32 %v482, 0.0
  %v499 = vmax.f32 %v483, 0.0
  %v500 = vmax.f32 %v484, 0.0
  %v501 = vmax.f32 %v485, 0.0
  %v502 = vmax.f32 %v486, 0.0
  %v503 = vmax.f32 %v487, 0.0
  %v504 = vmax.f32 %v488, 0.0
  %v505 = vmax.f32 %v489, 0.0
  %v506 = vmax.f32 %v490, 0.0
  %v507 = vmax.f32 %v491, 0.0
  %v508 = vmax.f32 %v492, 0.0
  %v509 = vmax.f32 %v493, 0.0
  %v510 = vmax.f32 %v494, 0.0
  %v511 = vmax.f32 %v495, 0.0
  %512 = vst.msk [vmem:[#allocation2] sm:$0xff] %vm313, 0.0
  %vm513 = vcmask 254976
  %514 = vst.msk [vmem:[#allocation2 + $0x8] sm:$0x3] %vm513, 0.0
  %515 = vst.msk [vmem:[#allocation2 + $0x10] sm:$0xff] %vm313, 0.0
  %516 = vst.msk [vmem:[#allocation2 + $0x18] sm:$0x3] %vm513, 0.0
  %517 = vst.msk [vmem:[#allocation2 + $0x20] sm:$0xff] %vm313, 0.0
  %518 = vst.msk [vmem:[#allocation2 + $0x28] sm:$0x3] %vm513, 0.0
  %519 = vst.msk [vmem:[#allocation2 + $0x30] sm:$0xff] %vm313, 0.0
  %520 = vst.msk [vmem:[#allocation2 + $0x38] sm:$0x3] %vm513, 0.0
  %521 = vst.msk [vmem:[#allocation2 + $0x40] sm:$0xff] %vm313, 0.0
  %522 = vst.msk [vmem:[#allocation2 + $0x48] sm:$0x3] %vm513, 0.0
  %523 = vst.msk [vmem:[#allocation2 + $0x50] sm:$0xff] %vm313, 0.0
  %524 = vst.msk [vmem:[#allocation2 + $0x58] sm:$0x3] %vm513, 0.0
  %525 = vst.msk [vmem:[#allocation2 + $0x60] sm:$0xff] %vm313, 0.0
  %526 = vst.msk [vmem:[#allocation2 + $0x68] sm:$0x3] %vm513, 0.0
  %527 = vst.msk [vmem:[#allocation2 + $0x70] sm:$0xff] %vm313, 0.0
  %528 = vst.msk [vmem:[#allocation2 + $0x78] sm:$0x3] %vm513, 0.0
  %529 = vst.msk [vmem:[#allocation2 + $0x80] sm:$0xff] %vm313, 0.0
  %530 = vst.msk [vmem:[#allocation2 + $0x88] sm:$0x3] %vm513, 0.0
  %531 = vst.msk [vmem:[#allocation2 + $0x90] sm:$0xff] %vm313, 0.0
  %532 = vst.msk [vmem:[#allocation2 + $0x98] sm:$0x3] %vm513, 0.0
  %533 = vst.msk [vmem:[#allocation2 + $0xa0] sm:$0xff] %vm313, 0.0
  %534 = vst.msk [vmem:[#allocation2 + $0xa8] sm:$0x3] %vm513, 0.0
  %535 = vst.msk [vmem:[#allocation2 + $0xb0] sm:$0xff] %vm313, 0.0
  %536 = vst.msk [vmem:[#allocation2 + $0xb8] sm:$0x3] %vm513, 0.0
  %537 = vst.msk [vmem:[#allocation2 + $0xc0] sm:$0xff] %vm313, 0.0
  %538 = vst.msk [vmem:[#allocation2 + $0xc8] sm:$0x3] %vm513, 0.0
  %539 = vst.msk [vmem:[#allocation2 + $0xd0] sm:$0xff] %vm313, 0.0
  %540 = vst.msk [vmem:[#allocation2 + $0xd8] sm:$0x3] %vm513, 0.0
  %541 = vst.msk [vmem:[#allocation2 + $0xe0] sm:$0xff] %vm313, 0.0
  %542 = vst.msk [vmem:[#allocation2 + $0xe8] sm:$0x3] %vm513, 0.0
  %543 = vst.msk [vmem:[#allocation2 + $0xf0] sm:$0xff] %vm313, 0.0
  %544 = vst.msk [vmem:[#allocation2 + $0xf8] sm:$0x3] %vm513, 0.0
  %545 = vst.msk [vmem:[#allocation2 + $0x100] sm:$0xff] %vm313, 0.0
  %546 = vst.msk [vmem:[#allocation2 + $0x108] sm:$0x3] %vm513, 0.0
  %547 = vst.msk [vmem:[#allocation2 + $0x110] sm:$0xff] %vm313, 0.0
  %548 = vst.msk [vmem:[#allocation2 + $0x118] sm:$0x3] %vm513, 0.0
  %549 = vst.msk [vmem:[#allocation2 + $0x120] sm:$0xff] %vm313, 0.0
  %550 = vst.msk [vmem:[#allocation2 + $0x128] sm:$0x3] %vm513, 0.0
  %551 = vst.msk [vmem:[#allocation2 + $0x130] sm:$0xff] %vm313, 0.0
  %552 = vst.msk [vmem:[#allocation2 + $0x138] sm:$0x3] %vm513, 0.0
  %s553 = scalar_lea.vmem [#allocation2], 16
  %554 = vst.msk [vmem:[%s553 + $0x1] sm:$0xff] %vm313, %v496
  %555 = vst.msk [vmem:[%s553 + $0x11] sm:$0xff] %vm313, %v497
  %556 = vst.msk [vmem:[%s553 + $0x21] sm:$0xff] %vm313, %v498
  %557 = vst.msk [vmem:[%s553 + $0x31] sm:$0xff] %vm313, %v499
  %558 = vst.msk [vmem:[%s553 + $0x41] sm:$0xff] %vm313, %v500
  %559 = vst.msk [vmem:[%s553 + $0x51] sm:$0xff] %vm313, %v501
  %560 = vst.msk [vmem:[%s553 + $0x61] sm:$0xff] %vm313, %v502
  %561 = vst.msk [vmem:[%s553 + $0x71] sm:$0xff] %vm313, %v503
  %562 = vst.msk [vmem:[%s553 + $0xa1] sm:$0xff] %vm313, %v504
  %563 = vst.msk [vmem:[%s553 + $0xb1] sm:$0xff] %vm313, %v505
  %564 = vst.msk [vmem:[%s553 + $0xc1] sm:$0xff] %vm313, %v506
  %565 = vst.msk [vmem:[%s553 + $0xd1] sm:$0xff] %vm313, %v507
  %566 = vst.msk [vmem:[%s553 + $0xe1] sm:$0xff] %vm313, %v508
  %567 = vst.msk [vmem:[%s553 + $0xf1] sm:$0xff] %vm313, %v509
  %568 = vst.msk [vmem:[%s553 + $0x101] sm:$0xff] %vm313, %v510
  %569 = vst.msk [vmem:[%s553 + $0x111] sm:$0xff] %vm313, %v511
  %v570 = vld [vmem:[#allocation2] sm:$0xff]
  %v571 = vld [vmem:[#allocation2 + $0x10] sm:$0xff]
  %v572 = vld [vmem:[#allocation2 + $0x20] sm:$0xff]
  %v573 = vld [vmem:[#allocation2 + $0x30] sm:$0xff]
  %v574 = vld [vmem:[#allocation2 + $0x40] sm:$0xff]
  %v575 = vld [vmem:[#allocation2 + $0x50] sm:$0xff]
  %v576 = vld [vmem:[#allocation2 + $0x60] sm:$0xff]
  %v577 = vld [vmem:[#allocation2 + $0x70] sm:$0xff]
  %v578 = vld [vmem:[#allocation2 + $0xa0] sm:$0xff]
  %v579 = vld [vmem:[#allocation2 + $0xb0] sm:$0xff]
  %v580 = vld [vmem:[#allocation2 + $0xc0] sm:$0xff]
  %v581 = vld [vmem:[#allocation2 + $0xd0] sm:$0xff]
  %v582 = vld [vmem:[#allocation2 + $0xe0] sm:$0xff]
  %v583 = vld [vmem:[#allocation2 + $0xf0] sm:$0xff]
  %v584 = vld [vmem:[#allocation2 + $0x100] sm:$0xff]
  %v585 = vld [vmem:[#allocation2 + $0x110] sm:$0xff]
  %v586 = vld [vmem:[#allocation2 + $0x1] sm:$0xff]
  %v587 = vld [vmem:[#allocation2 + $0x11] sm:$0xff]
  %v588 = vld [vmem:[#allocation2 + $0x21] sm:$0xff]
  %v589 = vld [vmem:[#allocation2 + $0x31] sm:$0xff]
  %v590 = vld [vmem:[#allocation2 + $0x41] sm:$0xff]
  %v591 = vld [vmem:[#allocation2 + $0x51] sm:$0xff]
  %v592 = vld [vmem:[#allocation2 + $0x61] sm:$0xff]
  %v593 = vld [vmem:[#allocation2 + $0x71] sm:$0xff]
  %v594 = vld [vmem:[#allocation2 + $0xa1] sm:$0xff]
  %v595 = vld [vmem:[#allocation2 + $0xb1] sm:$0xff]
  %v596 = vld [vmem:[#allocation2 + $0xc1] sm:$0xff]
  %v597 = vld [vmem:[#allocation2 + $0xd1] sm:$0xff]
  %v598 = vld [vmem:[#allocation2 + $0xe1] sm:$0xff]
  %v599 = vld [vmem:[#allocation2 + $0xf1] sm:$0xff]
  %v600 = vld [vmem:[#allocation2 + $0x101] sm:$0xff]
  %v601 = vld [vmem:[#allocation2 + $0x111] sm:$0xff]
  %v602 = vld [vmem:[#allocation2 + $0x2] sm:$0xff]
  %v603 = vld [vmem:[#allocation2 + $0x12] sm:$0xff]
  %v604 = vld [vmem:[#allocation2 + $0x22] sm:$0xff]
  %v605 = vld [vmem:[#allocation2 + $0x32] sm:$0xff]
  %v606 = vld [vmem:[#allocation2 + $0x42] sm:$0xff]
  %v607 = vld [vmem:[#allocation2 + $0x52] sm:$0xff]
  %v608 = vld [vmem:[#allocation2 + $0x62] sm:$0xff]
  %v609 = vld [vmem:[#allocation2 + $0x72] sm:$0xff]
  %v610 = vld [vmem:[#allocation2 + $0xa2] sm:$0xff]
  %v611 = vld [vmem:[#allocation2 + $0xb2] sm:$0xff]
  %v612 = vld [vmem:[#allocation2 + $0xc2] sm:$0xff]
  %v613 = vld [vmem:[#allocation2 + $0xd2] sm:$0xff]
  %v614 = vld [vmem:[#allocation2 + $0xe2] sm:$0xff]
  %v615 = vld [vmem:[#allocation2 + $0xf2] sm:$0xff]
  %v616 = vld [vmem:[#allocation2 + $0x102] sm:$0xff]
  %v617 = vld [vmem:[#allocation2 + $0x112] sm:$0xff]
  %v618 = vld [vmem:[%s553] sm:$0xff]
  %v619 = vld [vmem:[%s553 + $0x10] sm:$0xff]
  %v620 = vld [vmem:[%s553 + $0x20] sm:$0xff]
  %v621 = vld [vmem:[%s553 + $0x30] sm:$0xff]
  %v622 = vld [vmem:[%s553 + $0x40] sm:$0xff]
  %v623 = vld [vmem:[%s553 + $0x50] sm:$0xff]
  %v624 = vld [vmem:[%s553 + $0x60] sm:$0xff]
  %v625 = vld [vmem:[%s553 + $0x70] sm:$0xff]
  %v626 = vld [vmem:[%s553 + $0xa0] sm:$0xff]
  %v627 = vld [vmem:[%s553 + $0xb0] sm:$0xff]
  %v628 = vld [vmem:[%s553 + $0xc0] sm:$0xff]
  %v629 = vld [vmem:[%s553 + $0xd0] sm:$0xff]
  %v630 = vld [vmem:[%s553 + $0xe0] sm:$0xff]
  %v631 = vld [vmem:[%s553 + $0xf0] sm:$0xff]
  %v632 = vld [vmem:[%s553 + $0x100] sm:$0xff]
  %v633 = vld [vmem:[%s553 + $0x110] sm:$0xff]
  %v634 = vld [vmem:[%s553 + $0x1] sm:$0xff]
  %v635 = vld [vmem:[%s553 + $0x11] sm:$0xff]
  %v636 = vld [vmem:[%s553 + $0x21] sm:$0xff]
  %v637 = vld [vmem:[%s553 + $0x31] sm:$0xff]
  %v638 = vld [vmem:[%s553 + $0x41] sm:$0xff]
  %v639 = vld [vmem:[%s553 + $0x51] sm:$0xff]
  %v640 = vld [vmem:[%s553 + $0x61] sm:$0xff]
  %v641 = vld [vmem:[%s553 + $0x71] sm:$0xff]
  %v642 = vld [vmem:[%s553 + $0xa1] sm:$0xff]
  %v643 = vld [vmem:[%s553 + $0xb1] sm:$0xff]
  %v644 = vld [vmem:[%s553 + $0xc1] sm:$0xff]
  %v645 = vld [vmem:[%s553 + $0xd1] sm:$0xff]
  %v646 = vld [vmem:[%s553 + $0xe1] sm:$0xff]
  %v647 = vld [vmem:[%s553 + $0xf1] sm:$0xff]
  %v648 = vld [vmem:[%s553 + $0x101] sm:$0xff]
  %v649 = vld [vmem:[%s553 + $0x111] sm:$0xff]
  %v650 = vld [vmem:[%s553 + $0x2] sm:$0xff]
  %v651 = vld [vmem:[%s553 + $0x12] sm:$0xff]
  %v652 = vld [vmem:[%s553 + $0x22] sm:$0xff]
  %v653 = vld [vmem:[%s553 + $0x32] sm:$0xff]
  %v654 = vld [vmem:[%s553 + $0x42] sm:$0xff]
  %v655 = vld [vmem:[%s553 + $0x52] sm:$0xff]
  %v656 = vld [vmem:[%s553 + $0x62] sm:$0xff]
  %v657 = vld [vmem:[%s553 + $0x72] sm:$0xff]
  %v658 = vld [vmem:[%s553 + $0xa2] sm:$0xff]
  %v659 = vld [vmem:[%s553 + $0xb2] sm:$0xff]
  %v660 = vld [vmem:[%s553 + $0xc2] sm:$0xff]
  %v661 = vld [vmem:[%s553 + $0xd2] sm:$0xff]
  %v662 = vld [vmem:[%s553 + $0xe2] sm:$0xff]
  %v663 = vld [vmem:[%s553 + $0xf2] sm:$0xff]
  %v664 = vld [vmem:[%s553 + $0x102] sm:$0xff]
  %v665 = vld [vmem:[%s553 + $0x112] sm:$0xff]
  %s666 = scalar_lea.vmem [#allocation2], 32
  %v667 = vld [vmem:[%s666] sm:$0xff]
  %v668 = vld [vmem:[%s666 + $0x10] sm:$0xff]
  %v669 = vld [vmem:[%s666 + $0x20] sm:$0xff]
  %v670 = vld [vmem:[%s666 + $0x30] sm:$0xff]
  %v671 = vld [vmem:[%s666 + $0x40] sm:$0xff]
  %v672 = vld [vmem:[%s666 + $0x50] sm:$0xff]
  %v673 = vld [vmem:[%s666 + $0x60] sm:$0xff]
  %v674 = vld [vmem:[%s666 + $0x70] sm:$0xff]
  %v675 = vld [vmem:[%s666 + $0xa0] sm:$0xff]
  %v676 = vld [vmem:[%s666 + $0xb0] sm:$0xff]
  %v677 = vld [vmem:[%s666 + $0xc0] sm:$0xff]
  %v678 = vld [vmem:[%s666 + $0xd0] sm:$0xff]
  %v679 = vld [vmem:[%s666 + $0xe0] sm:$0xff]
  %v680 = vld [vmem:[%s666 + $0xf0] sm:$0xff]
  %v681 = vld [vmem:[%s666 + $0x100] sm:$0xff]
  %v682 = vld [vmem:[%s666 + $0x110] sm:$0xff]
  %v683 = vld [vmem:[%s666 + $0x1] sm:$0xff]
  %v684 = vld [vmem:[%s666 + $0x11] sm:$0xff]
  %v685 = vld [vmem:[%s666 + $0x21] sm:$0xff]
  %v686 = vld [vmem:[%s666 + $0x31] sm:$0xff]
  %v687 = vld [vmem:[%s666 + $0x41] sm:$0xff]
  %v688 = vld [vmem:[%s666 + $0x51] sm:$0xff]
  %v689 = vld [vmem:[%s666 + $0x61] sm:$0xff]
  %v690 = vld [vmem:[%s666 + $0x71] sm:$0xff]
  %v691 = vld [vmem:[%s666 + $0xa1] sm:$0xff]
  %v692 = vld [vmem:[%s666 + $0xb1] sm:$0xff]
  %v693 = vld [vmem:[%s666 + $0xc1] sm:$0xff]
  %v694 = vld [vmem:[%s666 + $0xd1] sm:$0xff]
  %v695 = vld [vmem:[%s666 + $0xe1] sm:$0xff]
  %v696 = vld [vmem:[%s666 + $0xf1] sm:$0xff]
  %v697 = vld [vmem:[%s666 + $0x101] sm:$0xff]
  %v698 = vld [vmem:[%s666 + $0x111] sm:$0xff]
  %v699 = vld [vmem:[%s666 + $0x2] sm:$0xff]
  %v700 = vld [vmem:[%s666 + $0x12] sm:$0xff]
  %v701 = vld [vmem:[%s666 + $0x22] sm:$0xff]
  %v702 = vld [vmem:[%s666 + $0x32] sm:$0xff]
  %v703 = vld [vmem:[%s666 + $0x42] sm:$0xff]
  %v704 = vld [vmem:[%s666 + $0x52] sm:$0xff]
  %v705 = vld [vmem:[%s666 + $0x62] sm:$0xff]
  %v706 = vld [vmem:[%s666 + $0x72] sm:$0xff]
  %v707 = vld [vmem:[%s666 + $0xa2] sm:$0xff]
  %v708 = vld [vmem:[%s666 + $0xb2] sm:$0xff]
  %v709 = vld [vmem:[%s666 + $0xc2] sm:$0xff]
  %v710 = vld [vmem:[%s666 + $0xd2] sm:$0xff]
  %v711 = vld [vmem:[%s666 + $0xe2] sm:$0xff]
  %v712 = vld [vmem:[%s666 + $0xf2] sm:$0xff]
  %v713 = vld [vmem:[%s666 + $0x102] sm:$0xff]
  %v714 = vld [vmem:[%s666 + $0x112] sm:$0xff]
  %731 = vrot.lane.b32.xlu0 %v586, 32
  %v732 = vpop.permute.xlu0 %731
  %733 = vrot.lane.b32.xlu0 %v587, 32
  %v734 = vpop.permute.xlu0 %733
  %735 = vrot.lane.b32.xlu0 %v588, 32
  %v736 = vpop.permute.xlu0 %735
  %737 = vrot.lane.b32.xlu0 %v589, 32
  %v738 = vpop.permute.xlu0 %737
  %739 = vrot.lane.b32.xlu0 %v590, 32
  %v740 = vpop.permute.xlu0 %739
  %741 = vrot.lane.b32.xlu0 %v591, 32
  %v742 = vpop.permute.xlu0 %741
  %743 = vrot.lane.b32.xlu0 %v592, 32
  %v744 = vpop.permute.xlu0 %743
  %745 = vrot.lane.b32.xlu0 %v593, 32
  %v746 = vpop.permute.xlu0 %745
  %747 = vrot.lane.b32.xlu0 %v594, 32
  %v748 = vpop.permute.xlu0 %747
  %749 = vrot.lane.b32.xlu0 %v595, 32
  %v750 = vpop.permute.xlu0 %749
  %751 = vrot.lane.b32.xlu0 %v596, 32
  %v752 = vpop.permute.xlu0 %751
  %753 = vrot.lane.b32.xlu0 %v597, 32
  %v754 = vpop.permute.xlu0 %753
  %755 = vrot.lane.b32.xlu0 %v598, 32
  %v756 = vpop.permute.xlu0 %755
  %757 = vrot.lane.b32.xlu0 %v599, 32
  %v758 = vpop.permute.xlu0 %757
  %759 = vrot.lane.b32.xlu0 %v600, 32
  %v760 = vpop.permute.xlu0 %759
  %761 = vrot.lane.b32.xlu0 %v601, 32
  %v762 = vpop.permute.xlu0 %761
  %795 = vrot.lane.b32.xlu0 %v602, 64
  %v796 = vpop.permute.xlu0 %795
  %797 = vrot.lane.b32.xlu0 %v603, 64
  %v798 = vpop.permute.xlu0 %797
  %799 = vrot.lane.b32.xlu0 %v604, 64
  %v800 = vpop.permute.xlu0 %799
  %801 = vrot.lane.b32.xlu0 %v605, 64
  %v802 = vpop.permute.xlu0 %801
  %803 = vrot.lane.b32.xlu0 %v606, 64
  %v804 = vpop.permute.xlu0 %803
  %805 = vrot.lane.b32.xlu0 %v607, 64
  %v806 = vpop.permute.xlu0 %805
  %807 = vrot.lane.b32.xlu0 %v608, 64
  %v808 = vpop.permute.xlu0 %807
  %809 = vrot.lane.b32.xlu0 %v609, 64
  %v810 = vpop.permute.xlu0 %809
  %811 = vrot.lane.b32.xlu0 %v610, 64
  %v812 = vpop.permute.xlu0 %811
  %813 = vrot.lane.b32.xlu0 %v611, 64
  %v814 = vpop.permute.xlu0 %813
  %815 = vrot.lane.b32.xlu0 %v612, 64
  %v816 = vpop.permute.xlu0 %815
  %817 = vrot.lane.b32.xlu0 %v613, 64
  %v818 = vpop.permute.xlu0 %817
  %819 = vrot.lane.b32.xlu0 %v614, 64
  %v820 = vpop.permute.xlu0 %819
  %821 = vrot.lane.b32.xlu0 %v615, 64
  %v822 = vpop.permute.xlu0 %821
  %823 = vrot.lane.b32.xlu0 %v616, 64
  %v824 = vpop.permute.xlu0 %823
  %825 = vrot.lane.b32.xlu0 %v617, 64
  %v826 = vpop.permute.xlu0 %825
  %859 = vrot.lane.b32.xlu0 %v618, 96
  %v860 = vpop.permute.xlu0 %859
  %861 = vrot.lane.b32.xlu0 %v619, 96
  %v862 = vpop.permute.xlu0 %861
  %863 = vrot.lane.b32.xlu0 %v620, 96
  %v864 = vpop.permute.xlu0 %863
  %865 = vrot.lane.b32.xlu0 %v621, 96
  %v866 = vpop.permute.xlu0 %865
  %867 = vrot.lane.b32.xlu0 %v622, 96
  %v868 = vpop.permute.xlu0 %867
  %869 = vrot.lane.b32.xlu0 %v623, 96
  %v870 = vpop.permute.xlu0 %869
  %871 = vrot.lane.b32.xlu0 %v624, 96
  %v872 = vpop.permute.xlu0 %871
  %873 = vrot.lane.b32.xlu0 %v625, 96
  %v874 = vpop.permute.xlu0 %873
  %875 = vrot.lane.b32.xlu0 %v626, 96
  %v876 = vpop.permute.xlu0 %875
  %877 = vrot.lane.b32.xlu0 %v627, 96
  %v878 = vpop.permute.xlu0 %877
  %879 = vrot.lane.b32.xlu0 %v628, 96
  %v880 = vpop.permute.xlu0 %879
  %881 = vrot.lane.b32.xlu0 %v629, 96
  %v882 = vpop.permute.xlu0 %881
  %883 = vrot.lane.b32.xlu0 %v630, 96
  %v884 = vpop.permute.xlu0 %883
  %885 = vrot.lane.b32.xlu0 %v631, 96
  %v886 = vpop.permute.xlu0 %885
  %887 = vrot.lane.b32.xlu0 %v632, 96
  %v888 = vpop.permute.xlu0 %887
  %889 = vrot.lane.b32.xlu0 %v633, 96
  %v890 = vpop.permute.xlu0 %889
  %923 = vrot.lane.b32.xlu0 %v650, 32
  %v924 = vpop.permute.xlu0 %923
  %925 = vrot.lane.b32.xlu0 %v651, 32
  %v926 = vpop.permute.xlu0 %925
  %927 = vrot.lane.b32.xlu0 %v652, 32
  %v928 = vpop.permute.xlu0 %927
  %929 = vrot.lane.b32.xlu0 %v653, 32
  %v930 = vpop.permute.xlu0 %929
  %931 = vrot.lane.b32.xlu0 %v654, 32
  %v932 = vpop.permute.xlu0 %931
  %933 = vrot.lane.b32.xlu0 %v655, 32
  %v934 = vpop.permute.xlu0 %933
  %935 = vrot.lane.b32.xlu0 %v656, 32
  %v936 = vpop.permute.xlu0 %935
  %937 = vrot.lane.b32.xlu0 %v657, 32
  %v938 = vpop.permute.xlu0 %937
  %939 = vrot.lane.b32.xlu0 %v658, 32
  %v940 = vpop.permute.xlu0 %939
  %941 = vrot.lane.b32.xlu0 %v659, 32
  %v942 = vpop.permute.xlu0 %941
  %943 = vrot.lane.b32.xlu0 %v660, 32
  %v944 = vpop.permute.xlu0 %943
  %945 = vrot.lane.b32.xlu0 %v661, 32
  %v946 = vpop.permute.xlu0 %945
  %947 = vrot.lane.b32.xlu0 %v662, 32
  %v948 = vpop.permute.xlu0 %947
  %949 = vrot.lane.b32.xlu0 %v663, 32
  %v950 = vpop.permute.xlu0 %949
  %951 = vrot.lane.b32.xlu0 %v664, 32
  %v952 = vpop.permute.xlu0 %951
  %953 = vrot.lane.b32.xlu0 %v665, 32
  %v954 = vpop.permute.xlu0 %953
  %987 = vrot.lane.b32.xlu0 %v667, 64
  %v988 = vpop.permute.xlu0 %987
  %989 = vrot.lane.b32.xlu0 %v668, 64
  %v990 = vpop.permute.xlu0 %989
  %991 = vrot.lane.b32.xlu0 %v669, 64
  %v992 = vpop.permute.xlu0 %991
  %993 = vrot.lane.b32.xlu0 %v670, 64
  %v994 = vpop.permute.xlu0 %993
  %995 = vrot.lane.b32.xlu0 %v671, 64
  %v996 = vpop.permute.xlu0 %995
  %997 = vrot.lane.b32.xlu0 %v672, 64
  %v998 = vpop.permute.xlu0 %997
  %999 = vrot.lane.b32.xlu0 %v673, 64
  %v1000 = vpop.permute.xlu0 %999
  %1001 = vrot.lane.b32.xlu0 %v674, 64
  %v1002 = vpop.permute.xlu0 %1001
  %1003 = vrot.lane.b32.xlu0 %v675, 64
  %v1004 = vpop.permute.xlu0 %1003
  %1005 = vrot.lane.b32.xlu0 %v676, 64
  %v1006 = vpop.permute.xlu0 %1005
  %1007 = vrot.lane.b32.xlu0 %v677, 64
  %v1008 = vpop.permute.xlu0 %1007
  %1009 = vrot.lane.b32.xlu0 %v678, 64
  %v1010 = vpop.permute.xlu0 %1009
  %1011 = vrot.lane.b32.xlu0 %v679, 64
  %v1012 = vpop.permute.xlu0 %1011
  %1013 = vrot.lane.b32.xlu0 %v680, 64
  %v1014 = vpop.permute.xlu0 %1013
  %1015 = vrot.lane.b32.xlu0 %v681, 64
  %v1016 = vpop.permute.xlu0 %1015
  %1017 = vrot.lane.b32.xlu0 %v682, 64
  %v1018 = vpop.permute.xlu0 %1017
  %1051 = vrot.lane.b32.xlu0 %v683, 96
  %v1052 = vpop.permute.xlu0 %1051
  %1053 = vrot.lane.b32.xlu0 %v684, 96
  %v1054 = vpop.permute.xlu0 %1053
  %1055 = vrot.lane.b32.xlu0 %v685, 96
  %v1056 = vpop.permute.xlu0 %1055
  %1057 = vrot.lane.b32.xlu0 %v686, 96
  %v1058 = vpop.permute.xlu0 %1057
  %1059 = vrot.lane.b32.xlu0 %v687, 96
  %v1060 = vpop.permute.xlu0 %1059
  %1061 = vrot.lane.b32.xlu0 %v688, 96
  %v1062 = vpop.permute.xlu0 %1061
  %1063 = vrot.lane.b32.xlu0 %v689, 96
  %v1064 = vpop.permute.xlu0 %1063
  %1065 = vrot.lane.b32.xlu0 %v690, 96
  %v1066 = vpop.permute.xlu0 %1065
  %1067 = vrot.lane.b32.xlu0 %v691, 96
  %v1068 = vpop.permute.xlu0 %1067
  %1069 = vrot.lane.b32.xlu0 %v692, 96
  %v1070 = vpop.permute.xlu0 %1069
  %1071 = vrot.lane.b32.xlu0 %v693, 96
  %v1072 = vpop.permute.xlu0 %1071
  %1073 = vrot.lane.b32.xlu0 %v694, 96
  %v1074 = vpop.permute.xlu0 %1073
  %1075 = vrot.lane.b32.xlu0 %v695, 96
  %v1076 = vpop.permute.xlu0 %1075
  %1077 = vrot.lane.b32.xlu0 %v696, 96
  %v1078 = vpop.permute.xlu0 %1077
  %1079 = vrot.lane.b32.xlu0 %v697, 96
  %v1080 = vpop.permute.xlu0 %1079
  %1081 = vrot.lane.b32.xlu0 %v698, 96
  %v1082 = vpop.permute.xlu0 %1081
  %v1099 = vsel %vm313, %v570, %v732
  %v1100 = vsel %vm313, %v571, %v734
  %v1101 = vsel %vm313, %v572, %v736
  %v1102 = vsel %vm313, %v573, %v738
  %v1103 = vsel %vm313, %v574, %v740
  %v1104 = vsel %vm313, %v575, %v742
  %v1105 = vsel %vm313, %v576, %v744
  %v1106 = vsel %vm313, %v577, %v746
  %v1107 = vsel %vm313, %v578, %v748
  %v1108 = vsel %vm313, %v579, %v750
  %v1109 = vsel %vm313, %v580, %v752
  %v1110 = vsel %vm313, %v581, %v754
  %v1111 = vsel %vm313, %v582, %v756
  %v1112 = vsel %vm313, %v583, %v758
  %v1113 = vsel %vm313, %v584, %v760
  %v1114 = vsel %vm313, %v585, %v762
  %vm1115 = vcmask 523264
  %v1116 = vsel %vm1115, %v1099, %v796
  %v1117 = vsel %vm1115, %v1100, %v798
  %v1118 = vsel %vm1115, %v1101, %v800
  %v1119 = vsel %vm1115, %v1102, %v802
  %v1120 = vsel %vm1115, %v1103, %v804
  %v1121 = vsel %vm1115, %v1104, %v806
  %v1122 = vsel %vm1115, %v1105, %v808
  %v1123 = vsel %vm1115, %v1106, %v810
  %v1124 = vsel %vm1115, %v1107, %v812
  %v1125 = vsel %vm1115, %v1108, %v814
  %v1126 = vsel %vm1115, %v1109, %v816
  %v1127 = vsel %vm1115, %v1110, %v818
  %v1128 = vsel %vm1115, %v1111, %v820
  %v1129 = vsel %vm1115, %v1112, %v822
  %v1130 = vsel %vm1115, %v1113, %v824
  %v1131 = vsel %vm1115, %v1114, %v826
  %vm1132 = vcmask 785408
  %v1133 = vsel %vm1132, %v1116, %v860
  %v1134 = vsel %vm1132, %v1117, %v862
  %v1135 = vsel %vm1132, %v1118, %v864
  %v1136 = vsel %vm1132, %v1119, %v866
  %v1137 = vsel %vm1132, %v1120, %v868
  %v1138 = vsel %vm1132, %v1121, %v870
  %v1139 = vsel %vm1132, %v1122, %v872
  %v1140 = vsel %vm1132, %v1123, %v874
  %v1141 = vsel %vm1132, %v1124, %v876
  %v1142 = vsel %vm1132, %v1125, %v878
  %v1143 = vsel %vm1132, %v1126, %v880
  %v1144 = vsel %vm1132, %v1127, %v882
  %v1145 = vsel %vm1132, %v1128, %v884
  %v1146 = vsel %vm1132, %v1129, %v886
  %v1147 = vsel %vm1132, %v1130, %v888
  %v1148 = vsel %vm1132, %v1131, %v890
  %v1149 = vsel %vm313, %v634, %v924
  %v1150 = vsel %vm313, %v635, %v926
  %v1151 = vsel %vm313, %v636, %v928
  %v1152 = vsel %vm313, %v637, %v930
  %v1153 = vsel %vm313, %v638, %v932
  %v1154 = vsel %vm313, %v639, %v934
  %v1155 = vsel %vm313, %v640, %v936
  %v1156 = vsel %vm313, %v641, %v938
  %v1157 = vsel %vm313, %v642, %v940
  %v1158 = vsel %vm313, %v643, %v942
  %v1159 = vsel %vm313, %v644, %v944
  %v1160 = vsel %vm313, %v645, %v946
  %v1161 = vsel %vm313, %v646, %v948
  %v1162 = vsel %vm313, %v647, %v950
  %v1163 = vsel %vm313, %v648, %v952
  %v1164 = vsel %vm313, %v649, %v954
  %v1165 = vsel %vm1115, %v1149, %v988
  %v1166 = vsel %vm1115, %v1150, %v990
  %v1167 = vsel %vm1115, %v1151, %v992
  %v1168 = vsel %vm1115, %v1152, %v994
  %v1169 = vsel %vm1115, %v1153, %v996
  %v1170 = vsel %vm1115, %v1154, %v998
  %v1171 = vsel %vm1115, %v1155, %v1000
  %v1172 = vsel %vm1115, %v1156, %v1002
  %v1173 = vsel %vm1115, %v1157, %v1004
  %v1174 = vsel %vm1115, %v1158, %v1006
  %v1175 = vsel %vm1115, %v1159, %v1008
  %v1176 = vsel %vm1115, %v1160, %v1010
  %v1177 = vsel %vm1115, %v1161, %v1012
  %v1178 = vsel %vm1115, %v1162, %v1014
  %v1179 = vsel %vm1115, %v1163, %v1016
  %v1180 = vsel %vm1115, %v1164, %v1018
  %v1181 = vsel %vm1132, %v1165, %v1052
  %v1182 = vsel %vm1132, %v1166, %v1054
  %v1183 = vsel %vm1132, %v1167, %v1056
  %v1184 = vsel %vm1132, %v1168, %v1058
  %v1185 = vsel %vm1132, %v1169, %v1060
  %v1186 = vsel %vm1132, %v1170, %v1062
  %v1187 = vsel %vm1132, %v1171, %v1064
  %v1188 = vsel %vm1132, %v1172, %v1066
  %v1189 = vsel %vm1132, %v1173, %v1068
  %v1190 = vsel %vm1132, %v1174, %v1070
  %v1191 = vsel %vm1132, %v1175, %v1072
  %v1192 = vsel %vm1132, %v1176, %v1074
  %v1193 = vsel %vm1132, %v1177, %v1076
  %v1194 = vsel %vm1132, %v1178, %v1078
  %v1195 = vsel %vm1132, %v1179, %v1080
  %v1196 = vsel %vm1132, %v1180, %v1082
  %v1197 = vpack.c.bf16 %v1134, %v1133
  %v1198 = vpack.c.bf16 %v1182, %v1181
  %v1199 = vpack.c.bf16 %v700, %v699
  %v1200 = vpack.c.bf16 %v1136, %v1135
  %v1201 = vpack.c.bf16 %v1184, %v1183
  %v1202 = vpack.c.bf16 %v702, %v701
  %v1203 = vpack.c.bf16 %v1138, %v1137
  %v1204 = vpack.c.bf16 %v1186, %v1185
  %v1205 = vpack.c.bf16 %v704, %v703
  %v1206 = vpack.c.bf16 %v1140, %v1139
  %v1207 = vpack.c.bf16 %v1188, %v1187
  %v1208 = vpack.c.bf16 %v706, %v705
  %v1209 = vpack.c.bf16 %v1142, %v1141
  %v1210 = vpack.c.bf16 %v1190, %v1189
  %v1211 = vpack.c.bf16 %v708, %v707
  %v1212 = vpack.c.bf16 %v1144, %v1143
  %v1213 = vpack.c.bf16 %v1192, %v1191
  %v1214 = vpack.c.bf16 %v710, %v709
  %v1215 = vpack.c.bf16 %v1146, %v1145
  %v1216 = vpack.c.bf16 %v1194, %v1193
  %v1217 = vpack.c.bf16 %v712, %v711
  %v1218 = vpack.c.bf16 %v1148, %v1147
  %v1219 = vpack.c.bf16 %v1196, %v1195
  %v1220 = vpack.c.bf16 %v714, %v713
  %v1221 = vld [vmem:[%s4] sm:$0xf]
  %v1222 = vld [vmem:[%s4 + $0x4] sm:$0xf]
  %v1223 = vld [vmem:[%s4 + $0x8] sm:$0xf]
  %v1224 = vld [vmem:[%s4 + $0xc] sm:$0xf]
  %v1225 = vld [vmem:[%s4 + $0x10] sm:$0xf]
  %v1226 = vld [vmem:[%s4 + $0x14] sm:$0xf]
  %v1227 = vld [vmem:[%s4 + $0x18] sm:$0xf]
  %v1228 = vld [vmem:[%s4 + $0x1c] sm:$0xf]
  %v1229 = vld [vmem:[%s4 + $0x20] sm:$0xf]
  %v1230 = vld [vmem:[%s4 + $0x24] sm:$0xf]
  %v1231 = vld [vmem:[%s4 + $0x28] sm:$0xf]
  %v1232 = vld [vmem:[%s4 + $0x2c] sm:$0xf]
  %v1233 = vld [vmem:[%s4 + $0x30] sm:$0xf]
  %v1234 = vld [vmem:[%s4 + $0x34] sm:$0xf]
  %v1235 = vld [vmem:[%s4 + $0x38] sm:$0xf]
  %v1236 = vld [vmem:[%s4 + $0x3c] sm:$0xf]
  %v1237 = vld [vmem:[%s4 + $0x40] sm:$0xf]
  %v1238 = vld [vmem:[%s4 + $0x44] sm:$0xf]
  %v1239 = vld [vmem:[%s4 + $0x48] sm:$0xf]
  %v1240 = vld [vmem:[%s4 + $0x4c] sm:$0xf]
  %v1241 = vld [vmem:[%s4 + $0x50] sm:$0xf]
  %v1242 = vld [vmem:[%s4 + $0x54] sm:$0xf]
  %v1243 = vld [vmem:[%s4 + $0x58] sm:$0xf]
  %v1244 = vld [vmem:[%s4 + $0x5c] sm:$0xf]
  %v1245 = vld [vmem:[%s4 + $0x60] sm:$0xf]
  %v1246 = vld [vmem:[%s4 + $0x64] sm:$0xf]
  %v1247 = vld [vmem:[%s4 + $0x68] sm:$0xf]
  %v1248 = vld [vmem:[%s4 + $0x6c] sm:$0xf]
  %v1249 = vld [vmem:[%s4 + $0x70] sm:$0xf]
  %v1250 = vld [vmem:[%s4 + $0x74] sm:$0xf]
  %v1251 = vld [vmem:[%s4 + $0x78] sm:$0xf]
  %v1252 = vld [vmem:[%s4 + $0x7c] sm:$0xf]
  %v1253 = vld [vmem:[%s4 + $0x80] sm:$0xf]
  %v1254 = vld [vmem:[%s4 + $0x84] sm:$0xf]
  %v1255 = vld [vmem:[%s4 + $0x88] sm:$0xf]
  %v1256 = vld [vmem:[%s4 + $0x8c] sm:$0xf]
  %v1293 = vunpack.c.l.b16 %v1221
  %v1294 = vunpack.c.l.b16 %v1222
  %v1295 = vunpack.c.l.b16 %v1223
  %v1296 = vunpack.c.l.b16 %v1224
  %v1297 = vunpack.c.l.b16 %v1225
  %v1298 = vunpack.c.l.b16 %v1226
  %v1299 = vunpack.c.l.b16 %v1227
  %v1300 = vunpack.c.l.b16 %v1228
  %v1301 = vunpack.c.l.b16 %v1229
  %v1302 = vunpack.c.l.b16 %v1230
  %v1303 = vunpack.c.l.b16 %v1231
  %v1304 = vunpack.c.l.b16 %v1232
  %v1305 = vunpack.c.l.b16 %v1233
  %v1306 = vunpack.c.l.b16 %v1234
  %v1307 = vunpack.c.l.b16 %v1235
  %v1308 = vunpack.c.l.b16 %v1236
  %v1309 = vunpack.c.l.b16 %v1237
  %v1310 = vunpack.c.l.b16 %v1238
  %v1311 = vunpack.c.l.b16 %v1239
  %v1312 = vunpack.c.l.b16 %v1240
  %v1313 = vunpack.c.l.b16 %v1241
  %v1314 = vunpack.c.l.b16 %v1242
  %v1315 = vunpack.c.l.b16 %v1243
  %v1316 = vunpack.c.l.b16 %v1244
  %v1317 = vunpack.c.l.b16 %v1245
  %v1318 = vunpack.c.l.b16 %v1246
  %v1319 = vunpack.c.l.b16 %v1247
  %v1320 = vunpack.c.l.b16 %v1248
  %v1321 = vunpack.c.l.b16 %v1249
  %v1322 = vunpack.c.l.b16 %v1250
  %v1323 = vunpack.c.l.b16 %v1251
  %v1324 = vunpack.c.l.b16 %v1252
  %v1325 = vunpack.c.l.b16 %v1253
  %v1326 = vunpack.c.l.b16 %v1254
  %v1327 = vunpack.c.l.b16 %v1255
  %v1328 = vunpack.c.l.b16 %v1256
  %v1329 = vpack.c.b16 %v1294, %v1293
  %v1330 = vpack.c.b16 %v1296, %v1295
  %v1331 = vpack.c.b16 %v1298, %v1297
  %v1332 = vpack.c.b16 %v1300, %v1299
  %v1333 = vpack.c.b16 %v1302, %v1301
  %v1334 = vpack.c.b16 %v1304, %v1303
  %v1335 = vpack.c.b16 %v1306, %v1305
  %v1336 = vpack.c.b16 %v1308, %v1307
  %v1337 = vpack.c.b16 %v1310, %v1309
  %v1338 = vpack.c.b16 %v1312, %v1311
  %v1339 = vpack.c.b16 %v1314, %v1313
  %v1340 = vpack.c.b16 %v1316, %v1315
  %v1341 = vpack.c.b16 %v1318, %v1317
  %v1342 = vpack.c.b16 %v1320, %v1319
  %v1343 = vpack.c.b16 %v1322, %v1321
  %v1344 = vpack.c.b16 %v1324, %v1323
  %v1345 = vpack.c.b16 %v1326, %v1325
  %v1346 = vpack.c.b16 %v1328, %v1327
  %v1366 = vsel %vm313, %v1199, 0
  %v1369 = vsel %vm313, %v1202, 0
  %v1372 = vsel %vm313, %v1205, 0
  %v1375 = vsel %vm313, %v1208, 0
  %v1378 = vsel %vm313, %v1211, 0
  %v1381 = vsel %vm313, %v1214, 0
  %v1384 = vsel %vm313, %v1217, 0
  %v1387 = vsel %vm313, %v1220, 0
  %1389 = vmatpush.bf16.msra.mxu0 %v1336
  %1390 = vmatpush.bf16.msra.mxu0 %v1335
  %1391 = vmatpush.bf16.msra.mxu0 %v1334
  %1392 = vmatpush.bf16.msra.mxu0 %v1333
  %1393 = vmatpush.bf16.msra.mxu0 %v1332
  %1394 = vmatpush.bf16.msra.mxu0 %v1331
  %1395 = vmatpush.bf16.msra.mxu0 %v1330
  %1396 = vmatpush.bf16.msra.mxu0 %v1329
  %1397 = vmatmul.bf16.gmra.mxu0 %v1197
  %v1398 = vpop.f32.mrf.mxu0
  %v1399 = vadd.f32 0.0, %v1398
  %v1400 = vpop.f32.mrf.mxu0
  %v1401 = vadd.f32 0.0, %v1400
  %1402 = vmatmul.bf16.gmra.mxu0 %v1200
  %v1403 = vpop.f32.mrf.mxu0
  %v1404 = vadd.f32 0.0, %v1403
  %v1405 = vpop.f32.mrf.mxu0
  %v1406 = vadd.f32 0.0, %v1405
  %1407 = vmatmul.bf16.gmra.mxu0 %v1203
  %v1408 = vpop.f32.mrf.mxu0
  %v1409 = vadd.f32 0.0, %v1408
  %v1410 = vpop.f32.mrf.mxu0
  %v1411 = vadd.f32 0.0, %v1410
  %1412 = vmatmul.bf16.gmra.mxu0 %v1206
  %v1413 = vpop.f32.mrf.mxu0
  %v1414 = vadd.f32 0.0, %v1413
  %v1415 = vpop.f32.mrf.mxu0
  %v1416 = vadd.f32 0.0, %v1415
  %1417 = vmatmul.bf16.gmra.mxu0 %v1209
  %v1418 = vpop.f32.mrf.mxu0
  %v1419 = vadd.f32 0.0, %v1418
  %v1420 = vpop.f32.mrf.mxu0
  %v1421 = vadd.f32 0.0, %v1420
  %1422 = vmatmul.bf16.gmra.mxu0 %v1212
  %v1423 = vpop.f32.mrf.mxu0
  %v1424 = vadd.f32 0.0, %v1423
  %v1425 = vpop.f32.mrf.mxu0
  %v1426 = vadd.f32 0.0, %v1425
  %1427 = vmatmul.bf16.gmra.mxu0 %v1215
  %v1428 = vpop.f32.mrf.mxu0
  %v1429 = vadd.f32 0.0, %v1428
  %v1430 = vpop.f32.mrf.mxu0
  %v1431 = vadd.f32 0.0, %v1430
  %1432 = vmatmul.bf16.gmra.mxu0 %v1218
  %v1433 = vpop.f32.mrf.mxu0
  %v1434 = vadd.f32 0.0, %v1433
  %v1435 = vpop.f32.mrf.mxu0
  %v1436 = vadd.f32 0.0, %v1435
  %1437 = vdwg.mxu0
  %1438 = vmatpush.bf16.msra.mxu0 %v1344
  %1439 = vmatpush.bf16.msra.mxu0 %v1343
  %1440 = vmatpush.bf16.msra.mxu0 %v1342
  %1441 = vmatpush.bf16.msra.mxu0 %v1341
  %1442 = vmatpush.bf16.msra.mxu0 %v1340
  %1443 = vmatpush.bf16.msra.mxu0 %v1339
  %1444 = vmatpush.bf16.msra.mxu0 %v1338
  %1445 = vmatpush.bf16.msra.mxu0 %v1337
  %1446 = vmatmul.bf16.gmra.mxu0 %v1198
  %v1447 = vpop.f32.mrf.mxu0
  %v1448 = vadd.f32 %v1399, %v1447
  %v1449 = vpop.f32.mrf.mxu0
  %v1450 = vadd.f32 %v1401, %v1449
  %1451 = vmatmul.bf16.gmra.mxu0 %v1201
  %v1452 = vpop.f32.mrf.mxu0
  %v1453 = vadd.f32 %v1404, %v1452
  %v1454 = vpop.f32.mrf.mxu0
  %v1455 = vadd.f32 %v1406, %v1454
  %1456 = vmatmul.bf16.gmra.mxu0 %v1204
  %v1457 = vpop.f32.mrf.mxu0
  %v1458 = vadd.f32 %v1409, %v1457
  %v1459 = vpop.f32.mrf.mxu0
  %v1460 = vadd.f32 %v1411, %v1459
  %1461 = vmatmul.bf16.gmra.mxu0 %v1207
  %v1462 = vpop.f32.mrf.mxu0
  %v1463 = vadd.f32 %v1414, %v1462
  %v1464 = vpop.f32.mrf.mxu0
  %v1465 = vadd.f32 %v1416, %v1464
  %1466 = vmatmul.bf16.gmra.mxu0 %v1210
  %v1467 = vpop.f32.mrf.mxu0
  %v1468 = vadd.f32 %v1419, %v1467
  %v1469 = vpop.f32.mrf.mxu0
  %v1470 = vadd.f32 %v1421, %v1469
  %1471 = vmatmul.bf16.gmra.mxu0 %v1213
  %v1472 = vpop.f32.mrf.mxu0
  %v1473 = vadd.f32 %v1424, %v1472
  %v1474 = vpop.f32.mrf.mxu0
  %v1475 = vadd.f32 %v1426, %v1474
  %1476 = vmatmul.bf16.gmra.mxu0 %v1216
  %v1477 = vpop.f32.mrf.mxu0
  %v1478 = vadd.f32 %v1429, %v1477
  %v1479 = vpop.f32.mrf.mxu0
  %v1480 = vadd.f32 %v1431, %v1479
  %1481 = vmatmul.bf16.gmra.mxu0 %v1219
  %v1482 = vpop.f32.mrf.mxu0
  %v1483 = vadd.f32 %v1434, %v1482
  %v1484 = vpop.f32.mrf.mxu0
  %v1485 = vadd.f32 %v1436, %v1484
  %1486 = vdwg.mxu0
  %1487 = vmatpush.bf16.msra.mxu0 0
  %1488 = vmatpush.bf16.msra.mxu0 0
  %1489 = vmatpush.bf16.msra.mxu0 0
  %1490 = vmatpush.bf16.msra.mxu0 0
  %1491 = vmatpush.bf16.msra.mxu0 0
  %1492 = vmatpush.bf16.msra.mxu0 0
  %1493 = vmatpush.bf16.msra.mxu0 %v1346
  %1494 = vmatpush.bf16.msra.mxu0 %v1345
  %1495 = vmatmul.bf16.gmra.mxu0 %v1366
  %v1496 = vpop.f32.mrf.mxu0
  %v1497 = vadd.f32 %v1448, %v1496
  %v1498 = vpop.f32.mrf.mxu0
  %v1499 = vadd.f32 %v1450, %v1498
  %1500 = vmatmul.bf16.gmra.mxu0 %v1369
  %v1501 = vpop.f32.mrf.mxu0
  %v1502 = vadd.f32 %v1453, %v1501
  %v1503 = vpop.f32.mrf.mxu0
  %v1504 = vadd.f32 %v1455, %v1503
  %1505 = vmatmul.bf16.gmra.mxu0 %v1372
  %v1506 = vpop.f32.mrf.mxu0
  %v1507 = vadd.f32 %v1458, %v1506
  %v1508 = vpop.f32.mrf.mxu0
  %v1509 = vadd.f32 %v1460, %v1508
  %1510 = vmatmul.bf16.gmra.mxu0 %v1375
  %v1511 = vpop.f32.mrf.mxu0
  %v1512 = vadd.f32 %v1463, %v1511
  %v1513 = vpop.f32.mrf.mxu0
  %v1514 = vadd.f32 %v1465, %v1513
  %1515 = vmatmul.bf16.gmra.mxu0 %v1378
  %v1516 = vpop.f32.mrf.mxu0
  %v1517 = vadd.f32 %v1468, %v1516
  %v1518 = vpop.f32.mrf.mxu0
  %v1519 = vadd.f32 %v1470, %v1518
  %1520 = vmatmul.bf16.gmra.mxu0 %v1381
  %v1521 = vpop.f32.mrf.mxu0
  %v1522 = vadd.f32 %v1473, %v1521
  %v1523 = vpop.f32.mrf.mxu0
  %v1524 = vadd.f32 %v1475, %v1523
  %1525 = vmatmul.bf16.gmra.mxu0 %v1384
  %v1526 = vpop.f32.mrf.mxu0
  %v1527 = vadd.f32 %v1478, %v1526
  %v1528 = vpop.f32.mrf.mxu0
  %v1529 = vadd.f32 %v1480, %v1528
  %1530 = vmatmul.bf16.gmra.mxu0 %v1387
  %v1531 = vpop.f32.mrf.mxu0
  %v1532 = vadd.f32 %v1483, %v1531
  %v1533 = vpop.f32.mrf.mxu0
  %v1534 = vadd.f32 %v1485, %v1533
  %1535 = vdwg.mxu0
  %v1536 = vsel %vm313, %v1497, 0.0
  %v1537 = vsel %vm313, %v1499, 0.0
  %v1538 = vadd.f32 %v1536, %v1537
  %v1539 = vsel %vm313, %v1502, 0.0
  %v1540 = vadd.f32 %v1538, %v1539
  %v1541 = vsel %vm313, %v1504, 0.0
  %v1542 = vadd.f32 %v1540, %v1541
  %v1543 = vsel %vm313, %v1507, 0.0
  %v1544 = vadd.f32 %v1542, %v1543
  %v1545 = vsel %vm313, %v1509, 0.0
  %v1546 = vadd.f32 %v1544, %v1545
  %v1547 = vsel %vm313, %v1512, 0.0
  %v1548 = vadd.f32 %v1546, %v1547
  %v1549 = vsel %vm313, %v1514, 0.0
  %v1550 = vadd.f32 %v1548, %v1549
  %v1551 = vsel %vm313, %v1517, 0.0
  %v1552 = vadd.f32 %v1550, %v1551
  %v1553 = vsel %vm313, %v1519, 0.0
  %v1554 = vadd.f32 %v1552, %v1553
  %v1555 = vsel %vm313, %v1522, 0.0
  %v1556 = vadd.f32 %v1554, %v1555
  %v1557 = vsel %vm313, %v1524, 0.0
  %v1558 = vadd.f32 %v1556, %v1557
  %v1559 = vsel %vm313, %v1527, 0.0
  %v1560 = vadd.f32 %v1558, %v1559
  %v1561 = vsel %vm313, %v1529, 0.0
  %v1562 = vadd.f32 %v1560, %v1561
  %v1563 = vsel %vm313, %v1532, 0.0
  %v1564 = vadd.f32 %v1562, %v1563
  %v1565 = vsel %vm313, %v1534, 0.0
  %v1566 = vadd.f32 %v1564, %v1565
  %v1567 = vrot.slane %v1566, 4
  %v1568 = vadd.f32 %v1566, %v1567
  %v1569 = vrot.slane %v1568, 2
  %v1570 = vadd.f32 %v1568, %v1569
  %v1571 = vrot.slane %v1570, 1
  %v1572 = vadd.f32 %v1570, %v1571
  %v1573 = vmul.f32 %v1572, %v357
  %v1574 = vsub.f32 %v1497, %v1573
  %v1575 = vsub.f32 %v1499, %v1573
  %v1576 = vsub.f32 %v1502, %v1573
  %v1577 = vsub.f32 %v1504, %v1573
  %v1578 = vsub.f32 %v1507, %v1573
  %v1579 = vsub.f32 %v1509, %v1573
  %v1580 = vsub.f32 %v1512, %v1573
  %v1581 = vsub.f32 %v1514, %v1573
  %v1582 = vsub.f32 %v1517, %v1573
  %v1583 = vsub.f32 %v1519, %v1573
  %v1584 = vsub.f32 %v1522, %v1573
  %v1585 = vsub.f32 %v1524, %v1573
  %v1586 = vsub.f32 %v1527, %v1573
  %v1587 = vsub.f32 %v1529, %v1573
  %v1588 = vsub.f32 %v1532, %v1573
  %v1589 = vsub.f32 %v1534, %v1573
  %v1590 = vmul.f32 %v1574, %v1574
  %v1591 = vmul.f32 %v1575, %v1575
  %v1592 = vmul.f32 %v1576, %v1576
  %v1593 = vmul.f32 %v1577, %v1577
  %v1594 = vmul.f32 %v1578, %v1578
  %v1595 = vmul.f32 %v1579, %v1579
  %v1596 = vmul.f32 %v1580, %v1580
  %v1597 = vmul.f32 %v1581, %v1581
  %v1598 = vmul.f32 %v1582, %v1582
  %v1599 = vmul.f32 %v1583, %v1583
  %v1600 = vmul.f32 %v1584, %v1584
  %v1601 = vmul.f32 %v1585, %v1585
  %v1602 = vmul.f32 %v1586, %v1586
  %v1603 = vmul.f32 %v1587, %v1587
  %v1604 = vmul.f32 %v1588, %v1588
  %v1605 = vmul.f32 %v1589, %v1589
  %v1606 = vsel %vm313, %v1590, 0.0
  %v1607 = vsel %vm313, %v1591, 0.0
  %v1608 = vadd.f32 %v1606, %v1607
  %v1609 = vsel %vm313, %v1592, 0.0
  %v1610 = vadd.f32 %v1608, %v1609
  %v1611 = vsel %vm313, %v1593, 0.0
  %v1612 = vadd.f32 %v1610, %v1611
  %v1613 = vsel %vm313, %v1594, 0.0
  %v1614 = vadd.f32 %v1612, %v1613
  %v1615 = vsel %vm313, %v1595, 0.0
  %v1616 = vadd.f32 %v1614, %v1615
  %v1617 = vsel %vm313, %v1596, 0.0
  %v1618 = vadd.f32 %v1616, %v1617
  %v1619 = vsel %vm313, %v1597, 0.0
  %v1620 = vadd.f32 %v1618, %v1619
  %v1621 = vsel %vm313, %v1598, 0.0
  %v1622 = vadd.f32 %v1620, %v1621
  %v1623 = vsel %vm313, %v1599, 0.0
  %v1624 = vadd.f32 %v1622, %v1623
  %v1625 = vsel %vm313, %v1600, 0.0
  %v1626 = vadd.f32 %v1624, %v1625
  %v1627 = vsel %vm313, %v1601, 0.0
  %v1628 = vadd.f32 %v1626, %v1627
  %v1629 = vsel %vm313, %v1602, 0.0
  %v1630 = vadd.f32 %v1628, %v1629
  %v1631 = vsel %vm313, %v1603, 0.0
  %v1632 = vadd.f32 %v1630, %v1631
  %v1633 = vsel %vm313, %v1604, 0.0
  %v1634 = vadd.f32 %v1632, %v1633
  %v1635 = vsel %vm313, %v1605, 0.0
  %v1636 = vadd.f32 %v1634, %v1635
  %v1637 = vrot.slane %v1636, 4
  %v1638 = vadd.f32 %v1636, %v1637
  %v1639 = vrot.slane %v1638, 2
  %v1640 = vadd.f32 %v1638, %v1639
  %v1641 = vrot.slane %v1640, 1
  %v1642 = vadd.f32 %v1640, %v1641
  %v1643 = vmul.f32 %v1642, %v357
  %v1644 = vadd.f32 %v1643, 1e-05
  %v1645 = vrsqrt.pop %v1644
  %v1646 = vmul.f32 %v1645, %v1644
  %v1647 = vmul.f32 %v1646, %v1645
  %v1648 = vmul.f32 0.5, %v1647
  %v1649 = vsub.f32 1.5, %v1648
  %v1650 = vmul.f32 %v1645, %v1649
  %vm1651 = vweird.f32 %v1644
  %vm1652 = vweird.f32 %v1645
  %vm1653 = vmor %vm1651, %vm1652
  %v1654 = vsel %vm1653, %v1645, %v1650
  %v1655 = vmul.f32 %v1574, %v1654
  %v1656 = vmul.f32 %v1575, %v1654
  %v1657 = vmul.f32 %v1576, %v1654
  %v1658 = vmul.f32 %v1577, %v1654
  %v1659 = vmul.f32 %v1578, %v1654
  %v1660 = vmul.f32 %v1579, %v1654
  %v1661 = vmul.f32 %v1580, %v1654
  %v1662 = vmul.f32 %v1581, %v1654
  %v1663 = vmul.f32 %v1582, %v1654
  %v1664 = vmul.f32 %v1583, %v1654
  %v1665 = vmul.f32 %v1584, %v1654
  %v1666 = vmul.f32 %v1585, %v1654
  %v1667 = vmul.f32 %v1586, %v1654
  %v1668 = vmul.f32 %v1587, %v1654
  %v1669 = vmul.f32 %v1588, %v1654
  %v1670 = vmul.f32 %v1589, %v1654
  %v1671 = vld [vmem:[%s5] sm:$0x1]
  %v1673 = vperm.slane %v1671, 0
  %v1675 = vmul.f32 %v1655, %v1673
  %v1676 = vmul.f32 %v1656, %v1673
  %v1677 = vmul.f32 %v1657, %v1673
  %v1678 = vmul.f32 %v1658, %v1673
  %v1679 = vmul.f32 %v1659, %v1673
  %v1680 = vmul.f32 %v1660, %v1673
  %v1681 = vmul.f32 %v1661, %v1673
  %v1682 = vmul.f32 %v1662, %v1673
  %v1683 = vmul.f32 %v1663, %v1673
  %v1684 = vmul.f32 %v1664, %v1673
  %v1685 = vmul.f32 %v1665, %v1673
  %v1686 = vmul.f32 %v1666, %v1673
  %v1687 = vmul.f32 %v1667, %v1673
  %v1688 = vmul.f32 %v1668, %v1673
  %v1689 = vmul.f32 %v1669, %v1673
  %v1690 = vmul.f32 %v1670, %v1673
  %v1691 = vld [vmem:[%s6] sm:$0x1]
  %v1693 = vperm.slane %v1691, 0
  %v1695 = vadd.f32 %v1675, %v1693
  %v1696 = vadd.f32 %v1676, %v1693
  %v1697 = vadd.f32 %v1677, %v1693
  %v1698 = vadd.f32 %v1678, %v1693
  %v1699 = vadd.f32 %v1679, %v1693
  %v1700 = vadd.f32 %v1680, %v1693
  %v1701 = vadd.f32 %v1681, %v1693
  %v1702 = vadd.f32 %v1682, %v1693
  %v1703 = vadd.f32 %v1683, %v1693
  %v1704 = vadd.f32 %v1684, %v1693
  %v1705 = vadd.f32 %v1685, %v1693
  %v1706 = vadd.f32 %v1686, %v1693
  %v1707 = vadd.f32 %v1687, %v1693
  %v1708 = vadd.f32 %v1688, %v1693
  %v1709 = vadd.f32 %v1689, %v1693
  %v1710 = vadd.f32 %v1690, %v1693
  %v1711 = vld [vmem:[%s7] sm:$0xff]
  %v1712 = vld [vmem:[%s7 + $0x8] sm:$0xff]
  %v1713 = vld [vmem:[%s7 + $0x10] sm:$0xff]
  %v1714 = vld [vmem:[%s7 + $0x18] sm:$0xff]
  %v1715 = vld [vmem:[%s7 + $0x20] sm:$0xff]
  %v1716 = vld [vmem:[%s7 + $0x28] sm:$0xff]
  %v1717 = vld [vmem:[%s7 + $0x30] sm:$0xff]
  %v1718 = vld [vmem:[%s7 + $0x38] sm:$0xff]
  %v1719 = vld [vmem:[%s7 + $0x40] sm:$0xff]
  %v1720 = vld [vmem:[%s7 + $0x48] sm:$0xff]
  %v1721 = vld [vmem:[%s7 + $0x50] sm:$0xff]
  %v1722 = vld [vmem:[%s7 + $0x58] sm:$0xff]
  %v1723 = vld [vmem:[%s7 + $0x60] sm:$0xff]
  %v1724 = vld [vmem:[%s7 + $0x68] sm:$0xff]
  %v1725 = vld [vmem:[%s7 + $0x70] sm:$0xff]
  %v1726 = vld [vmem:[%s7 + $0x78] sm:$0xff]
  %v1727 = vadd.f32 %v1695, %v1711
  %v1728 = vadd.f32 %v1696, %v1712
  %v1729 = vadd.f32 %v1697, %v1713
  %v1730 = vadd.f32 %v1698, %v1714
  %v1731 = vadd.f32 %v1699, %v1715
  %v1732 = vadd.f32 %v1700, %v1716
  %v1733 = vadd.f32 %v1701, %v1717
  %v1734 = vadd.f32 %v1702, %v1718
  %v1735 = vadd.f32 %v1703, %v1719
  %v1736 = vadd.f32 %v1704, %v1720
  %v1737 = vadd.f32 %v1705, %v1721
  %v1738 = vadd.f32 %v1706, %v1722
  %v1739 = vadd.f32 %v1707, %v1723
  %v1740 = vadd.f32 %v1708, %v1724
  %v1741 = vadd.f32 %v1709, %v1725
  %v1742 = vadd.f32 %v1710, %v1726
  %v1743 = vmax.f32 %v1727, 0.0
  %v1744 = vmax.f32 %v1728, 0.0
  %v1745 = vmax.f32 %v1729, 0.0
  %v1746 = vmax.f32 %v1730, 0.0
  %v1747 = vmax.f32 %v1731, 0.0
  %v1748 = vmax.f32 %v1732, 0.0
  %v1749 = vmax.f32 %v1733, 0.0
  %v1750 = vmax.f32 %v1734, 0.0
  %v1751 = vmax.f32 %v1735, 0.0
  %v1752 = vmax.f32 %v1736, 0.0
  %v1753 = vmax.f32 %v1737, 0.0
  %v1754 = vmax.f32 %v1738, 0.0
  %v1755 = vmax.f32 %v1739, 0.0
  %v1756 = vmax.f32 %v1740, 0.0
  %v1757 = vmax.f32 %v1741, 0.0
  %v1758 = vmax.f32 %v1742, 0.0
  %1759 = vst.msk [vmem:[%s8] sm:$0xff] %vm313, %v1743
  %1760 = vst.msk [vmem:[%s8 + $0x8] sm:$0xff] %vm313, %v1744
  %1761 = vst.msk [vmem:[%s8 + $0x10] sm:$0xff] %vm313, %v1745
  %1762 = vst.msk [vmem:[%s8 + $0x18] sm:$0xff] %vm313, %v1746
  %1763 = vst.msk [vmem:[%s8 + $0x20] sm:$0xff] %vm313, %v1747
  %1764 = vst.msk [vmem:[%s8 + $0x28] sm:$0xff] %vm313, %v1748
  %1765 = vst.msk [vmem:[%s8 + $0x30] sm:$0xff] %vm313, %v1749
  %1766 = vst.msk [vmem:[%s8 + $0x38] sm:$0xff] %vm313, %v1750
  %1767 = vst.msk [vmem:[%s8 + $0x40] sm:$0xff] %vm313, %v1751
  %1768 = vst.msk [vmem:[%s8 + $0x48] sm:$0xff] %vm313, %v1752
  %1769 = vst.msk [vmem:[%s8 + $0x50] sm:$0xff] %vm313, %v1753
  %1770 = vst.msk [vmem:[%s8 + $0x58] sm:$0xff] %vm313, %v1754
  %1771 = vst.msk [vmem:[%s8 + $0x60] sm:$0xff] %vm313, %v1755
  %1772 = vst.msk [vmem:[%s8 + $0x68] sm:$0xff] %vm313, %v1756
  %1773 = vst.msk [vmem:[%s8 + $0x70] sm:$0xff] %vm313, %v1757
  %1774 = vst.msk [vmem:[%s8 + $0x78] sm:$0xff] %vm313, %v1758
  // Predicated region
  $region34: #{_lambda_.3} parent=0 // pred_check
    _
  $region35: #{_lambda_.3} parent=0 // pred_check_branch
    %1776 = sbr.rel (0) target = $region37
  $region36: #{_lambda_.3} parent=0 // pred_region
    _
  $region37: #{_lambda_.3} parent=0 // pred_fallthru
    _
  // Predicated region
  $region38: #{_lambda_.3} parent=0 // pred_check
    _
  $region39: #{_lambda_.3} parent=0 // pred_check_branch
    %1778 = sbr.rel (0) target = $region41
  $region40: #{_lambda_.3} parent=0 // pred_region
    _
  $region41: #{_lambda_.3} parent=0 // pred_fallthru
    _

// kernel: _lambda_.4
$region0: #{_lambda_.4}
  #allocation0 [shape = 'u32[]', space=smem, size = 0x4, offset = 0x4, fixed_abs, tag = 'smem constant byte address 0x4 - core index']
  #allocation1 [shape = 'u32[72,128]{1,0:T(1,128)}', space=vmem, size = 0x9000, scoped, tag = 'internal scratch']
  #allocation2 [shape = 'f32[2,10,10,32]{3,2,1,0:T(8,128)}', space=vmem, size = 0x28000, scoped, tag = 'scratch operand']
  %s0 = inlined_call_operand.vmem [shape: bf16[128,288], index: 0, kind: input, shape index: {}]
  %s1 = inlined_call_operand.vmem [shape: bf16[288,32], index: 1, kind: input, shape index: {}]
  %s2 = inlined_call_operand.vmem [shape: f32[1,32], index: 2, kind: input, shape index: {}]
  %s3 = inlined_call_operand.vmem [shape: f32[1,32], index: 3, kind: input, shape index: {}]
  %s4 = inlined_call_operand.vmem [shape: bf16[288,32], index: 4, kind: input, shape index: {}]
  %s5 = inlined_call_operand.vmem [shape: f32[1,32], index: 5, kind: input, shape index: {}]
  %s6 = inlined_call_operand.vmem [shape: f32[1,32], index: 6, kind: input, shape index: {}]
  %s7 = inlined_call_operand.vmem [shape: f32[128,32], index: 7, kind: input, shape index: {}]
  %s8 = inlined_call_operand.vmem [shape: f32[128,32], index: 8, kind: output, shape index: {}]
  %s9 = sld [smem:[#allocation0]]
  $region42: #{_lambda_.4} parent=0
    _
  %s11 = ssub.s32 1, %s9
  %s12 = scalar_select 0, %s11, %s9
  // Predicated region
  $region2: #{_lambda_.4} parent=0 // pred_check
    _
  $region3: #{_lambda_.4} parent=0 // pred_check_branch
    %14 = sbr.rel (0) target = $region5
  $region4: #{_lambda_.4} parent=0 // pred_region
    _
  $region5: #{_lambda_.4} parent=0 // pred_fallthru
    _
  // Predicated region
  $region6: #{_lambda_.4} parent=0 // pred_check
    _
  $region7: #{_lambda_.4} parent=0 // pred_check_branch
    %16 = sbr.rel (0) target = $region9
  $region8: #{_lambda_.4} parent=0 // pred_region
    _
  $region9: #{_lambda_.4} parent=0 // pred_fallthru
    _
  // Predicated region
  $region10: #{_lambda_.4} parent=0 // pred_check
    _
  $region11: #{_lambda_.4} parent=0 // pred_check_branch
    %18 = sbr.rel (0) target = $region13
  $region12: #{_lambda_.4} parent=0 // pred_region
    _
  $region13: #{_lambda_.4} parent=0 // pred_fallthru
    _
  // Predicated region
  $region14: #{_lambda_.4} parent=0 // pred_check
    _
  $region15: #{_lambda_.4} parent=0 // pred_check_branch
    %20 = sbr.rel (0) target = $region17
  $region16: #{_lambda_.4} parent=0 // pred_region
    _
  $region17: #{_lambda_.4} parent=0 // pred_fallthru
    _
  // Predicated region
  $region18: #{_lambda_.4} parent=0 // pred_check
    _
  $region19: #{_lambda_.4} parent=0 // pred_check_branch
    %22 = sbr.rel (0) target = $region21
  $region20: #{_lambda_.4} parent=0 // pred_region
    _
  $region21: #{_lambda_.4} parent=0 // pred_fallthru
    _
  // Predicated region
  $region22: #{_lambda_.4} parent=0 // pred_check
    _
  $region23: #{_lambda_.4} parent=0 // pred_check_branch
    %24 = sbr.rel (0) target = $region25
  $region24: #{_lambda_.4} parent=0 // pred_region
    _
  $region25: #{_lambda_.4} parent=0 // pred_fallthru
    _
  // Predicated region
  $region26: #{_lambda_.4} parent=0 // pred_check
    _
  $region27: #{_lambda_.4} parent=0 // pred_check_branch
    %26 = sbr.rel (0) target = $region29
  $region28: #{_lambda_.4} parent=0 // pred_region
    _
  $region29: #{_lambda_.4} parent=0 // pred_fallthru
    _
  // Predicated region
  $region30: #{_lambda_.4} parent=0 // pred_check
    _
  $region31: #{_lambda_.4} parent=0 // pred_check_branch
    %28 = sbr.rel (0) target = $region33
  $region32: #{_lambda_.4} parent=0 // pred_region
    _
  $region33: #{_lambda_.4} parent=0 // pred_fallthru
    _
  %v30 = vld [vmem:[%s0] sm:$0xff]
  %v31 = vld [vmem:[%s0 + $0x8] sm:$0xf]
  %v32 = vld [vmem:[%s0 + $0xc] sm:$0xff]
  %v33 = vld [vmem:[%s0 + $0x14] sm:$0xf]
  %v34 = vld [vmem:[%s0 + $0x18] sm:$0xff]
  %v35 = vld [vmem:[%s0 + $0x20] sm:$0xf]
  %v36 = vld [vmem:[%s0 + $0x24] sm:$0xff]
  %v37 = vld [vmem:[%s0 + $0x2c] sm:$0xf]
  %v38 = vld [vmem:[%s0 + $0x30] sm:$0xff]
  %v39 = vld [vmem:[%s0 + $0x38] sm:$0xf]
  %v40 = vld [vmem:[%s0 + $0x3c] sm:$0xff]
  %v41 = vld [vmem:[%s0 + $0x44] sm:$0xf]
  %v42 = vld [vmem:[%s0 + $0x48] sm:$0xff]
  %v43 = vld [vmem:[%s0 + $0x50] sm:$0xf]
  %v44 = vld [vmem:[%s0 + $0x54] sm:$0xff]
  %v45 = vld [vmem:[%s0 + $0x5c] sm:$0xf]
  %v46 = vld [vmem:[%s0 + $0x60] sm:$0xff]
  %v47 = vld [vmem:[%s0 + $0x68] sm:$0xf]
  %v48 = vld [vmem:[%s0 + $0x6c] sm:$0xff]
  %v49 = vld [vmem:[%s0 + $0x74] sm:$0xf]
  %v50 = vld [vmem:[%s0 + $0x78] sm:$0xff]
  %v51 = vld [vmem:[%s0 + $0x80] sm:$0xf]
  %v52 = vld [vmem:[%s0 + $0x84] sm:$0xff]
  %v53 = vld [vmem:[%s0 + $0x8c] sm:$0xf]
  %v54 = vld [vmem:[%s0 + $0x90] sm:$0xff]
  %v55 = vld [vmem:[%s0 + $0x98] sm:$0xf]
  %v56 = vld [vmem:[%s0 + $0x9c] sm:$0xff]
  %v57 = vld [vmem:[%s0 + $0xa4] sm:$0xf]
  %v58 = vld [vmem:[%s0 + $0xa8] sm:$0xff]
  %v59 = vld [vmem:[%s0 + $0xb0] sm:$0xf]
  %v60 = vld [vmem:[%s0 + $0xb4] sm:$0xff]
  %v61 = vld [vmem:[%s0 + $0xbc] sm:$0xf]
  %v62 = vld [vmem:[%s1] sm:$0xf]
  %v63 = vld [vmem:[%s1 + $0x4] sm:$0xf]
  %v64 = vld [vmem:[%s1 + $0x8] sm:$0xf]
  %v65 = vld [vmem:[%s1 + $0xc] sm:$0xf]
  %v66 = vld [vmem:[%s1 + $0x10] sm:$0xf]
  %v67 = vld [vmem:[%s1 + $0x14] sm:$0xf]
  %v68 = vld [vmem:[%s1 + $0x18] sm:$0xf]
  %v69 = vld [vmem:[%s1 + $0x1c] sm:$0xf]
  %v70 = vld [vmem:[%s1 + $0x20] sm:$0xf]
  %v71 = vld [vmem:[%s1 + $0x24] sm:$0xf]
  %v72 = vld [vmem:[%s1 + $0x28] sm:$0xf]
  %v73 = vld [vmem:[%s1 + $0x2c] sm:$0xf]
  %v74 = vld [vmem:[%s1 + $0x30] sm:$0xf]
  %v75 = vld [vmem:[%s1 + $0x34] sm:$0xf]
  %v76 = vld [vmem:[%s1 + $0x38] sm:$0xf]
  %v77 = vld [vmem:[%s1 + $0x3c] sm:$0xf]
  %v78 = vld [vmem:[%s1 + $0x40] sm:$0xf]
  %v79 = vld [vmem:[%s1 + $0x44] sm:$0xf]
  %v80 = vld [vmem:[%s1 + $0x48] sm:$0xf]
  %v81 = vld [vmem:[%s1 + $0x4c] sm:$0xf]
  %v82 = vld [vmem:[%s1 + $0x50] sm:$0xf]
  %v83 = vld [vmem:[%s1 + $0x54] sm:$0xf]
  %v84 = vld [vmem:[%s1 + $0x58] sm:$0xf]
  %v85 = vld [vmem:[%s1 + $0x5c] sm:$0xf]
  %v86 = vld [vmem:[%s1 + $0x60] sm:$0xf]
  %v87 = vld [vmem:[%s1 + $0x64] sm:$0xf]
  %v88 = vld [vmem:[%s1 + $0x68] sm:$0xf]
  %v89 = vld [vmem:[%s1 + $0x6c] sm:$0xf]
  %v90 = vld [vmem:[%s1 + $0x70] sm:$0xf]
  %v91 = vld [vmem:[%s1 + $0x74] sm:$0xf]
  %v92 = vld [vmem:[%s1 + $0x78] sm:$0xf]
  %v93 = vld [vmem:[%s1 + $0x7c] sm:$0xf]
  %v94 = vld [vmem:[%s1 + $0x80] sm:$0xf]
  %v95 = vld [vmem:[%s1 + $0x84] sm:$0xf]
  %v96 = vld [vmem:[%s1 + $0x88] sm:$0xf]
  %v97 = vld [vmem:[%s1 + $0x8c] sm:$0xf]
  %v130 = vunpack.c.l.b16 %v30
  %v131 = vunpack.c.h.b16 %v30
  %v132 = vunpack.c.l.b16 %v31
  %v133 = vunpack.c.l.b16 %v32
  %v134 = vunpack.c.h.b16 %v32
  %v135 = vunpack.c.l.b16 %v33
  %v136 = vunpack.c.l.b16 %v34
  %v137 = vunpack.c.h.b16 %v34
  %v138 = vunpack.c.l.b16 %v35
  %v139 = vunpack.c.l.b16 %v36
  %v140 = vunpack.c.h.b16 %v36
  %v141 = vunpack.c.l.b16 %v37
  %v142 = vunpack.c.l.b16 %v38
  %v143 = vunpack.c.h.b16 %v38
  %v144 = vunpack.c.l.b16 %v39
  %v145 = vunpack.c.l.b16 %v40
  %v146 = vunpack.c.h.b16 %v40
  %v147 = vunpack.c.l.b16 %v41
  %v148 = vunpack.c.l.b16 %v42
  %v149 = vunpack.c.h.b16 %v42
  %v150 = vunpack.c.l.b16 %v43
  %v151 = vunpack.c.l.b16 %v44
  %v152 = vunpack.c.h.b16 %v44
  %v153 = vunpack.c.l.b16 %v45
  %v154 = vunpack.c.l.b16 %v46
  %v155 = vunpack.c.h.b16 %v46
  %v156 = vunpack.c.l.b16 %v47
  %v157 = vunpack.c.l.b16 %v48
  %v158 = vunpack.c.h.b16 %v48
  %v159 = vunpack.c.l.b16 %v49
  %v160 = vunpack.c.l.b16 %v50
  %v161 = vunpack.c.h.b16 %v50
  %v162 = vunpack.c.l.b16 %v51
  %v163 = vunpack.c.l.b16 %v52
  %v164 = vunpack.c.h.b16 %v52
  %v165 = vunpack.c.l.b16 %v53
  %v166 = vunpack.c.l.b16 %v54
  %v167 = vunpack.c.h.b16 %v54
  %v168 = vunpack.c.l.b16 %v55
  %v169 = vunpack.c.l.b16 %v56
  %v170 = vunpack.c.h.b16 %v56
  %v171 = vunpack.c.l.b16 %v57
  %v172 = vunpack.c.l.b16 %v58
  %v173 = vunpack.c.h.b16 %v58
  %v174 = vunpack.c.l.b16 %v59
  %v175 = vunpack.c.l.b16 %v60
  %v176 = vunpack.c.h.b16 %v60
  %v177 = vunpack.c.l.b16 %v61
  %v178 = vpack.c.b16 %v133, %v130
  %v179 = vpack.c.b16 %v134, %v131
  %v180 = vpack.c.b16 %v135, %v132
  %v181 = vpack.c.b16 %v139, %v136
  %v182 = vpack.c.b16 %v140, %v137
  %v183 = vpack.c.b16 %v141, %v138
  %v184 = vpack.c.b16 %v145, %v142
  %v185 = vpack.c.b16 %v146, %v143
  %v186 = vpack.c.b16 %v147, %v144
  %v187 = vpack.c.b16 %v151, %v148
  %v188 = vpack.c.b16 %v152, %v149
  %v189 = vpack.c.b16 %v153, %v150
  %v190 = vpack.c.b16 %v157, %v154
  %v191 = vpack.c.b16 %v158, %v155
  %v192 = vpack.c.b16 %v159, %v156
  %v193 = vpack.c.b16 %v163, %v160
  %v194 = vpack.c.b16 %v164, %v161
  %v195 = vpack.c.b16 %v165, %v162
  %v196 = vpack.c.b16 %v169, %v166
  %v197 = vpack.c.b16 %v170, %v167
  %v198 = vpack.c.b16 %v171, %v168
  %v199 = vpack.c.b16 %v175, %v172
  %v200 = vpack.c.b16 %v176, %v173
  %v201 = vpack.c.b16 %v177, %v174
  %v254 = vunpack.c.l.b16 %v62
  %v255 = vunpack.c.l.b16 %v63
  %v256 = vunpack.c.l.b16 %v64
  %v257 = vunpack.c.l.b16 %v65
  %v258 = vunpack.c.l.b16 %v66
  %v259 = vunpack.c.l.b16 %v67
  %v260 = vunpack.c.l.b16 %v68
  %v261 = vunpack.c.l.b16 %v69
  %v262 = vunpack.c.l.b16 %v70
  %v263 = vunpack.c.l.b16 %v71
  %v264 = vunpack.c.l.b16 %v72
  %v265 = vunpack.c.l.b16 %v73
  %v266 = vunpack.c.l.b16 %v74
  %v267 = vunpack.c.l.b16 %v75
  %v268 = vunpack.c.l.b16 %v76
  %v269 = vunpack.c.l.b16 %v77
  %v270 = vunpack.c.l.b16 %v78
  %v271 = vunpack.c.l.b16 %v79
  %v272 = vunpack.c.l.b16 %v80
  %v273 = vunpack.c.l.b16 %v81
  %v274 = vunpack.c.l.b16 %v82
  %v275 = vunpack.c.l.b16 %v83
  %v276 = vunpack.c.l.b16 %v84
  %v277 = vunpack.c.l.b16 %v85
  %v278 = vunpack.c.l.b16 %v86
  %v279 = vunpack.c.l.b16 %v87
  %v280 = vunpack.c.l.b16 %v88
  %v281 = vunpack.c.l.b16 %v89
  %v282 = vunpack.c.l.b16 %v90
  %v283 = vunpack.c.l.b16 %v91
  %v284 = vunpack.c.l.b16 %v92
  %v285 = vunpack.c.l.b16 %v93
  %v286 = vunpack.c.l.b16 %v94
  %v287 = vunpack.c.l.b16 %v95
  %v288 = vunpack.c.l.b16 %v96
  %v289 = vunpack.c.l.b16 %v97
  %v290 = vpack.c.b16 %v255, %v254
  %v291 = vpack.c.b16 %v257, %v256
  %v292 = vpack.c.b16 %v259, %v258
  %v293 = vpack.c.b16 %v261, %v260
  %v294 = vpack.c.b16 %v263, %v262
  %v295 = vpack.c.b16 %v265, %v264
  %v296 = vpack.c.b16 %v267, %v266
  %v297 = vpack.c.b16 %v269, %v268
  %v298 = vpack.c.b16 %v271, %v270
  %v299 = vpack.c.b16 %v273, %v272
  %v300 = vpack.c.b16 %v275, %v274
  %v301 = vpack.c.b16 %v277, %v276
  %v302 = vpack.c.b16 %v279, %v278
  %v303 = vpack.c.b16 %v281, %v280
  %v304 = vpack.c.b16 %v283, %v282
  %v305 = vpack.c.b16 %v285, %v284
  %v306 = vpack.c.b16 %v287, %v286
  %v307 = vpack.c.b16 %v289, %v288
  %vm326 = vcmask 261120
  %v328 = vsel %vm326, %v180, 0
  %v331 = vsel %vm326, %v183, 0
  %v334 = vsel %vm326, %v186, 0
  %v337 = vsel %vm326, %v189, 0
  %v340 = vsel %vm326, %v192, 0
  %v343 = vsel %vm326, %v195, 0
  %v346 = vsel %vm326, %v198, 0
  %v349 = vsel %vm326, %v201, 0
  %351 = vmatpush.bf16.msra.mxu0 %v297
  %352 = vmatpush.bf16.msra.mxu0 %v296
  %353 = vmatpush.bf16.msra.mxu0 %v295
  %354 = vmatpush.bf16.msra.mxu0 %v294
  %355 = vmatpush.bf16.msra.mxu0 %v293
  %356 = vmatpush.bf16.msra.mxu0 %v292
  %357 = vmatpush.bf16.msra.mxu0 %v291
  %358 = vmatpush.bf16.msra.mxu0 %v290
  %359 = vmatmul.bf16.gmra.mxu0 %v178
  %v360 = vpop.f32.mrf.mxu0
  %v361 = vadd.f32 0.0, %v360
  %v362 = vpop.f32.mrf.mxu0
  %v363 = vadd.f32 0.0, %v362
  %364 = vmatmul.bf16.gmra.mxu0 %v181
  %v365 = vpop.f32.mrf.mxu0
  %v366 = vadd.f32 0.0, %v365
  %v367 = vpop.f32.mrf.mxu0
  %v368 = vadd.f32 0.0, %v367
  %369 = vmatmul.bf16.gmra.mxu0 %v184
  %v370 = vpop.f32.mrf.mxu0
  %v371 = vadd.f32 0.0, %v370
  %v372 = vpop.f32.mrf.mxu0
  %v373 = vadd.f32 0.0, %v372
  %374 = vmatmul.bf16.gmra.mxu0 %v187
  %v375 = vpop.f32.mrf.mxu0
  %v376 = vadd.f32 0.0, %v375
  %v377 = vpop.f32.mrf.mxu0
  %v378 = vadd.f32 0.0, %v377
  %379 = vmatmul.bf16.gmra.mxu0 %v190
  %v380 = vpop.f32.mrf.mxu0
  %v381 = vadd.f32 0.0, %v380
  %v382 = vpop.f32.mrf.mxu0
  %v383 = vadd.f32 0.0, %v382
  %384 = vmatmul.bf16.gmra.mxu0 %v193
  %v385 = vpop.f32.mrf.mxu0
  %v386 = vadd.f32 0.0, %v385
  %v387 = vpop.f32.mrf.mxu0
  %v388 = vadd.f32 0.0, %v387
  %389 = vmatmul.bf16.gmra.mxu0 %v196
  %v390 = vpop.f32.mrf.mxu0
  %v391 = vadd.f32 0.0, %v390
  %v392 = vpop.f32.mrf.mxu0
  %v393 = vadd.f32 0.0, %v392
  %394 = vmatmul.bf16.gmra.mxu0 %v199
  %v395 = vpop.f32.mrf.mxu0
  %v396 = vadd.f32 0.0, %v395
  %v397 = vpop.f32.mrf.mxu0
  %v398 = vadd.f32 0.0, %v397
  %399 = vdwg.mxu0
  %400 = vmatpush.bf16.msra.mxu0 %v305
  %401 = vmatpush.bf16.msra.mxu0 %v304
  %402 = vmatpush.bf16.msra.mxu0 %v303
  %403 = vmatpush.bf16.msra.mxu0 %v302
  %404 = vmatpush.bf16.msra.mxu0 %v301
  %405 = vmatpush.bf16.msra.mxu0 %v300
  %406 = vmatpush.bf16.msra.mxu0 %v299
  %407 = vmatpush.bf16.msra.mxu0 %v298
  %408 = vmatmul.bf16.gmra.mxu0 %v179
  %v409 = vpop.f32.mrf.mxu0
  %v410 = vadd.f32 %v361, %v409
  %v411 = vpop.f32.mrf.mxu0
  %v412 = vadd.f32 %v363, %v411
  %413 = vmatmul.bf16.gmra.mxu0 %v182
  %v414 = vpop.f32.mrf.mxu0
  %v415 = vadd.f32 %v366, %v414
  %v416 = vpop.f32.mrf.mxu0
  %v417 = vadd.f32 %v368, %v416
  %418 = vmatmul.bf16.gmra.mxu0 %v185
  %v419 = vpop.f32.mrf.mxu0
  %v420 = vadd.f32 %v371, %v419
  %v421 = vpop.f32.mrf.mxu0
  %v422 = vadd.f32 %v373, %v421
  %423 = vmatmul.bf16.gmra.mxu0 %v188
  %v424 = vpop.f32.mrf.mxu0
  %v425 = vadd.f32 %v376, %v424
  %v426 = vpop.f32.mrf.mxu0
  %v427 = vadd.f32 %v378, %v426
  %428 = vmatmul.bf16.gmra.mxu0 %v191
  %v429 = vpop.f32.mrf.mxu0
  %v430 = vadd.f32 %v381, %v429
  %v431 = vpop.f32.mrf.mxu0
  %v432 = vadd.f32 %v383, %v431
  %433 = vmatmul.bf16.gmra.mxu0 %v194
  %v434 = vpop.f32.mrf.mxu0
  %v435 = vadd.f32 %v386, %v434
  %v436 = vpop.f32.mrf.mxu0
  %v437 = vadd.f32 %v388, %v436
  %438 = vmatmul.bf16.gmra.mxu0 %v197
  %v439 = vpop.f32.mrf.mxu0
  %v440 = vadd.f32 %v391, %v439
  %v441 = vpop.f32.mrf.mxu0
  %v442 = vadd.f32 %v393, %v441
  %443 = vmatmul.bf16.gmra.mxu0 %v200
  %v444 = vpop.f32.mrf.mxu0
  %v445 = vadd.f32 %v396, %v444
  %v446 = vpop.f32.mrf.mxu0
  %v447 = vadd.f32 %v398, %v446
  %448 = vdwg.mxu0
  %449 = vmatpush.bf16.msra.mxu0 0
  %450 = vmatpush.bf16.msra.mxu0 0
  %451 = vmatpush.bf16.msra.mxu0 0
  %452 = vmatpush.bf16.msra.mxu0 0
  %453 = vmatpush.bf16.msra.mxu0 0
  %454 = vmatpush.bf16.msra.mxu0 0
  %455 = vmatpush.bf16.msra.mxu0 %v307
  %456 = vmatpush.bf16.msra.mxu0 %v306
  %457 = vmatmul.bf16.gmra.mxu0 %v328
  %v458 = vpop.f32.mrf.mxu0
  %v459 = vadd.f32 %v410, %v458
  %v460 = vpop.f32.mrf.mxu0
  %v461 = vadd.f32 %v412, %v460
  %462 = vmatmul.bf16.gmra.mxu0 %v331
  %v463 = vpop.f32.mrf.mxu0
  %v464 = vadd.f32 %v415, %v463
  %v465 = vpop.f32.mrf.mxu0
  %v466 = vadd.f32 %v417, %v465
  %467 = vmatmul.bf16.gmra.mxu0 %v334
  %v468 = vpop.f32.mrf.mxu0
  %v469 = vadd.f32 %v420, %v468
  %v470 = vpop.f32.mrf.mxu0
  %v471 = vadd.f32 %v422, %v470
  %472 = vmatmul.bf16.gmra.mxu0 %v337
  %v473 = vpop.f32.mrf.mxu0
  %v474 = vadd.f32 %v425, %v473
  %v475 = vpop.f32.mrf.mxu0
  %v476 = vadd.f32 %v427, %v475
  %477 = vmatmul.bf16.gmra.mxu0 %v340
  %v478 = vpop.f32.mrf.mxu0
  %v479 = vadd.f32 %v430, %v478
  %v480 = vpop.f32.mrf.mxu0
  %v481 = vadd.f32 %v432, %v480
  %482 = vmatmul.bf16.gmra.mxu0 %v343
  %v483 = vpop.f32.mrf.mxu0
  %v484 = vadd.f32 %v435, %v483
  %v485 = vpop.f32.mrf.mxu0
  %v486 = vadd.f32 %v437, %v485
  %487 = vmatmul.bf16.gmra.mxu0 %v346
  %v488 = vpop.f32.mrf.mxu0
  %v489 = vadd.f32 %v440, %v488
  %v490 = vpop.f32.mrf.mxu0
  %v491 = vadd.f32 %v442, %v490
  %492 = vmatmul.bf16.gmra.mxu0 %v349
  %v493 = vpop.f32.mrf.mxu0
  %v494 = vadd.f32 %v445, %v493
  %v495 = vpop.f32.mrf.mxu0
  %v496 = vadd.f32 %v447, %v495
  %497 = vdwg.mxu0
  %v498 = vsel %vm326, %v459, 0.0
  %v499 = vsel %vm326, %v461, 0.0
  %v500 = vadd.f32 %v498, %v499
  %v501 = vsel %vm326, %v464, 0.0
  %v502 = vadd.f32 %v500, %v501
  %v503 = vsel %vm326, %v466, 0.0
  %v504 = vadd.f32 %v502, %v503
  %v505 = vsel %vm326, %v469, 0.0
  %v506 = vadd.f32 %v504, %v505
  %v507 = vsel %vm326, %v471, 0.0
  %v508 = vadd.f32 %v506, %v507
  %v509 = vsel %vm326, %v474, 0.0
  %v510 = vadd.f32 %v508, %v509
  %v511 = vsel %vm326, %v476, 0.0
  %v512 = vadd.f32 %v510, %v511
  %v513 = vsel %vm326, %v479, 0.0
  %v514 = vadd.f32 %v512, %v513
  %v515 = vsel %vm326, %v481, 0.0
  %v516 = vadd.f32 %v514, %v515
  %v517 = vsel %vm326, %v484, 0.0
  %v518 = vadd.f32 %v516, %v517
  %v519 = vsel %vm326, %v486, 0.0
  %v520 = vadd.f32 %v518, %v519
  %v521 = vsel %vm326, %v489, 0.0
  %v522 = vadd.f32 %v520, %v521
  %v523 = vsel %vm326, %v491, 0.0
  %v524 = vadd.f32 %v522, %v523
  %v525 = vsel %vm326, %v494, 0.0
  %v526 = vadd.f32 %v524, %v525
  %v527 = vsel %vm326, %v496, 0.0
  %v528 = vadd.f32 %v526, %v527
  %v529 = vrot.slane %v528, 4
  %v530 = vadd.f32 %v528, %v529
  %v531 = vrot.slane %v530, 2
  %v532 = vadd.f32 %v530, %v531
  %v533 = vrot.slane %v532, 1
  %v534 = vadd.f32 %v532, %v533
  %v535 = vrcp.pop 128.0
  %v536 = vmul.f32 128.0, %v535
  %v537 = vsub.f32 1.0, %v536
  %v538 = vmul.f32 %v535, %v537
  %v539 = vadd.f32 %v535, %v538
  %vm540 = vweird.f32 %v535
  %v541 = vsel %vm540, %v535, %v539
  %v542 = vmul.f32 %v534, %v541
  %v543 = vsub.f32 %v459, %v542
  %v544 = vsub.f32 %v461, %v542
  %v545 = vsub.f32 %v464, %v542
  %v546 = vsub.f32 %v466, %v542
  %v547 = vsub.f32 %v469, %v542
  %v548 = vsub.f32 %v471, %v542
  %v549 = vsub.f32 %v474, %v542
  %v550 = vsub.f32 %v476, %v542
  %v551 = vsub.f32 %v479, %v542
  %v552 = vsub.f32 %v481, %v542
  %v553 = vsub.f32 %v484, %v542
  %v554 = vsub.f32 %v486, %v542
  %v555 = vsub.f32 %v489, %v542
  %v556 = vsub.f32 %v491, %v542
  %v557 = vsub.f32 %v494, %v542
  %v558 = vsub.f32 %v496, %v542
  %v559 = vmul.f32 %v543, %v543
  %v560 = vmul.f32 %v544, %v544
  %v561 = vmul.f32 %v545, %v545
  %v562 = vmul.f32 %v546, %v546
  %v563 = vmul.f32 %v547, %v547
  %v564 = vmul.f32 %v548, %v548
  %v565 = vmul.f32 %v549, %v549
  %v566 = vmul.f32 %v550, %v550
  %v567 = vmul.f32 %v551, %v551
  %v568 = vmul.f32 %v552, %v552
  %v569 = vmul.f32 %v553, %v553
  %v570 = vmul.f32 %v554, %v554
  %v571 = vmul.f32 %v555, %v555
  %v572 = vmul.f32 %v556, %v556
  %v573 = vmul.f32 %v557, %v557
  %v574 = vmul.f32 %v558, %v558
  %v575 = vsel %vm326, %v559, 0.0
  %v576 = vsel %vm326, %v560, 0.0
  %v577 = vadd.f32 %v575, %v576
  %v578 = vsel %vm326, %v561, 0.0
  %v579 = vadd.f32 %v577, %v578
  %v580 = vsel %vm326, %v562, 0.0
  %v581 = vadd.f32 %v579, %v580
  %v582 = vsel %vm326, %v563, 0.0
  %v583 = vadd.f32 %v581, %v582
  %v584 = vsel %vm326, %v564, 0.0
  %v585 = vadd.f32 %v583, %v584
  %v586 = vsel %vm326, %v565, 0.0
  %v587 = vadd.f32 %v585, %v586
  %v588 = vsel %vm326, %v566, 0.0
  %v589 = vadd.f32 %v587, %v588
  %v590 = vsel %vm326, %v567, 0.0
  %v591 = vadd.f32 %v589, %v590
  %v592 = vsel %vm326, %v568, 0.0
  %v593 = vadd.f32 %v591, %v592
  %v594 = vsel %vm326, %v569, 0.0
  %v595 = vadd.f32 %v593, %v594
  %v596 = vsel %vm326, %v570, 0.0
  %v597 = vadd.f32 %v595, %v596
  %v598 = vsel %vm326, %v571, 0.0
  %v599 = vadd.f32 %v597, %v598
  %v600 = vsel %vm326, %v572, 0.0
  %v601 = vadd.f32 %v599, %v600
  %v602 = vsel %vm326, %v573, 0.0
  %v603 = vadd.f32 %v601, %v602
  %v604 = vsel %vm326, %v574, 0.0
  %v605 = vadd.f32 %v603, %v604
  %v606 = vrot.slane %v605, 4
  %v607 = vadd.f32 %v605, %v606
  %v608 = vrot.slane %v607, 2
  %v609 = vadd.f32 %v607, %v608
  %v610 = vrot.slane %v609, 1
  %v611 = vadd.f32 %v609, %v610
  %v612 = vmul.f32 %v611, %v541
  %v613 = vadd.f32 %v612, 1e-05
  %v614 = vrsqrt.pop %v613
  %v615 = vmul.f32 %v614, %v613
  %v616 = vmul.f32 %v615, %v614
  %v617 = vmul.f32 0.5, %v616
  %v618 = vsub.f32 1.5, %v617
  %v619 = vmul.f32 %v614, %v618
  %vm620 = vweird.f32 %v613
  %vm621 = vweird.f32 %v614
  %vm622 = vmor %vm620, %vm621
  %v623 = vsel %vm622, %v614, %v619
  %v624 = vmul.f32 %v543, %v623
  %v625 = vmul.f32 %v544, %v623
  %v626 = vmul.f32 %v545, %v623
  %v627 = vmul.f32 %v546, %v623
  %v628 = vmul.f32 %v547, %v623
  %v629 = vmul.f32 %v548, %v623
  %v630 = vmul.f32 %v549, %v623
  %v631 = vmul.f32 %v550, %v623
  %v632 = vmul.f32 %v551, %v623
  %v633 = vmul.f32 %v552, %v623
  %v634 = vmul.f32 %v553, %v623
  %v635 = vmul.f32 %v554, %v623
  %v636 = vmul.f32 %v555, %v623
  %v637 = vmul.f32 %v556, %v623
  %v638 = vmul.f32 %v557, %v623
  %v639 = vmul.f32 %v558, %v623
  %v640 = vld [vmem:[%s2] sm:$0x1]
  %v642 = vperm.slane %v640, 0
  %v644 = vmul.f32 %v624, %v642
  %v645 = vmul.f32 %v625, %v642
  %v646 = vmul.f32 %v626, %v642
  %v647 = vmul.f32 %v627, %v642
  %v648 = vmul.f32 %v628, %v642
  %v649 = vmul.f32 %v629, %v642
  %v650 = vmul.f32 %v630, %v642
  %v651 = vmul.f32 %v631, %v642
  %v652 = vmul.f32 %v632, %v642
  %v653 = vmul.f32 %v633, %v642
  %v654 = vmul.f32 %v634, %v642
  %v655 = vmul.f32 %v635, %v642
  %v656 = vmul.f32 %v636, %v642
  %v657 = vmul.f32 %v637, %v642
  %v658 = vmul.f32 %v638, %v642
  %v659 = vmul.f32 %v639, %v642
  %v660 = vld [vmem:[%s3] sm:$0x1]
  %v662 = vperm.slane %v660, 0
  %v664 = vadd.f32 %v644, %v662
  %v665 = vadd.f32 %v645, %v662
  %v666 = vadd.f32 %v646, %v662
  %v667 = vadd.f32 %v647, %v662
  %v668 = vadd.f32 %v648, %v662
  %v669 = vadd.f32 %v649, %v662
  %v670 = vadd.f32 %v650, %v662
  %v671 = vadd.f32 %v651, %v662
  %v672 = vadd.f32 %v652, %v662
  %v673 = vadd.f32 %v653, %v662
  %v674 = vadd.f32 %v654, %v662
  %v675 = vadd.f32 %v655, %v662
  %v676 = vadd.f32 %v656, %v662
  %v677 = vadd.f32 %v657, %v662
  %v678 = vadd.f32 %v658, %v662
  %v679 = vadd.f32 %v659, %v662
  %v680 = vmax.f32 %v664, 0.0
  %v681 = vmax.f32 %v665, 0.0
  %v682 = vmax.f32 %v666, 0.0
  %v683 = vmax.f32 %v667, 0.0
  %v684 = vmax.f32 %v668, 0.0
  %v685 = vmax.f32 %v669, 0.0
  %v686 = vmax.f32 %v670, 0.0
  %v687 = vmax.f32 %v671, 0.0
  %v688 = vmax.f32 %v672, 0.0
  %v689 = vmax.f32 %v673, 0.0
  %v690 = vmax.f32 %v674, 0.0
  %v691 = vmax.f32 %v675, 0.0
  %v692 = vmax.f32 %v676, 0.0
  %v693 = vmax.f32 %v677, 0.0
  %v694 = vmax.f32 %v678, 0.0
  %v695 = vmax.f32 %v679, 0.0
  %696 = vst.msk [vmem:[#allocation2] sm:$0xff] %vm326, 0.0
  %vm697 = vcmask 254976
  %698 = vst.msk [vmem:[#allocation2 + $0x8] sm:$0x3] %vm697, 0.0
  %699 = vst.msk [vmem:[#allocation2 + $0x10] sm:$0xff] %vm326, 0.0
  %700 = vst.msk [vmem:[#allocation2 + $0x18] sm:$0x3] %vm697, 0.0
  %701 = vst.msk [vmem:[#allocation2 + $0x20] sm:$0xff] %vm326, 0.0
  %702 = vst.msk [vmem:[#allocation2 + $0x28] sm:$0x3] %vm697, 0.0
  %703 = vst.msk [vmem:[#allocation2 + $0x30] sm:$0xff] %vm326, 0.0
  %704 = vst.msk [vmem:[#allocation2 + $0x38] sm:$0x3] %vm697, 0.0
  %705 = vst.msk [vmem:[#allocation2 + $0x40] sm:$0xff] %vm326, 0.0
  %706 = vst.msk [vmem:[#allocation2 + $0x48] sm:$0x3] %vm697, 0.0
  %707 = vst.msk [vmem:[#allocation2 + $0x50] sm:$0xff] %vm326, 0.0
  %708 = vst.msk [vmem:[#allocation2 + $0x58] sm:$0x3] %vm697, 0.0
  %709 = vst.msk [vmem:[#allocation2 + $0x60] sm:$0xff] %vm326, 0.0
  %710 = vst.msk [vmem:[#allocation2 + $0x68] sm:$0x3] %vm697, 0.0
  %711 = vst.msk [vmem:[#allocation2 + $0x70] sm:$0xff] %vm326, 0.0
  %712 = vst.msk [vmem:[#allocation2 + $0x78] sm:$0x3] %vm697, 0.0
  %713 = vst.msk [vmem:[#allocation2 + $0x80] sm:$0xff] %vm326, 0.0
  %714 = vst.msk [vmem:[#allocation2 + $0x88] sm:$0x3] %vm697, 0.0
  %715 = vst.msk [vmem:[#allocation2 + $0x90] sm:$0xff] %vm326, 0.0
  %716 = vst.msk [vmem:[#allocation2 + $0x98] sm:$0x3] %vm697, 0.0
  %717 = vst.msk [vmem:[#allocation2 + $0xa0] sm:$0xff] %vm326, 0.0
  %718 = vst.msk [vmem:[#allocation2 + $0xa8] sm:$0x3] %vm697, 0.0
  %719 = vst.msk [vmem:[#allocation2 + $0xb0] sm:$0xff] %vm326, 0.0
  %720 = vst.msk [vmem:[#allocation2 + $0xb8] sm:$0x3] %vm697, 0.0
  %721 = vst.msk [vmem:[#allocation2 + $0xc0] sm:$0xff] %vm326, 0.0
  %722 = vst.msk [vmem:[#allocation2 + $0xc8] sm:$0x3] %vm697, 0.0
  %723 = vst.msk [vmem:[#allocation2 + $0xd0] sm:$0xff] %vm326, 0.0
  %724 = vst.msk [vmem:[#allocation2 + $0xd8] sm:$0x3] %vm697, 0.0
  %725 = vst.msk [vmem:[#allocation2 + $0xe0] sm:$0xff] %vm326, 0.0
  %726 = vst.msk [vmem:[#allocation2 + $0xe8] sm:$0x3] %vm697, 0.0
  %727 = vst.msk [vmem:[#allocation2 + $0xf0] sm:$0xff] %vm326, 0.0
  %728 = vst.msk [vmem:[#allocation2 + $0xf8] sm:$0x3] %vm697, 0.0
  %729 = vst.msk [vmem:[#allocation2 + $0x100] sm:$0xff] %vm326, 0.0
  %730 = vst.msk [vmem:[#allocation2 + $0x108] sm:$0x3] %vm697, 0.0
  %731 = vst.msk [vmem:[#allocation2 + $0x110] sm:$0xff] %vm326, 0.0
  %732 = vst.msk [vmem:[#allocation2 + $0x118] sm:$0x3] %vm697, 0.0
  %733 = vst.msk [vmem:[#allocation2 + $0x120] sm:$0xff] %vm326, 0.0
  %734 = vst.msk [vmem:[#allocation2 + $0x128] sm:$0x3] %vm697, 0.0
  %735 = vst.msk [vmem:[#allocation2 + $0x130] sm:$0xff] %vm326, 0.0
  %736 = vst.msk [vmem:[#allocation2 + $0x138] sm:$0x3] %vm697, 0.0
  %s737 = scalar_lea.vmem [#allocation2], 16
  %738 = vst.msk [vmem:[%s737 + $0x1] sm:$0xff] %vm326, %v680
  %739 = vst.msk [vmem:[%s737 + $0x11] sm:$0xff] %vm326, %v681
  %740 = vst.msk [vmem:[%s737 + $0x21] sm:$0xff] %vm326, %v682
  %741 = vst.msk [vmem:[%s737 + $0x31] sm:$0xff] %vm326, %v683
  %742 = vst.msk [vmem:[%s737 + $0x41] sm:$0xff] %vm326, %v684
  %743 = vst.msk [vmem:[%s737 + $0x51] sm:$0xff] %vm326, %v685
  %744 = vst.msk [vmem:[%s737 + $0x61] sm:$0xff] %vm326, %v686
  %745 = vst.msk [vmem:[%s737 + $0x71] sm:$0xff] %vm326, %v687
  %746 = vst.msk [vmem:[%s737 + $0xa1] sm:$0xff] %vm326, %v688
  %747 = vst.msk [vmem:[%s737 + $0xb1] sm:$0xff] %vm326, %v689
  %748 = vst.msk [vmem:[%s737 + $0xc1] sm:$0xff] %vm326, %v690
  %749 = vst.msk [vmem:[%s737 + $0xd1] sm:$0xff] %vm326, %v691
  %750 = vst.msk [vmem:[%s737 + $0xe1] sm:$0xff] %vm326, %v692
  %751 = vst.msk [vmem:[%s737 + $0xf1] sm:$0xff] %vm326, %v693
  %752 = vst.msk [vmem:[%s737 + $0x101] sm:$0xff] %vm326, %v694
  %753 = vst.msk [vmem:[%s737 + $0x111] sm:$0xff] %vm326, %v695
  %v754 = vld [vmem:[#allocation2] sm:$0xff]
  %v755 = vld [vmem:[#allocation2 + $0x10] sm:$0xff]
  %v756 = vld [vmem:[#allocation2 + $0x20] sm:$0xff]
  %v757 = vld [vmem:[#allocation2 + $0x30] sm:$0xff]
  %v758 = vld [vmem:[#allocation2 + $0x40] sm:$0xff]
  %v759 = vld [vmem:[#allocation2 + $0x50] sm:$0xff]
  %v760 = vld [vmem:[#allocation2 + $0x60] sm:$0xff]
  %v761 = vld [vmem:[#allocation2 + $0x70] sm:$0xff]
  %v762 = vld [vmem:[#allocation2 + $0xa0] sm:$0xff]
  %v763 = vld [vmem:[#allocation2 + $0xb0] sm:$0xff]
  %v764 = vld [vmem:[#allocation2 + $0xc0] sm:$0xff]
  %v765 = vld [vmem:[#allocation2 + $0xd0] sm:$0xff]
  %v766 = vld [vmem:[#allocation2 + $0xe0] sm:$0xff]
  %v767 = vld [vmem:[#allocation2 + $0xf0] sm:$0xff]
  %v768 = vld [vmem:[#allocation2 + $0x100] sm:$0xff]
  %v769 = vld [vmem:[#allocation2 + $0x110] sm:$0xff]
  %v770 = vld [vmem:[#allocation2 + $0x1] sm:$0xff]
  %v771 = vld [vmem:[#allocation2 + $0x11] sm:$0xff]
  %v772 = vld [vmem:[#allocation2 + $0x21] sm:$0xff]
  %v773 = vld [vmem:[#allocation2 + $0x31] sm:$0xff]
  %v774 = vld [vmem:[#allocation2 + $0x41] sm:$0xff]
  %v775 = vld [vmem:[#allocation2 + $0x51] sm:$0xff]
  %v776 = vld [vmem:[#allocation2 + $0x61] sm:$0xff]
  %v777 = vld [vmem:[#allocation2 + $0x71] sm:$0xff]
  %v778 = vld [vmem:[#allocation2 + $0xa1] sm:$0xff]
  %v779 = vld [vmem:[#allocation2 + $0xb1] sm:$0xff]
  %v780 = vld [vmem:[#allocation2 + $0xc1] sm:$0xff]
  %v781 = vld [vmem:[#allocation2 + $0xd1] sm:$0xff]
  %v782 = vld [vmem:[#allocation2 + $0xe1] sm:$0xff]
  %v783 = vld [vmem:[#allocation2 + $0xf1] sm:$0xff]
  %v784 = vld [vmem:[#allocation2 + $0x101] sm:$0xff]
  %v785 = vld [vmem:[#allocation2 + $0x111] sm:$0xff]
  %v786 = vld [vmem:[#allocation2 + $0x2] sm:$0xff]
  %v787 = vld [vmem:[#allocation2 + $0x12] sm:$0xff]
  %v788 = vld [vmem:[#allocation2 + $0x22] sm:$0xff]
  %v789 = vld [vmem:[#allocation2 + $0x32] sm:$0xff]
  %v790 = vld [vmem:[#allocation2 + $0x42] sm:$0xff]
  %v791 = vld [vmem:[#allocation2 + $0x52] sm:$0xff]
  %v792 = vld [vmem:[#allocation2 + $0x62] sm:$0xff]
  %v793 = vld [vmem:[#allocation2 + $0x72] sm:$0xff]
  %v794 = vld [vmem:[#allocation2 + $0xa2] sm:$0xff]
  %v795 = vld [vmem:[#allocation2 + $0xb2] sm:$0xff]
  %v796 = vld [vmem:[#allocation2 + $0xc2] sm:$0xff]
  %v797 = vld [vmem:[#allocation2 + $0xd2] sm:$0xff]
  %v798 = vld [vmem:[#allocation2 + $0xe2] sm:$0xff]
  %v799 = vld [vmem:[#allocation2 + $0xf2] sm:$0xff]
  %v800 = vld [vmem:[#allocation2 + $0x102] sm:$0xff]
  %v801 = vld [vmem:[#allocation2 + $0x112] sm:$0xff]
  %v802 = vld [vmem:[%s737] sm:$0xff]
  %v803 = vld [vmem:[%s737 + $0x10] sm:$0xff]
  %v804 = vld [vmem:[%s737 + $0x20] sm:$0xff]
  %v805 = vld [vmem:[%s737 + $0x30] sm:$0xff]
  %v806 = vld [vmem:[%s737 + $0x40] sm:$0xff]
  %v807 = vld [vmem:[%s737 + $0x50] sm:$0xff]
  %v808 = vld [vmem:[%s737 + $0x60] sm:$0xff]
  %v809 = vld [vmem:[%s737 + $0x70] sm:$0xff]
  %v810 = vld [vmem:[%s737 + $0xa0] sm:$0xff]
  %v811 = vld [vmem:[%s737 + $0xb0] sm:$0xff]
  %v812 = vld [vmem:[%s737 + $0xc0] sm:$0xff]
  %v813 = vld [vmem:[%s737 + $0xd0] sm:$0xff]
  %v814 = vld [vmem:[%s737 + $0xe0] sm:$0xff]
  %v815 = vld [vmem:[%s737 + $0xf0] sm:$0xff]
  %v816 = vld [vmem:[%s737 + $0x100] sm:$0xff]
  %v817 = vld [vmem:[%s737 + $0x110] sm:$0xff]
  %v818 = vld [vmem:[%s737 + $0x1] sm:$0xff]
  %v819 = vld [vmem:[%s737 + $0x11] sm:$0xff]
  %v820 = vld [vmem:[%s737 + $0x21] sm:$0xff]
  %v821 = vld [vmem:[%s737 + $0x31] sm:$0xff]
  %v822 = vld [vmem:[%s737 + $0x41] sm:$0xff]
  %v823 = vld [vmem:[%s737 + $0x51] sm:$0xff]
  %v824 = vld [vmem:[%s737 + $0x61] sm:$0xff]
  %v825 = vld [vmem:[%s737 + $0x71] sm:$0xff]
  %v826 = vld [vmem:[%s737 + $0xa1] sm:$0xff]
  %v827 = vld [vmem:[%s737 + $0xb1] sm:$0xff]
  %v828 = vld [vmem:[%s737 + $0xc1] sm:$0xff]
  %v829 = vld [vmem:[%s737 + $0xd1] sm:$0xff]
  %v830 = vld [vmem:[%s737 + $0xe1] sm:$0xff]
  %v831 = vld [vmem:[%s737 + $0xf1] sm:$0xff]
  %v832 = vld [vmem:[%s737 + $0x101] sm:$0xff]
  %v833 = vld [vmem:[%s737 + $0x111] sm:$0xff]
  %v834 = vld [vmem:[%s737 + $0x2] sm:$0xff]
  %v835 = vld [vmem:[%s737 + $0x12] sm:$0xff]
  %v836 = vld [vmem:[%s737 + $0x22] sm:$0xff]
  %v837 = vld [vmem:[%s737 + $0x32] sm:$0xff]
  %v838 = vld [vmem:[%s737 + $0x42] sm:$0xff]
  %v839 = vld [vmem:[%s737 + $0x52] sm:$0xff]
  %v840 = vld [vmem:[%s737 + $0x62] sm:$0xff]
  %v841 = vld [vmem:[%s737 + $0x72] sm:$0xff]
  %v842 = vld [vmem:[%s737 + $0xa2] sm:$0xff]
  %v843 = vld [vmem:[%s737 + $0xb2] sm:$0xff]
  %v844 = vld [vmem:[%s737 + $0xc2] sm:$0xff]
  %v845 = vld [vmem:[%s737 + $0xd2] sm:$0xff]
  %v846 = vld [vmem:[%s737 + $0xe2] sm:$0xff]
  %v847 = vld [vmem:[%s737 + $0xf2] sm:$0xff]
  %v848 = vld [vmem:[%s737 + $0x102] sm:$0xff]
  %v849 = vld [vmem:[%s737 + $0x112] sm:$0xff]
  %s850 = scalar_lea.vmem [#allocation2], 32
  %v851 = vld [vmem:[%s850] sm:$0xff]
  %v852 = vld [vmem:[%s850 + $0x10] sm:$0xff]
  %v853 = vld [vmem:[%s850 + $0x20] sm:$0xff]
  %v854 = vld [vmem:[%s850 + $0x30] sm:$0xff]
  %v855 = vld [vmem:[%s850 + $0x40] sm:$0xff]
  %v856 = vld [vmem:[%s850 + $0x50] sm:$0xff]
  %v857 = vld [vmem:[%s850 + $0x60] sm:$0xff]
  %v858 = vld [vmem:[%s850 + $0x70] sm:$0xff]
  %v859 = vld [vmem:[%s850 + $0xa0] sm:$0xff]
  %v860 = vld [vmem:[%s850 + $0xb0] sm:$0xff]
  %v861 = vld [vmem:[%s850 + $0xc0] sm:$0xff]
  %v862 = vld [vmem:[%s850 + $0xd0] sm:$0xff]
  %v863 = vld [vmem:[%s850 + $0xe0] sm:$0xff]
  %v864 = vld [vmem:[%s850 + $0xf0] sm:$0xff]
  %v865 = vld [vmem:[%s850 + $0x100] sm:$0xff]
  %v866 = vld [vmem:[%s850 + $0x110] sm:$0xff]
  %v867 = vld [vmem:[%s850 + $0x1] sm:$0xff]
  %v868 = vld [vmem:[%s850 + $0x11] sm:$0xff]
  %v869 = vld [vmem:[%s850 + $0x21] sm:$0xff]
  %v870 = vld [vmem:[%s850 + $0x31] sm:$0xff]
  %v871 = vld [vmem:[%s850 + $0x41] sm:$0xff]
  %v872 = vld [vmem:[%s850 + $0x51] sm:$0xff]
  %v873 = vld [vmem:[%s850 + $0x61] sm:$0xff]
  %v874 = vld [vmem:[%s850 + $0x71] sm:$0xff]
  %v875 = vld [vmem:[%s850 + $0xa1] sm:$0xff]
  %v876 = vld [vmem:[%s850 + $0xb1] sm:$0xff]
  %v877 = vld [vmem:[%s850 + $0xc1] sm:$0xff]
  %v878 = vld [vmem:[%s850 + $0xd1] sm:$0xff]
  %v879 = vld [vmem:[%s850 + $0xe1] sm:$0xff]
  %v880 = vld [vmem:[%s850 + $0xf1] sm:$0xff]
  %v881 = vld [vmem:[%s850 + $0x101] sm:$0xff]
  %v882 = vld [vmem:[%s850 + $0x111] sm:$0xff]
  %v883 = vld [vmem:[%s850 + $0x2] sm:$0xff]
  %v884 = vld [vmem:[%s850 + $0x12] sm:$0xff]
  %v885 = vld [vmem:[%s850 + $0x22] sm:$0xff]
  %v886 = vld [vmem:[%s850 + $0x32] sm:$0xff]
  %v887 = vld [vmem:[%s850 + $0x42] sm:$0xff]
  %v888 = vld [vmem:[%s850 + $0x52] sm:$0xff]
  %v889 = vld [vmem:[%s850 + $0x62] sm:$0xff]
  %v890 = vld [vmem:[%s850 + $0x72] sm:$0xff]
  %v891 = vld [vmem:[%s850 + $0xa2] sm:$0xff]
  %v892 = vld [vmem:[%s850 + $0xb2] sm:$0xff]
  %v893 = vld [vmem:[%s850 + $0xc2] sm:$0xff]
  %v894 = vld [vmem:[%s850 + $0xd2] sm:$0xff]
  %v895 = vld [vmem:[%s850 + $0xe2] sm:$0xff]
  %v896 = vld [vmem:[%s850 + $0xf2] sm:$0xff]
  %v897 = vld [vmem:[%s850 + $0x102] sm:$0xff]
  %v898 = vld [vmem:[%s850 + $0x112] sm:$0xff]
  %915 = vrot.lane.b32.xlu0 %v770, 32
  %v916 = vpop.permute.xlu0 %915
  %917 = vrot.lane.b32.xlu0 %v771, 32
  %v918 = vpop.permute.xlu0 %917
  %919 = vrot.lane.b32.xlu0 %v772, 32
  %v920 = vpop.permute.xlu0 %919
  %921 = vrot.lane.b32.xlu0 %v773, 32
  %v922 = vpop.permute.xlu0 %921
  %923 = vrot.lane.b32.xlu0 %v774, 32
  %v924 = vpop.permute.xlu0 %923
  %925 = vrot.lane.b32.xlu0 %v775, 32
  %v926 = vpop.permute.xlu0 %925
  %927 = vrot.lane.b32.xlu0 %v776, 32
  %v928 = vpop.permute.xlu0 %927
  %929 = vrot.lane.b32.xlu0 %v777, 32
  %v930 = vpop.permute.xlu0 %929
  %931 = vrot.lane.b32.xlu0 %v778, 32
  %v932 = vpop.permute.xlu0 %931
  %933 = vrot.lane.b32.xlu0 %v779, 32
  %v934 = vpop.permute.xlu0 %933
  %935 = vrot.lane.b32.xlu0 %v780, 32
  %v936 = vpop.permute.xlu0 %935
  %937 = vrot.lane.b32.xlu0 %v781, 32
  %v938 = vpop.permute.xlu0 %937
  %939 = vrot.lane.b32.xlu0 %v782, 32
  %v940 = vpop.permute.xlu0 %939
  %941 = vrot.lane.b32.xlu0 %v783, 32
  %v942 = vpop.permute.xlu0 %941
  %943 = vrot.lane.b32.xlu0 %v784, 32
  %v944 = vpop.permute.xlu0 %943
  %945 = vrot.lane.b32.xlu0 %v785, 32
  %v946 = vpop.permute.xlu0 %945
  %979 = vrot.lane.b32.xlu0 %v786, 64
  %v980 = vpop.permute.xlu0 %979
  %981 = vrot.lane.b32.xlu0 %v787, 64
  %v982 = vpop.permute.xlu0 %981
  %983 = vrot.lane.b32.xlu0 %v788, 64
  %v984 = vpop.permute.xlu0 %983
  %985 = vrot.lane.b32.xlu0 %v789, 64
  %v986 = vpop.permute.xlu0 %985
  %987 = vrot.lane.b32.xlu0 %v790, 64
  %v988 = vpop.permute.xlu0 %987
  %989 = vrot.lane.b32.xlu0 %v791, 64
  %v990 = vpop.permute.xlu0 %989
  %991 = vrot.lane.b32.xlu0 %v792, 64
  %v992 = vpop.permute.xlu0 %991
  %993 = vrot.lane.b32.xlu0 %v793, 64
  %v994 = vpop.permute.xlu0 %993
  %995 = vrot.lane.b32.xlu0 %v794, 64
  %v996 = vpop.permute.xlu0 %995
  %997 = vrot.lane.b32.xlu0 %v795, 64
  %v998 = vpop.permute.xlu0 %997
  %999 = vrot.lane.b32.xlu0 %v796, 64
  %v1000 = vpop.permute.xlu0 %999
  %1001 = vrot.lane.b32.xlu0 %v797, 64
  %v1002 = vpop.permute.xlu0 %1001
  %1003 = vrot.lane.b32.xlu0 %v798, 64
  %v1004 = vpop.permute.xlu0 %1003
  %1005 = vrot.lane.b32.xlu0 %v799, 64
  %v1006 = vpop.permute.xlu0 %1005
  %1007 = vrot.lane.b32.xlu0 %v800, 64
  %v1008 = vpop.permute.xlu0 %1007
  %1009 = vrot.lane.b32.xlu0 %v801, 64
  %v1010 = vpop.permute.xlu0 %1009
  %1043 = vrot.lane.b32.xlu0 %v802, 96
  %v1044 = vpop.permute.xlu0 %1043
  %1045 = vrot.lane.b32.xlu0 %v803, 96
  %v1046 = vpop.permute.xlu0 %1045
  %1047 = vrot.lane.b32.xlu0 %v804, 96
  %v1048 = vpop.permute.xlu0 %1047
  %1049 = vrot.lane.b32.xlu0 %v805, 96
  %v1050 = vpop.permute.xlu0 %1049
  %1051 = vrot.lane.b32.xlu0 %v806, 96
  %v1052 = vpop.permute.xlu0 %1051
  %1053 = vrot.lane.b32.xlu0 %v807, 96
  %v1054 = vpop.permute.xlu0 %1053
  %1055 = vrot.lane.b32.xlu0 %v808, 96
  %v1056 = vpop.permute.xlu0 %1055
  %1057 = vrot.lane.b32.xlu0 %v809, 96
  %v1058 = vpop.permute.xlu0 %1057
  %1059 = vrot.lane.b32.xlu0 %v810, 96
  %v1060 = vpop.permute.xlu0 %1059
  %1061 = vrot.lane.b32.xlu0 %v811, 96
  %v1062 = vpop.permute.xlu0 %1061
  %1063 = vrot.lane.b32.xlu0 %v812, 96
  %v1064 = vpop.permute.xlu0 %1063
  %1065 = vrot.lane.b32.xlu0 %v813, 96
  %v1066 = vpop.permute.xlu0 %1065
  %1067 = vrot.lane.b32.xlu0 %v814, 96
  %v1068 = vpop.permute.xlu0 %1067
  %1069 = vrot.lane.b32.xlu0 %v815, 96
  %v1070 = vpop.permute.xlu0 %1069
  %1071 = vrot.lane.b32.xlu0 %v816, 96
  %v1072 = vpop.permute.xlu0 %1071
  %1073 = vrot.lane.b32.xlu0 %v817, 96
  %v1074 = vpop.permute.xlu0 %1073
  %1107 = vrot.lane.b32.xlu0 %v834, 32
  %v1108 = vpop.permute.xlu0 %1107
  %1109 = vrot.lane.b32.xlu0 %v835, 32
  %v1110 = vpop.permute.xlu0 %1109
  %1111 = vrot.lane.b32.xlu0 %v836, 32
  %v1112 = vpop.permute.xlu0 %1111
  %1113 = vrot.lane.b32.xlu0 %v837, 32
  %v1114 = vpop.permute.xlu0 %1113
  %1115 = vrot.lane.b32.xlu0 %v838, 32
  %v1116 = vpop.permute.xlu0 %1115
  %1117 = vrot.lane.b32.xlu0 %v839, 32
  %v1118 = vpop.permute.xlu0 %1117
  %1119 = vrot.lane.b32.xlu0 %v840, 32
  %v1120 = vpop.permute.xlu0 %1119
  %1121 = vrot.lane.b32.xlu0 %v841, 32
  %v1122 = vpop.permute.xlu0 %1121
  %1123 = vrot.lane.b32.xlu0 %v842, 32
  %v1124 = vpop.permute.xlu0 %1123
  %1125 = vrot.lane.b32.xlu0 %v843, 32
  %v1126 = vpop.permute.xlu0 %1125
  %1127 = vrot.lane.b32.xlu0 %v844, 32
  %v1128 = vpop.permute.xlu0 %1127
  %1129 = vrot.lane.b32.xlu0 %v845, 32
  %v1130 = vpop.permute.xlu0 %1129
  %1131 = vrot.lane.b32.xlu0 %v846, 32
  %v1132 = vpop.permute.xlu0 %1131
  %1133 = vrot.lane.b32.xlu0 %v847, 32
  %v1134 = vpop.permute.xlu0 %1133
  %1135 = vrot.lane.b32.xlu0 %v848, 32
  %v1136 = vpop.permute.xlu0 %1135
  %1137 = vrot.lane.b32.xlu0 %v849, 32
  %v1138 = vpop.permute.xlu0 %1137
  %1171 = vrot.lane.b32.xlu0 %v851, 64
  %v1172 = vpop.permute.xlu0 %1171
  %1173 = vrot.lane.b32.xlu0 %v852, 64
  %v1174 = vpop.permute.xlu0 %1173
  %1175 = vrot.lane.b32.xlu0 %v853, 64
  %v1176 = vpop.permute.xlu0 %1175
  %1177 = vrot.lane.b32.xlu0 %v854, 64
  %v1178 = vpop.permute.xlu0 %1177
  %1179 = vrot.lane.b32.xlu0 %v855, 64
  %v1180 = vpop.permute.xlu0 %1179
  %1181 = vrot.lane.b32.xlu0 %v856, 64
  %v1182 = vpop.permute.xlu0 %1181
  %1183 = vrot.lane.b32.xlu0 %v857, 64
  %v1184 = vpop.permute.xlu0 %1183
  %1185 = vrot.lane.b32.xlu0 %v858, 64
  %v1186 = vpop.permute.xlu0 %1185
  %1187 = vrot.lane.b32.xlu0 %v859, 64
  %v1188 = vpop.permute.xlu0 %1187
  %1189 = vrot.lane.b32.xlu0 %v860, 64
  %v1190 = vpop.permute.xlu0 %1189
  %1191 = vrot.lane.b32.xlu0 %v861, 64
  %v1192 = vpop.permute.xlu0 %1191
  %1193 = vrot.lane.b32.xlu0 %v862, 64
  %v1194 = vpop.permute.xlu0 %1193
  %1195 = vrot.lane.b32.xlu0 %v863, 64
  %v1196 = vpop.permute.xlu0 %1195
  %1197 = vrot.lane.b32.xlu0 %v864, 64
  %v1198 = vpop.permute.xlu0 %1197
  %1199 = vrot.lane.b32.xlu0 %v865, 64
  %v1200 = vpop.permute.xlu0 %1199
  %1201 = vrot.lane.b32.xlu0 %v866, 64
  %v1202 = vpop.permute.xlu0 %1201
  %1235 = vrot.lane.b32.xlu0 %v867, 96
  %v1236 = vpop.permute.xlu0 %1235
  %1237 = vrot.lane.b32.xlu0 %v868, 96
  %v1238 = vpop.permute.xlu0 %1237
  %1239 = vrot.lane.b32.xlu0 %v869, 96
  %v1240 = vpop.permute.xlu0 %1239
  %1241 = vrot.lane.b32.xlu0 %v870, 96
  %v1242 = vpop.permute.xlu0 %1241
  %1243 = vrot.lane.b32.xlu0 %v871, 96
  %v1244 = vpop.permute.xlu0 %1243
  %1245 = vrot.lane.b32.xlu0 %v872, 96
  %v1246 = vpop.permute.xlu0 %1245
  %1247 = vrot.lane.b32.xlu0 %v873, 96
  %v1248 = vpop.permute.xlu0 %1247
  %1249 = vrot.lane.b32.xlu0 %v874, 96
  %v1250 = vpop.permute.xlu0 %1249
  %1251 = vrot.lane.b32.xlu0 %v875, 96
  %v1252 = vpop.permute.xlu0 %1251
  %1253 = vrot.lane.b32.xlu0 %v876, 96
  %v1254 = vpop.permute.xlu0 %1253
  %1255 = vrot.lane.b32.xlu0 %v877, 96
  %v1256 = vpop.permute.xlu0 %1255
  %1257 = vrot.lane.b32.xlu0 %v878, 96
  %v1258 = vpop.permute.xlu0 %1257
  %1259 = vrot.lane.b32.xlu0 %v879, 96
  %v1260 = vpop.permute.xlu0 %1259
  %1261 = vrot.lane.b32.xlu0 %v880, 96
  %v1262 = vpop.permute.xlu0 %1261
  %1263 = vrot.lane.b32.xlu0 %v881, 96
  %v1264 = vpop.permute.xlu0 %1263
  %1265 = vrot.lane.b32.xlu0 %v882, 96
  %v1266 = vpop.permute.xlu0 %1265
  %v1283 = vsel %vm326, %v754, %v916
  %v1284 = vsel %vm326, %v755, %v918
  %v1285 = vsel %vm326, %v756, %v920
  %v1286 = vsel %vm326, %v757, %v922
  %v1287 = vsel %vm326, %v758, %v924
  %v1288 = vsel %vm326, %v759, %v926
  %v1289 = vsel %vm326, %v760, %v928
  %v1290 = vsel %vm326, %v761, %v930
  %v1291 = vsel %vm326, %v762, %v932
  %v1292 = vsel %vm326, %v763, %v934
  %v1293 = vsel %vm326, %v764, %v936
  %v1294 = vsel %vm326, %v765, %v938
  %v1295 = vsel %vm326, %v766, %v940
  %v1296 = vsel %vm326, %v767, %v942
  %v1297 = vsel %vm326, %v768, %v944
  %v1298 = vsel %vm326, %v769, %v946
  %vm1299 = vcmask 523264
  %v1300 = vsel %vm1299, %v1283, %v980
  %v1301 = vsel %vm1299, %v1284, %v982
  %v1302 = vsel %vm1299, %v1285, %v984
  %v1303 = vsel %vm1299, %v1286, %v986
  %v1304 = vsel %vm1299, %v1287, %v988
  %v1305 = vsel %vm1299, %v1288, %v990
  %v1306 = vsel %vm1299, %v1289, %v992
  %v1307 = vsel %vm1299, %v1290, %v994
  %v1308 = vsel %vm1299, %v1291, %v996
  %v1309 = vsel %vm1299, %v1292, %v998
  %v1310 = vsel %vm1299, %v1293, %v1000
  %v1311 = vsel %vm1299, %v1294, %v1002
  %v1312 = vsel %vm1299, %v1295, %v1004
  %v1313 = vsel %vm1299, %v1296, %v1006
  %v1314 = vsel %vm1299, %v1297, %v1008
  %v1315 = vsel %vm1299, %v1298, %v1010
  %vm1316 = vcmask 785408
  %v1317 = vsel %vm1316, %v1300, %v1044
  %v1318 = vsel %vm1316, %v1301, %v1046
  %v1319 = vsel %vm1316, %v1302, %v1048
  %v1320 = vsel %vm1316, %v1303, %v1050
  %v1321 = vsel %vm1316, %v1304, %v1052
  %v1322 = vsel %vm1316, %v1305, %v1054
  %v1323 = vsel %vm1316, %v1306, %v1056
  %v1324 = vsel %vm1316, %v1307, %v1058
  %v1325 = vsel %vm1316, %v1308, %v1060
  %v1326 = vsel %vm1316, %v1309, %v1062
  %v1327 = vsel %vm1316, %v1310, %v1064
  %v1328 = vsel %vm1316, %v1311, %v1066
  %v1329 = vsel %vm1316, %v1312, %v1068
  %v1330 = vsel %vm1316, %v1313, %v1070
  %v1331 = vsel %vm1316, %v1314, %v1072
  %v1332 = vsel %vm1316, %v1315, %v1074
  %v1333 = vsel %vm326, %v818, %v1108
  %v1334 = vsel %vm326, %v819, %v1110
  %v1335 = vsel %vm326, %v820, %v1112
  %v1336 = vsel %vm326, %v821, %v1114
  %v1337 = vsel %vm326, %v822, %v1116
  %v1338 = vsel %vm326, %v823, %v1118
  %v1339 = vsel %vm326, %v824, %v1120
  %v1340 = vsel %vm326, %v825, %v1122
  %v1341 = vsel %vm326, %v826, %v1124
  %v1342 = vsel %vm326, %v827, %v1126
  %v1343 = vsel %vm326, %v828, %v1128
  %v1344 = vsel %vm326, %v829, %v1130
  %v1345 = vsel %vm326, %v830, %v1132
  %v1346 = vsel %vm326, %v831, %v1134
  %v1347 = vsel %vm326, %v832, %v1136
  %v1348 = vsel %vm326, %v833, %v1138
  %v1349 = vsel %vm1299, %v1333, %v1172
  %v1350 = vsel %vm1299, %v1334, %v1174
  %v1351 = vsel %vm1299, %v1335, %v1176
  %v1352 = vsel %vm1299, %v1336, %v1178
  %v1353 = vsel %vm1299, %v1337, %v1180
  %v1354 = vsel %vm1299, %v1338, %v1182
  %v1355 = vsel %vm1299, %v1339, %v1184
  %v1356 = vsel %vm1299, %v1340, %v1186
  %v1357 = vsel %vm1299, %v1341, %v1188
  %v1358 = vsel %vm1299, %v1342, %v1190
  %v1359 = vsel %vm1299, %v1343, %v1192
  %v1360 = vsel %vm1299, %v1344, %v1194
  %v1361 = vsel %vm1299, %v1345, %v1196
  %v1362 = vsel %vm1299, %v1346, %v1198
  %v1363 = vsel %vm1299, %v1347, %v1200
  %v1364 = vsel %vm1299, %v1348, %v1202
  %v1365 = vsel %vm1316, %v1349, %v1236
  %v1366 = vsel %vm1316, %v1350, %v1238
  %v1367 = vsel %vm1316, %v1351, %v1240
  %v1368 = vsel %vm1316, %v1352, %v1242
  %v1369 = vsel %vm1316, %v1353, %v1244
  %v1370 = vsel %vm1316, %v1354, %v1246
  %v1371 = vsel %vm1316, %v1355, %v1248
  %v1372 = vsel %vm1316, %v1356, %v1250
  %v1373 = vsel %vm1316, %v1357, %v1252
  %v1374 = vsel %vm1316, %v1358, %v1254
  %v1375 = vsel %vm1316, %v1359, %v1256
  %v1376 = vsel %vm1316, %v1360, %v1258
  %v1377 = vsel %vm1316, %v1361, %v1260
  %v1378 = vsel %vm1316, %v1362, %v1262
  %v1379 = vsel %vm1316, %v1363, %v1264
  %v1380 = vsel %vm1316, %v1364, %v1266
  %v1381 = vpack.c.bf16 %v1318, %v1317
  %v1382 = vpack.c.bf16 %v1366, %v1365
  %v1383 = vpack.c.bf16 %v884, %v883
  %v1384 = vpack.c.bf16 %v1320, %v1319
  %v1385 = vpack.c.bf16 %v1368, %v1367
  %v1386 = vpack.c.bf16 %v886, %v885
  %v1387 = vpack.c.bf16 %v1322, %v1321
  %v1388 = vpack.c.bf16 %v1370, %v1369
  %v1389 = vpack.c.bf16 %v888, %v887
  %v1390 = vpack.c.bf16 %v1324, %v1323
  %v1391 = vpack.c.bf16 %v1372, %v1371
  %v1392 = vpack.c.bf16 %v890, %v889
  %v1393 = vpack.c.bf16 %v1326, %v1325
  %v1394 = vpack.c.bf16 %v1374, %v1373
  %v1395 = vpack.c.bf16 %v892, %v891
  %v1396 = vpack.c.bf16 %v1328, %v1327
  %v1397 = vpack.c.bf16 %v1376, %v1375
  %v1398 = vpack.c.bf16 %v894, %v893
  %v1399 = vpack.c.bf16 %v1330, %v1329
  %v1400 = vpack.c.bf16 %v1378, %v1377
  %v1401 = vpack.c.bf16 %v896, %v895
  %v1402 = vpack.c.bf16 %v1332, %v1331
  %v1403 = vpack.c.bf16 %v1380, %v1379
  %v1404 = vpack.c.bf16 %v898, %v897
  %v1405 = vld [vmem:[%s4] sm:$0xf]
  %v1406 = vld [vmem:[%s4 + $0x4] sm:$0xf]
  %v1407 = vld [vmem:[%s4 + $0x8] sm:$0xf]
  %v1408 = vld [vmem:[%s4 + $0xc] sm:$0xf]
  %v1409 = vld [vmem:[%s4 + $0x10] sm:$0xf]
  %v1410 = vld [vmem:[%s4 + $0x14] sm:$0xf]
  %v1411 = vld [vmem:[%s4 + $0x18] sm:$0xf]
  %v1412 = vld [vmem:[%s4 + $0x1c] sm:$0xf]
  %v1413 = vld [vmem:[%s4 + $0x20] sm:$0xf]
  %v1414 = vld [vmem:[%s4 + $0x24] sm:$0xf]
  %v1415 = vld [vmem:[%s4 + $0x28] sm:$0xf]
  %v1416 = vld [vmem:[%s4 + $0x2c] sm:$0xf]
  %v1417 = vld [vmem:[%s4 + $0x30] sm:$0xf]
  %v1418 = vld [vmem:[%s4 + $0x34] sm:$0xf]
  %v1419 = vld [vmem:[%s4 + $0x38] sm:$0xf]
  %v1420 = vld [vmem:[%s4 + $0x3c] sm:$0xf]
  %v1421 = vld [vmem:[%s4 + $0x40] sm:$0xf]
  %v1422 = vld [vmem:[%s4 + $0x44] sm:$0xf]
  %v1423 = vld [vmem:[%s4 + $0x48] sm:$0xf]
  %v1424 = vld [vmem:[%s4 + $0x4c] sm:$0xf]
  %v1425 = vld [vmem:[%s4 + $0x50] sm:$0xf]
  %v1426 = vld [vmem:[%s4 + $0x54] sm:$0xf]
  %v1427 = vld [vmem:[%s4 + $0x58] sm:$0xf]
  %v1428 = vld [vmem:[%s4 + $0x5c] sm:$0xf]
  %v1429 = vld [vmem:[%s4 + $0x60] sm:$0xf]
  %v1430 = vld [vmem:[%s4 + $0x64] sm:$0xf]
  %v1431 = vld [vmem:[%s4 + $0x68] sm:$0xf]
  %v1432 = vld [vmem:[%s4 + $0x6c] sm:$0xf]
  %v1433 = vld [vmem:[%s4 + $0x70] sm:$0xf]
  %v1434 = vld [vmem:[%s4 + $0x74] sm:$0xf]
  %v1435 = vld [vmem:[%s4 + $0x78] sm:$0xf]
  %v1436 = vld [vmem:[%s4 + $0x7c] sm:$0xf]
  %v1437 = vld [vmem:[%s4 + $0x80] sm:$0xf]
  %v1438 = vld [vmem:[%s4 + $0x84] sm:$0xf]
  %v1439 = vld [vmem:[%s4 + $0x88] sm:$0xf]
  %v1440 = vld [vmem:[%s4 + $0x8c] sm:$0xf]
  %v1477 = vunpack.c.l.b16 %v1405
  %v1478 = vunpack.c.l.b16 %v1406
  %v1479 = vunpack.c.l.b16 %v1407
  %v1480 = vunpack.c.l.b16 %v1408
  %v1481 = vunpack.c.l.b16 %v1409
  %v1482 = vunpack.c.l.b16 %v1410
  %v1483 = vunpack.c.l.b16 %v1411
  %v1484 = vunpack.c.l.b16 %v1412
  %v1485 = vunpack.c.l.b16 %v1413
  %v1486 = vunpack.c.l.b16 %v1414
  %v1487 = vunpack.c.l.b16 %v1415
  %v1488 = vunpack.c.l.b16 %v1416
  %v1489 = vunpack.c.l.b16 %v1417
  %v1490 = vunpack.c.l.b16 %v1418
  %v1491 = vunpack.c.l.b16 %v1419
  %v1492 = vunpack.c.l.b16 %v1420
  %v1493 = vunpack.c.l.b16 %v1421
  %v1494 = vunpack.c.l.b16 %v1422
  %v1495 = vunpack.c.l.b16 %v1423
  %v1496 = vunpack.c.l.b16 %v1424
  %v1497 = vunpack.c.l.b16 %v1425
  %v1498 = vunpack.c.l.b16 %v1426
  %v1499 = vunpack.c.l.b16 %v1427
  %v1500 = vunpack.c.l.b16 %v1428
  %v1501 = vunpack.c.l.b16 %v1429
  %v1502 = vunpack.c.l.b16 %v1430
  %v1503 = vunpack.c.l.b16 %v1431
  %v1504 = vunpack.c.l.b16 %v1432
  %v1505 = vunpack.c.l.b16 %v1433
  %v1506 = vunpack.c.l.b16 %v1434
  %v1507 = vunpack.c.l.b16 %v1435
  %v1508 = vunpack.c.l.b16 %v1436
  %v1509 = vunpack.c.l.b16 %v1437
  %v1510 = vunpack.c.l.b16 %v1438
  %v1511 = vunpack.c.l.b16 %v1439
  %v1512 = vunpack.c.l.b16 %v1440
  %v1513 = vpack.c.b16 %v1478, %v1477
  %v1514 = vpack.c.b16 %v1480, %v1479
  %v1515 = vpack.c.b16 %v1482, %v1481
  %v1516 = vpack.c.b16 %v1484, %v1483
  %v1517 = vpack.c.b16 %v1486, %v1485
  %v1518 = vpack.c.b16 %v1488, %v1487
  %v1519 = vpack.c.b16 %v1490, %v1489
  %v1520 = vpack.c.b16 %v1492, %v1491
  %v1521 = vpack.c.b16 %v1494, %v1493
  %v1522 = vpack.c.b16 %v1496, %v1495
  %v1523 = vpack.c.b16 %v1498, %v1497
  %v1524 = vpack.c.b16 %v1500, %v1499
  %v1525 = vpack.c.b16 %v1502, %v1501
  %v1526 = vpack.c.b16 %v1504, %v1503
  %v1527 = vpack.c.b16 %v1506, %v1505
  %v1528 = vpack.c.b16 %v1508, %v1507
  %v1529 = vpack.c.b16 %v1510, %v1509
  %v1530 = vpack.c.b16 %v1512, %v1511
  %v1550 = vsel %vm326, %v1383, 0
  %v1553 = vsel %vm326, %v1386, 0
  %v1556 = vsel %vm326, %v1389, 0
  %v1559 = vsel %vm326, %v1392, 0
  %v1562 = vsel %vm326, %v1395, 0
  %v1565 = vsel %vm326, %v1398, 0
  %v1568 = vsel %vm326, %v1401, 0
  %v1571 = vsel %vm326, %v1404, 0
  %1573 = vmatpush.bf16.msra.mxu0 %v1520
  %1574 = vmatpush.bf16.msra.mxu0 %v1519
  %1575 = vmatpush.bf16.msra.mxu0 %v1518
  %1576 = vmatpush.bf16.msra.mxu0 %v1517
  %1577 = vmatpush.bf16.msra.mxu0 %v1516
  %1578 = vmatpush.bf16.msra.mxu0 %v1515
  %1579 = vmatpush.bf16.msra.mxu0 %v1514
  %1580 = vmatpush.bf16.msra.mxu0 %v1513
  %1581 = vmatmul.bf16.gmra.mxu0 %v1381
  %v1582 = vpop.f32.mrf.mxu0
  %v1583 = vadd.f32 0.0, %v1582
  %v1584 = vpop.f32.mrf.mxu0
  %v1585 = vadd.f32 0.0, %v1584
  %1586 = vmatmul.bf16.gmra.mxu0 %v1384
  %v1587 = vpop.f32.mrf.mxu0
  %v1588 = vadd.f32 0.0, %v1587
  %v1589 = vpop.f32.mrf.mxu0
  %v1590 = vadd.f32 0.0, %v1589
  %1591 = vmatmul.bf16.gmra.mxu0 %v1387
  %v1592 = vpop.f32.mrf.mxu0
  %v1593 = vadd.f32 0.0, %v1592
  %v1594 = vpop.f32.mrf.mxu0
  %v1595 = vadd.f32 0.0, %v1594
  %1596 = vmatmul.bf16.gmra.mxu0 %v1390
  %v1597 = vpop.f32.mrf.mxu0
  %v1598 = vadd.f32 0.0, %v1597
  %v1599 = vpop.f32.mrf.mxu0
  %v1600 = vadd.f32 0.0, %v1599
  %1601 = vmatmul.bf16.gmra.mxu0 %v1393
  %v1602 = vpop.f32.mrf.mxu0
  %v1603 = vadd.f32 0.0, %v1602
  %v1604 = vpop.f32.mrf.mxu0
  %v1605 = vadd.f32 0.0, %v1604
  %1606 = vmatmul.bf16.gmra.mxu0 %v1396
  %v1607 = vpop.f32.mrf.mxu0
  %v1608 = vadd.f32 0.0, %v1607
  %v1609 = vpop.f32.mrf.mxu0
  %v1610 = vadd.f32 0.0, %v1609
  %1611 = vmatmul.bf16.gmra.mxu0 %v1399
  %v1612 = vpop.f32.mrf.mxu0
  %v1613 = vadd.f32 0.0, %v1612
  %v1614 = vpop.f32.mrf.mxu0
  %v1615 = vadd.f32 0.0, %v1614
  %1616 = vmatmul.bf16.gmra.mxu0 %v1402
  %v1617 = vpop.f32.mrf.mxu0
  %v1618 = vadd.f32 0.0, %v1617
  %v1619 = vpop.f32.mrf.mxu0
  %v1620 = vadd.f32 0.0, %v1619
  %1621 = vdwg.mxu0
  %1622 = vmatpush.bf16.msra.mxu0 %v1528
  %1623 = vmatpush.bf16.msra.mxu0 %v1527
  %1624 = vmatpush.bf16.msra.mxu0 %v1526
  %1625 = vmatpush.bf16.msra.mxu0 %v1525
  %1626 = vmatpush.bf16.msra.mxu0 %v1524
  %1627 = vmatpush.bf16.msra.mxu0 %v1523
  %1628 = vmatpush.bf16.msra.mxu0 %v1522
  %1629 = vmatpush.bf16.msra.mxu0 %v1521
  %1630 = vmatmul.bf16.gmra.mxu0 %v1382
  %v1631 = vpop.f32.mrf.mxu0
  %v1632 = vadd.f32 %v1583, %v1631
  %v1633 = vpop.f32.mrf.mxu0
  %v1634 = vadd.f32 %v1585, %v1633
  %1635 = vmatmul.bf16.gmra.mxu0 %v1385
  %v1636 = vpop.f32.mrf.mxu0
  %v1637 = vadd.f32 %v1588, %v1636
  %v1638 = vpop.f32.mrf.mxu0
  %v1639 = vadd.f32 %v1590, %v1638
  %1640 = vmatmul.bf16.gmra.mxu0 %v1388
  %v1641 = vpop.f32.mrf.mxu0
  %v1642 = vadd.f32 %v1593, %v1641
  %v1643 = vpop.f32.mrf.mxu0
  %v1644 = vadd.f32 %v1595, %v1643
  %1645 = vmatmul.bf16.gmra.mxu0 %v1391
  %v1646 = vpop.f32.mrf.mxu0
  %v1647 = vadd.f32 %v1598, %v1646
  %v1648 = vpop.f32.mrf.mxu0
  %v1649 = vadd.f32 %v1600, %v1648
  %1650 = vmatmul.bf16.gmra.mxu0 %v1394
  %v1651 = vpop.f32.mrf.mxu0
  %v1652 = vadd.f32 %v1603, %v1651
  %v1653 = vpop.f32.mrf.mxu0
  %v1654 = vadd.f32 %v1605, %v1653
  %1655 = vmatmul.bf16.gmra.mxu0 %v1397
  %v1656 = vpop.f32.mrf.mxu0
  %v1657 = vadd.f32 %v1608, %v1656
  %v1658 = vpop.f32.mrf.mxu0
  %v1659 = vadd.f32 %v1610, %v1658
  %1660 = vmatmul.bf16.gmra.mxu0 %v1400
  %v1661 = vpop.f32.mrf.mxu0
  %v1662 = vadd.f32 %v1613, %v1661
  %v1663 = vpop.f32.mrf.mxu0
  %v1664 = vadd.f32 %v1615, %v1663
  %1665 = vmatmul.bf16.gmra.mxu0 %v1403
  %v1666 = vpop.f32.mrf.mxu0
  %v1667 = vadd.f32 %v1618, %v1666
  %v1668 = vpop.f32.mrf.mxu0
  %v1669 = vadd.f32 %v1620, %v1668
  %1670 = vdwg.mxu0
  %1671 = vmatpush.bf16.msra.mxu0 0
  %1672 = vmatpush.bf16.msra.mxu0 0
  %1673 = vmatpush.bf16.msra.mxu0 0
  %1674 = vmatpush.bf16.msra.mxu0 0
  %1675 = vmatpush.bf16.msra.mxu0 0
  %1676 = vmatpush.bf16.msra.mxu0 0
  %1677 = vmatpush.bf16.msra.mxu0 %v1530
  %1678 = vmatpush.bf16.msra.mxu0 %v1529
  %1679 = vmatmul.bf16.gmra.mxu0 %v1550
  %v1680 = vpop.f32.mrf.mxu0
  %v1681 = vadd.f32 %v1632, %v1680
  %v1682 = vpop.f32.mrf.mxu0
  %v1683 = vadd.f32 %v1634, %v1682
  %1684 = vmatmul.bf16.gmra.mxu0 %v1553
  %v1685 = vpop.f32.mrf.mxu0
  %v1686 = vadd.f32 %v1637, %v1685
  %v1687 = vpop.f32.mrf.mxu0
  %v1688 = vadd.f32 %v1639, %v1687
  %1689 = vmatmul.bf16.gmra.mxu0 %v1556
  %v1690 = vpop.f32.mrf.mxu0
  %v1691 = vadd.f32 %v1642, %v1690
  %v1692 = vpop.f32.mrf.mxu0
  %v1693 = vadd.f32 %v1644, %v1692
  %1694 = vmatmul.bf16.gmra.mxu0 %v1559
  %v1695 = vpop.f32.mrf.mxu0
  %v1696 = vadd.f32 %v1647, %v1695
  %v1697 = vpop.f32.mrf.mxu0
  %v1698 = vadd.f32 %v1649, %v1697
  %1699 = vmatmul.bf16.gmra.mxu0 %v1562
  %v1700 = vpop.f32.mrf.mxu0
  %v1701 = vadd.f32 %v1652, %v1700
  %v1702 = vpop.f32.mrf.mxu0
  %v1703 = vadd.f32 %v1654, %v1702
  %1704 = vmatmul.bf16.gmra.mxu0 %v1565
  %v1705 = vpop.f32.mrf.mxu0
  %v1706 = vadd.f32 %v1657, %v1705
  %v1707 = vpop.f32.mrf.mxu0
  %v1708 = vadd.f32 %v1659, %v1707
  %1709 = vmatmul.bf16.gmra.mxu0 %v1568
  %v1710 = vpop.f32.mrf.mxu0
  %v1711 = vadd.f32 %v1662, %v1710
  %v1712 = vpop.f32.mrf.mxu0
  %v1713 = vadd.f32 %v1664, %v1712
  %1714 = vmatmul.bf16.gmra.mxu0 %v1571
  %v1715 = vpop.f32.mrf.mxu0
  %v1716 = vadd.f32 %v1667, %v1715
  %v1717 = vpop.f32.mrf.mxu0
  %v1718 = vadd.f32 %v1669, %v1717
  %1719 = vdwg.mxu0
  %v1720 = vsel %vm326, %v1681, 0.0
  %v1721 = vsel %vm326, %v1683, 0.0
  %v1722 = vadd.f32 %v1720, %v1721
  %v1723 = vsel %vm326, %v1686, 0.0
  %v1724 = vadd.f32 %v1722, %v1723
  %v1725 = vsel %vm326, %v1688, 0.0
  %v1726 = vadd.f32 %v1724, %v1725
  %v1727 = vsel %vm326, %v1691, 0.0
  %v1728 = vadd.f32 %v1726, %v1727
  %v1729 = vsel %vm326, %v1693, 0.0
  %v1730 = vadd.f32 %v1728, %v1729
  %v1731 = vsel %vm326, %v1696, 0.0
  %v1732 = vadd.f32 %v1730, %v1731
  %v1733 = vsel %vm326, %v1698, 0.0
  %v1734 = vadd.f32 %v1732, %v1733
  %v1735 = vsel %vm326, %v1701, 0.0
  %v1736 = vadd.f32 %v1734, %v1735
  %v1737 = vsel %vm326, %v1703, 0.0
  %v1738 = vadd.f32 %v1736, %v1737
  %v1739 = vsel %vm326, %v1706, 0.0
  %v1740 = vadd.f32 %v1738, %v1739
  %v1741 = vsel %vm326, %v1708, 0.0
  %v1742 = vadd.f32 %v1740, %v1741
  %v1743 = vsel %vm326, %v1711, 0.0
  %v1744 = vadd.f32 %v1742, %v1743
  %v1745 = vsel %vm326, %v1713, 0.0
  %v1746 = vadd.f32 %v1744, %v1745
  %v1747 = vsel %vm326, %v1716, 0.0
  %v1748 = vadd.f32 %v1746, %v1747
  %v1749 = vsel %vm326, %v1718, 0.0
  %v1750 = vadd.f32 %v1748, %v1749
  %v1751 = vrot.slane %v1750, 4
  %v1752 = vadd.f32 %v1750, %v1751
  %v1753 = vrot.slane %v1752, 2
  %v1754 = vadd.f32 %v1752, %v1753
  %v1755 = vrot.slane %v1754, 1
  %v1756 = vadd.f32 %v1754, %v1755
  %v1757 = vmul.f32 %v1756, %v541
  %v1758 = vsub.f32 %v1681, %v1757
  %v1759 = vsub.f32 %v1683, %v1757
  %v1760 = vsub.f32 %v1686, %v1757
  %v1761 = vsub.f32 %v1688, %v1757
  %v1762 = vsub.f32 %v1691, %v1757
  %v1763 = vsub.f32 %v1693, %v1757
  %v1764 = vsub.f32 %v1696, %v1757
  %v1765 = vsub.f32 %v1698, %v1757
  %v1766 = vsub.f32 %v1701, %v1757
  %v1767 = vsub.f32 %v1703, %v1757
  %v1768 = vsub.f32 %v1706, %v1757
  %v1769 = vsub.f32 %v1708, %v1757
  %v1770 = vsub.f32 %v1711, %v1757
  %v1771 = vsub.f32 %v1713, %v1757
  %v1772 = vsub.f32 %v1716, %v1757
  %v1773 = vsub.f32 %v1718, %v1757
  %v1774 = vmul.f32 %v1758, %v1758
  %v1775 = vmul.f32 %v1759, %v1759
  %v1776 = vmul.f32 %v1760, %v1760
  %v1777 = vmul.f32 %v1761, %v1761
  %v1778 = vmul.f32 %v1762, %v1762
  %v1779 = vmul.f32 %v1763, %v1763
  %v1780 = vmul.f32 %v1764, %v1764
  %v1781 = vmul.f32 %v1765, %v1765
  %v1782 = vmul.f32 %v1766, %v1766
  %v1783 = vmul.f32 %v1767, %v1767
  %v1784 = vmul.f32 %v1768, %v1768
  %v1785 = vmul.f32 %v1769, %v1769
  %v1786 = vmul.f32 %v1770, %v1770
  %v1787 = vmul.f32 %v1771, %v1771
  %v1788 = vmul.f32 %v1772, %v1772
  %v1789 = vmul.f32 %v1773, %v1773
  %v1790 = vsel %vm326, %v1774, 0.0
  %v1791 = vsel %vm326, %v1775, 0.0
  %v1792 = vadd.f32 %v1790, %v1791
  %v1793 = vsel %vm326, %v1776, 0.0
  %v1794 = vadd.f32 %v1792, %v1793
  %v1795 = vsel %vm326, %v1777, 0.0
  %v1796 = vadd.f32 %v1794, %v1795
  %v1797 = vsel %vm326, %v1778, 0.0
  %v1798 = vadd.f32 %v1796, %v1797
  %v1799 = vsel %vm326, %v1779, 0.0
  %v1800 = vadd.f32 %v1798, %v1799
  %v1801 = vsel %vm326, %v1780, 0.0
  %v1802 = vadd.f32 %v1800, %v1801
  %v1803 = vsel %vm326, %v1781, 0.0
  %v1804 = vadd.f32 %v1802, %v1803
  %v1805 = vsel %vm326, %v1782, 0.0
  %v1806 = vadd.f32 %v1804, %v1805
  %v1807 = vsel %vm326, %v1783, 0.0
  %v1808 = vadd.f32 %v1806, %v1807
  %v1809 = vsel %vm326, %v1784, 0.0
  %v1810 = vadd.f32 %v1808, %v1809
  %v1811 = vsel %vm326, %v1785, 0.0
  %v1812 = vadd.f32 %v1810, %v1811
  %v1813 = vsel %vm326, %v1786, 0.0
  %v1814 = vadd.f32 %v1812, %v1813
  %v1815 = vsel %vm326, %v1787, 0.0
  %v1816 = vadd.f32 %v1814, %v1815
  %v1817 = vsel %vm326, %v1788, 0.0
  %v1818 = vadd.f32 %v1816, %v1817
  %v1819 = vsel %vm326, %v1789, 0.0
  %v1820 = vadd.f32 %v1818, %v1819
  %v1821 = vrot.slane %v1820, 4
  %v1822 = vadd.f32 %v1820, %v1821
  %v1823 = vrot.slane %v1822, 2
  %v1824 = vadd.f32 %v1822, %v1823
  %v1825 = vrot.slane %v1824, 1
  %v1826 = vadd.f32 %v1824, %v1825
  %v1827 = vmul.f32 %v1826, %v541
  %v1828 = vadd.f32 %v1827, 1e-05
  %v1829 = vrsqrt.pop %v1828
  %v1830 = vmul.f32 %v1829, %v1828
  %v1831 = vmul.f32 %v1830, %v1829
  %v1832 = vmul.f32 0.5, %v1831
  %v1833 = vsub.f32 1.5, %v1832
  %v1834 = vmul.f32 %v1829, %v1833
  %vm1835 = vweird.f32 %v1828
  %vm1836 = vweird.f32 %v1829
  %vm1837 = vmor %vm1835, %vm1836
  %v1838 = vsel %vm1837, %v1829, %v1834
  %v1839 = vmul.f32 %v1758, %v1838
  %v1840 = vmul.f32 %v1759, %v1838
  %v1841 = vmul.f32 %v1760, %v1838
  %v1842 = vmul.f32 %v1761, %v1838
  %v1843 = vmul.f32 %v1762, %v1838
  %v1844 = vmul.f32 %v1763, %v1838
  %v1845 = vmul.f32 %v1764, %v1838
  %v1846 = vmul.f32 %v1765, %v1838
  %v1847 = vmul.f32 %v1766, %v1838
  %v1848 = vmul.f32 %v1767, %v1838
  %v1849 = vmul.f32 %v1768, %v1838
  %v1850 = vmul.f32 %v1769, %v1838
  %v1851 = vmul.f32 %v1770, %v1838
  %v1852 = vmul.f32 %v1771, %v1838
  %v1853 = vmul.f32 %v1772, %v1838
  %v1854 = vmul.f32 %v1773, %v1838
  %v1855 = vld [vmem:[%s5] sm:$0x1]
  %v1857 = vperm.slane %v1855, 0
  %v1859 = vmul.f32 %v1839, %v1857
  %v1860 = vmul.f32 %v1840, %v1857
  %v1861 = vmul.f32 %v1841, %v1857
  %v1862 = vmul.f32 %v1842, %v1857
  %v1863 = vmul.f32 %v1843, %v1857
  %v1864 = vmul.f32 %v1844, %v1857
  %v1865 = vmul.f32 %v1845, %v1857
  %v1866 = vmul.f32 %v1846, %v1857
  %v1867 = vmul.f32 %v1847, %v1857
  %v1868 = vmul.f32 %v1848, %v1857
  %v1869 = vmul.f32 %v1849, %v1857
  %v1870 = vmul.f32 %v1850, %v1857
  %v1871 = vmul.f32 %v1851, %v1857
  %v1872 = vmul.f32 %v1852, %v1857
  %v1873 = vmul.f32 %v1853, %v1857
  %v1874 = vmul.f32 %v1854, %v1857
  %v1875 = vld [vmem:[%s6] sm:$0x1]
  %v1877 = vperm.slane %v1875, 0
  %v1879 = vadd.f32 %v1859, %v1877
  %v1880 = vadd.f32 %v1860, %v1877
  %v1881 = vadd.f32 %v1861, %v1877
  %v1882 = vadd.f32 %v1862, %v1877
  %v1883 = vadd.f32 %v1863, %v1877
  %v1884 = vadd.f32 %v1864, %v1877
  %v1885 = vadd.f32 %v1865, %v1877
  %v1886 = vadd.f32 %v1866, %v1877
  %v1887 = vadd.f32 %v1867, %v1877
  %v1888 = vadd.f32 %v1868, %v1877
  %v1889 = vadd.f32 %v1869, %v1877
  %v1890 = vadd.f32 %v1870, %v1877
  %v1891 = vadd.f32 %v1871, %v1877
  %v1892 = vadd.f32 %v1872, %v1877
  %v1893 = vadd.f32 %v1873, %v1877
  %v1894 = vadd.f32 %v1874, %v1877
  %v1895 = vld [vmem:[%s7] sm:$0xff]
  %v1896 = vld [vmem:[%s7 + $0x8] sm:$0xff]
  %v1897 = vld [vmem:[%s7 + $0x10] sm:$0xff]
  %v1898 = vld [vmem:[%s7 + $0x18] sm:$0xff]
  %v1899 = vld [vmem:[%s7 + $0x20] sm:$0xff]
  %v1900 = vld [vmem:[%s7 + $0x28] sm:$0xff]
  %v1901 = vld [vmem:[%s7 + $0x30] sm:$0xff]
  %v1902 = vld [vmem:[%s7 + $0x38] sm:$0xff]
  %v1903 = vld [vmem:[%s7 + $0x40] sm:$0xff]
  %v1904 = vld [vmem:[%s7 + $0x48] sm:$0xff]
  %v1905 = vld [vmem:[%s7 + $0x50] sm:$0xff]
  %v1906 = vld [vmem:[%s7 + $0x58] sm:$0xff]
  %v1907 = vld [vmem:[%s7 + $0x60] sm:$0xff]
  %v1908 = vld [vmem:[%s7 + $0x68] sm:$0xff]
  %v1909 = vld [vmem:[%s7 + $0x70] sm:$0xff]
  %v1910 = vld [vmem:[%s7 + $0x78] sm:$0xff]
  %v1911 = vadd.f32 %v1879, %v1895
  %v1912 = vadd.f32 %v1880, %v1896
  %v1913 = vadd.f32 %v1881, %v1897
  %v1914 = vadd.f32 %v1882, %v1898
  %v1915 = vadd.f32 %v1883, %v1899
  %v1916 = vadd.f32 %v1884, %v1900
  %v1917 = vadd.f32 %v1885, %v1901
  %v1918 = vadd.f32 %v1886, %v1902
  %v1919 = vadd.f32 %v1887, %v1903
  %v1920 = vadd.f32 %v1888, %v1904
  %v1921 = vadd.f32 %v1889, %v1905
  %v1922 = vadd.f32 %v1890, %v1906
  %v1923 = vadd.f32 %v1891, %v1907
  %v1924 = vadd.f32 %v1892, %v1908
  %v1925 = vadd.f32 %v1893, %v1909
  %v1926 = vadd.f32 %v1894, %v1910
  %v1927 = vmax.f32 %v1911, 0.0
  %v1928 = vmax.f32 %v1912, 0.0
  %v1929 = vmax.f32 %v1913, 0.0
  %v1930 = vmax.f32 %v1914, 0.0
  %v1931 = vmax.f32 %v1915, 0.0
  %v1932 = vmax.f32 %v1916, 0.0
  %v1933 = vmax.f32 %v1917, 0.0
  %v1934 = vmax.f32 %v1918, 0.0
  %v1935 = vmax.f32 %v1919, 0.0
  %v1936 = vmax.f32 %v1920, 0.0
  %v1937 = vmax.f32 %v1921, 0.0
  %v1938 = vmax.f32 %v1922, 0.0
  %v1939 = vmax.f32 %v1923, 0.0
  %v1940 = vmax.f32 %v1924, 0.0
  %v1941 = vmax.f32 %v1925, 0.0
  %v1942 = vmax.f32 %v1926, 0.0
  %1943 = vst.msk [vmem:[%s8] sm:$0xff] %vm326, %v1927
  %1944 = vst.msk [vmem:[%s8 + $0x8] sm:$0xff] %vm326, %v1928
  %1945 = vst.msk [vmem:[%s8 + $0x10] sm:$0xff] %vm326, %v1929
  %1946 = vst.msk [vmem:[%s8 + $0x18] sm:$0xff] %vm326, %v1930
  %1947 = vst.msk [vmem:[%s8 + $0x20] sm:$0xff] %vm326, %v1931
  %1948 = vst.msk [vmem:[%s8 + $0x28] sm:$0xff] %vm326, %v1932
  %1949 = vst.msk [vmem:[%s8 + $0x30] sm:$0xff] %vm326, %v1933
  %1950 = vst.msk [vmem:[%s8 + $0x38] sm:$0xff] %vm326, %v1934
  %1951 = vst.msk [vmem:[%s8 + $0x40] sm:$0xff] %vm326, %v1935
  %1952 = vst.msk [vmem:[%s8 + $0x48] sm:$0xff] %vm326, %v1936
  %1953 = vst.msk [vmem:[%s8 + $0x50] sm:$0xff] %vm326, %v1937
  %1954 = vst.msk [vmem:[%s8 + $0x58] sm:$0xff] %vm326, %v1938
  %1955 = vst.msk [vmem:[%s8 + $0x60] sm:$0xff] %vm326, %v1939
  %1956 = vst.msk [vmem:[%s8 + $0x68] sm:$0xff] %vm326, %v1940
  %1957 = vst.msk [vmem:[%s8 + $0x70] sm:$0xff] %vm326, %v1941
  %1958 = vst.msk [vmem:[%s8 + $0x78] sm:$0xff] %vm326, %v1942
  // Predicated region
  $region34: #{_lambda_.4} parent=0 // pred_check
    _
  $region35: #{_lambda_.4} parent=0 // pred_check_branch
    %1960 = sbr.rel (0) target = $region37
  $region36: #{_lambda_.4} parent=0 // pred_region
    _
  $region37: #{_lambda_.4} parent=0 // pred_fallthru
    _
  // Predicated region
  $region38: #{_lambda_.4} parent=0 // pred_check
    _
  $region39: #{_lambda_.4} parent=0 // pred_check_branch
    %1962 = sbr.rel (0) target = $region41
  $region40: #{_lambda_.4} parent=0 // pred_region
    _
  $region41: #{_lambda_.4} parent=0 // pred_fallthru
    _

// kernel: _lambda_.5
$region0: #{_lambda_.5}
  #allocation0 [shape = 'u32[]', space=smem, size = 0x4, offset = 0x4, fixed_abs, tag = 'smem constant byte address 0x4 - core index']
  #allocation1 [shape = 'u32[72,128]{1,0:T(1,128)}', space=vmem, size = 0x9000, scoped, tag = 'internal scratch']
  #allocation2 [shape = 'f32[2,6,6,64]{3,2,1,0:T(8,128)}', space=vmem, size = 0xc000, scoped, tag = 'scratch operand']
  %s0 = inlined_call_operand.vmem [shape: bf16[32,288], index: 0, kind: input, shape index: {}]
  %s1 = inlined_call_operand.vmem [shape: bf16[288,64], index: 1, kind: input, shape index: {}]
  %s2 = inlined_call_operand.vmem [shape: f32[1,64], index: 2, kind: input, shape index: {}]
  %s3 = inlined_call_operand.vmem [shape: f32[1,64], index: 3, kind: input, shape index: {}]
  %s4 = inlined_call_operand.vmem [shape: bf16[576,64], index: 4, kind: input, shape index: {}]
  %s5 = inlined_call_operand.vmem [shape: f32[1,64], index: 5, kind: input, shape index: {}]
  %s6 = inlined_call_operand.vmem [shape: f32[1,64], index: 6, kind: input, shape index: {}]
  %s7 = inlined_call_operand.vmem [shape: f32[32,64], index: 7, kind: input, shape index: {}]
  %s8 = inlined_call_operand.hbm [shape: f32[32,64], index: 8, kind: output, shape index: {}]
  %s9 = sld [smem:[#allocation0]]
  $region42: #{_lambda_.5} parent=0
    _
  %s11 = ssub.s32 1, %s9
  %s12 = scalar_select 0, %s11, %s9
  $region1: #{_lambda_.5} parent=0
    #allocation3 [shape = 'u8[16384]{0}', space=vmem, size = 0x4000, scoped, tag = 'output window, operand 0, single buffered']
    #allocation4 [shape = 's32[1]{0}', space=sflag, size = 0x4, scoped, tag = 'scoped memory for _lambda_.5']
    %13 = vsyncpa [#allocation4], 0
    // Predicated region
    $region2: #{_lambda_.5} parent=1 // pred_check
      _
    $region3: #{_lambda_.5} parent=1 // pred_check_branch
      %15 = sbr.rel (0) target = $region5
    $region4: #{_lambda_.5} parent=1 // pred_region
      _
    $region5: #{_lambda_.5} parent=1 // pred_fallthru
      _
    // Predicated region
    $region6: #{_lambda_.5} parent=1 // pred_check
      _
    $region7: #{_lambda_.5} parent=1 // pred_check_branch
      %17 = sbr.rel (0) target = $region9
    $region8: #{_lambda_.5} parent=1 // pred_region
      _
    $region9: #{_lambda_.5} parent=1 // pred_fallthru
      _
    // Predicated region
    $region10: #{_lambda_.5} parent=1 // pred_check
      _
    $region11: #{_lambda_.5} parent=1 // pred_check_branch
      %19 = sbr.rel (0) target = $region13
    $region12: #{_lambda_.5} parent=1 // pred_region
      _
    $region13: #{_lambda_.5} parent=1 // pred_fallthru
      _
    // Predicated region
    $region14: #{_lambda_.5} parent=1 // pred_check
      _
    $region15: #{_lambda_.5} parent=1 // pred_check_branch
      %21 = sbr.rel (0) target = $region17
    $region16: #{_lambda_.5} parent=1 // pred_region
      _
    $region17: #{_lambda_.5} parent=1 // pred_fallthru
      _
    // Predicated region
    $region18: #{_lambda_.5} parent=1 // pred_check
      _
    $region19: #{_lambda_.5} parent=1 // pred_check_branch
      %23 = sbr.rel (0) target = $region21
    $region20: #{_lambda_.5} parent=1 // pred_region
      _
    $region21: #{_lambda_.5} parent=1 // pred_fallthru
      _
    // Predicated region
    $region22: #{_lambda_.5} parent=1 // pred_check
      _
    $region23: #{_lambda_.5} parent=1 // pred_check_branch
      %25 = sbr.rel (0) target = $region25
    $region24: #{_lambda_.5} parent=1 // pred_region
      _
    $region25: #{_lambda_.5} parent=1 // pred_fallthru
      _
    // Predicated region
    $region26: #{_lambda_.5} parent=1 // pred_check
      _
    $region27: #{_lambda_.5} parent=1 // pred_check_branch
      %27 = sbr.rel (0) target = $region29
    $region28: #{_lambda_.5} parent=1 // pred_region
      _
    $region29: #{_lambda_.5} parent=1 // pred_fallthru
      _
    // Predicated region
    $region30: #{_lambda_.5} parent=1 // pred_check
      _
    $region31: #{_lambda_.5} parent=1 // pred_check_branch
      %29 = sbr.rel (0) target = $region33
    $region32: #{_lambda_.5} parent=1 // pred_region
      _
    $region33: #{_lambda_.5} parent=1 // pred_fallthru
      _
    %v31 = vld [vmem:[%s0] sm:$0xff]
    %v32 = vld [vmem:[%s0 + $0x8] sm:$0xf]
    %v33 = vld [vmem:[%s0 + $0xc] sm:$0xff]
    %v34 = vld [vmem:[%s0 + $0x14] sm:$0xf]
    %v35 = vld [vmem:[%s0 + $0x18] sm:$0xff]
    %v36 = vld [vmem:[%s0 + $0x20] sm:$0xf]
    %v37 = vld [vmem:[%s0 + $0x24] sm:$0xff]
    %v38 = vld [vmem:[%s0 + $0x2c] sm:$0xf]
    %v39 = vld [vmem:[%s1] sm:$0xf]
    %v40 = vld [vmem:[%s1 + $0x4] sm:$0xf]
    %v41 = vld [vmem:[%s1 + $0x8] sm:$0xf]
    %v42 = vld [vmem:[%s1 + $0xc] sm:$0xf]
    %v43 = vld [vmem:[%s1 + $0x10] sm:$0xf]
    %v44 = vld [vmem:[%s1 + $0x14] sm:$0xf]
    %v45 = vld [vmem:[%s1 + $0x18] sm:$0xf]
    %v46 = vld [vmem:[%s1 + $0x1c] sm:$0xf]
    %v47 = vld [vmem:[%s1 + $0x20] sm:$0xf]
    %v48 = vld [vmem:[%s1 + $0x24] sm:$0xf]
    %v49 = vld [vmem:[%s1 + $0x28] sm:$0xf]
    %v50 = vld [vmem:[%s1 + $0x2c] sm:$0xf]
    %v51 = vld [vmem:[%s1 + $0x30] sm:$0xf]
    %v52 = vld [vmem:[%s1 + $0x34] sm:$0xf]
    %v53 = vld [vmem:[%s1 + $0x38] sm:$0xf]
    %v54 = vld [vmem:[%s1 + $0x3c] sm:$0xf]
    %v55 = vld [vmem:[%s1 + $0x40] sm:$0xf]
    %v56 = vld [vmem:[%s1 + $0x44] sm:$0xf]
    %v57 = vld [vmem:[%s1 + $0x48] sm:$0xf]
    %v58 = vld [vmem:[%s1 + $0x4c] sm:$0xf]
    %v59 = vld [vmem:[%s1 + $0x50] sm:$0xf]
    %v60 = vld [vmem:[%s1 + $0x54] sm:$0xf]
    %v61 = vld [vmem:[%s1 + $0x58] sm:$0xf]
    %v62 = vld [vmem:[%s1 + $0x5c] sm:$0xf]
    %v63 = vld [vmem:[%s1 + $0x60] sm:$0xf]
    %v64 = vld [vmem:[%s1 + $0x64] sm:$0xf]
    %v65 = vld [vmem:[%s1 + $0x68] sm:$0xf]
    %v66 = vld [vmem:[%s1 + $0x6c] sm:$0xf]
    %v67 = vld [vmem:[%s1 + $0x70] sm:$0xf]
    %v68 = vld [vmem:[%s1 + $0x74] sm:$0xf]
    %v69 = vld [vmem:[%s1 + $0x78] sm:$0xf]
    %v70 = vld [vmem:[%s1 + $0x7c] sm:$0xf]
    %v71 = vld [vmem:[%s1 + $0x80] sm:$0xf]
    %v72 = vld [vmem:[%s1 + $0x84] sm:$0xf]
    %v73 = vld [vmem:[%s1 + $0x88] sm:$0xf]
    %v74 = vld [vmem:[%s1 + $0x8c] sm:$0xf]
    %v83 = vunpack.c.l.b16 %v31
    %v84 = vunpack.c.h.b16 %v31
    %v85 = vunpack.c.l.b16 %v32
    %v86 = vunpack.c.l.b16 %v33
    %v87 = vunpack.c.h.b16 %v33
    %v88 = vunpack.c.l.b16 %v34
    %v89 = vunpack.c.l.b16 %v35
    %v90 = vunpack.c.h.b16 %v35
    %v91 = vunpack.c.l.b16 %v36
    %v92 = vunpack.c.l.b16 %v37
    %v93 = vunpack.c.h.b16 %v37
    %v94 = vunpack.c.l.b16 %v38
    %v95 = vpack.c.b16 %v86, %v83
    %v96 = vpack.c.b16 %v87, %v84
    %v97 = vpack.c.b16 %v88, %v85
    %v98 = vpack.c.b16 %v92, %v89
    %v99 = vpack.c.b16 %v93, %v90
    %v100 = vpack.c.b16 %v94, %v91
    %v141 = vunpack.c.l.b16 %v39
    %v142 = vunpack.c.l.b16 %v40
    %v143 = vunpack.c.l.b16 %v41
    %v144 = vunpack.c.l.b16 %v42
    %v145 = vunpack.c.l.b16 %v43
    %v146 = vunpack.c.l.b16 %v44
    %v147 = vunpack.c.l.b16 %v45
    %v148 = vunpack.c.l.b16 %v46
    %v149 = vunpack.c.l.b16 %v47
    %v150 = vunpack.c.l.b16 %v48
    %v151 = vunpack.c.l.b16 %v49
    %v152 = vunpack.c.l.b16 %v50
    %v153 = vunpack.c.l.b16 %v51
    %v154 = vunpack.c.l.b16 %v52
    %v155 = vunpack.c.l.b16 %v53
    %v156 = vunpack.c.l.b16 %v54
    %v157 = vunpack.c.l.b16 %v55
    %v158 = vunpack.c.l.b16 %v56
    %v159 = vunpack.c.l.b16 %v57
    %v160 = vunpack.c.l.b16 %v58
    %v161 = vunpack.c.l.b16 %v59
    %v162 = vunpack.c.l.b16 %v60
    %v163 = vunpack.c.l.b16 %v61
    %v164 = vunpack.c.l.b16 %v62
    %v165 = vunpack.c.l.b16 %v63
    %v166 = vunpack.c.l.b16 %v64
    %v167 = vunpack.c.l.b16 %v65
    %v168 = vunpack.c.l.b16 %v66
    %v169 = vunpack.c.l.b16 %v67
    %v170 = vunpack.c.l.b16 %v68
    %v171 = vunpack.c.l.b16 %v69
    %v172 = vunpack.c.l.b16 %v70
    %v173 = vunpack.c.l.b16 %v71
    %v174 = vunpack.c.l.b16 %v72
    %v175 = vunpack.c.l.b16 %v73
    %v176 = vunpack.c.l.b16 %v74
    %v177 = vpack.c.b16 %v142, %v141
    %v178 = vpack.c.b16 %v144, %v143
    %v179 = vpack.c.b16 %v146, %v145
    %v180 = vpack.c.b16 %v148, %v147
    %v181 = vpack.c.b16 %v150, %v149
    %v182 = vpack.c.b16 %v152, %v151
    %v183 = vpack.c.b16 %v154, %v153
    %v184 = vpack.c.b16 %v156, %v155
    %v185 = vpack.c.b16 %v158, %v157
    %v186 = vpack.c.b16 %v160, %v159
    %v187 = vpack.c.b16 %v162, %v161
    %v188 = vpack.c.b16 %v164, %v163
    %v189 = vpack.c.b16 %v166, %v165
    %v190 = vpack.c.b16 %v168, %v167
    %v191 = vpack.c.b16 %v170, %v169
    %v192 = vpack.c.b16 %v172, %v171
    %v193 = vpack.c.b16 %v174, %v173
    %v194 = vpack.c.b16 %v176, %v175
    %vm213 = vcmask 261120
    %v215 = vsel %vm213, %v97, 0
    %v218 = vsel %vm213, %v100, 0
    %220 = vmatpush.bf16.msra.mxu0 %v184
    %221 = vmatpush.bf16.msra.mxu0 %v183
    %222 = vmatpush.bf16.msra.mxu0 %v182
    %223 = vmatpush.bf16.msra.mxu0 %v181
    %224 = vmatpush.bf16.msra.mxu0 %v180
    %225 = vmatpush.bf16.msra.mxu0 %v179
    %226 = vmatpush.bf16.msra.mxu0 %v178
    %227 = vmatpush.bf16.msra.mxu0 %v177
    %228 = vmatmul.bf16.gmra.mxu0 %v95
    %v229 = vpop.f32.mrf.mxu0
    %v230 = vadd.f32 0.0, %v229
    %v231 = vpop.f32.mrf.mxu0
    %v232 = vadd.f32 0.0, %v231
    %233 = vmatmul.bf16.gmra.mxu0 %v98
    %v234 = vpop.f32.mrf.mxu0
    %v235 = vadd.f32 0.0, %v234
    %v236 = vpop.f32.mrf.mxu0
    %v237 = vadd.f32 0.0, %v236
    %238 = vdwg.mxu0
    %239 = vmatpush.bf16.msra.mxu0 %v192
    %240 = vmatpush.bf16.msra.mxu0 %v191
    %241 = vmatpush.bf16.msra.mxu0 %v190
    %242 = vmatpush.bf16.msra.mxu0 %v189
    %243 = vmatpush.bf16.msra.mxu0 %v188
    %244 = vmatpush.bf16.msra.mxu0 %v187
    %245 = vmatpush.bf16.msra.mxu0 %v186
    %246 = vmatpush.bf16.msra.mxu0 %v185
    %247 = vmatmul.bf16.gmra.mxu0 %v96
    %v248 = vpop.f32.mrf.mxu0
    %v249 = vadd.f32 %v230, %v248
    %v250 = vpop.f32.mrf.mxu0
    %v251 = vadd.f32 %v232, %v250
    %252 = vmatmul.bf16.gmra.mxu0 %v99
    %v253 = vpop.f32.mrf.mxu0
    %v254 = vadd.f32 %v235, %v253
    %v255 = vpop.f32.mrf.mxu0
    %v256 = vadd.f32 %v237, %v255
    %257 = vdwg.mxu0
    %258 = vmatpush.bf16.msra.mxu0 0
    %259 = vmatpush.bf16.msra.mxu0 0
    %260 = vmatpush.bf16.msra.mxu0 0
    %261 = vmatpush.bf16.msra.mxu0 0
    %262 = vmatpush.bf16.msra.mxu0 0
    %263 = vmatpush.bf16.msra.mxu0 0
    %264 = vmatpush.bf16.msra.mxu0 %v194
    %265 = vmatpush.bf16.msra.mxu0 %v193
    %266 = vmatmul.bf16.gmra.mxu0 %v215
    %v267 = vpop.f32.mrf.mxu0
    %v268 = vadd.f32 %v249, %v267
    %v269 = vpop.f32.mrf.mxu0
    %v270 = vadd.f32 %v251, %v269
    %271 = vmatmul.bf16.gmra.mxu0 %v218
    %v272 = vpop.f32.mrf.mxu0
    %v273 = vadd.f32 %v254, %v272
    %v274 = vpop.f32.mrf.mxu0
    %v275 = vadd.f32 %v256, %v274
    %276 = vdwg.mxu0
    %vm277 = vcmask 523264
    %v278 = vsel %vm277, %v268, 0.0
    %v279 = vsel %vm277, %v270, 0.0
    %v280 = vadd.f32 %v278, %v279
    %v281 = vsel %vm277, %v273, 0.0
    %v282 = vadd.f32 %v280, %v281
    %v283 = vsel %vm277, %v275, 0.0
    %v284 = vadd.f32 %v282, %v283
    %v285 = vrot.slane %v284, 4
    %v286 = vadd.f32 %v284, %v285
    %v287 = vrot.slane %v286, 2
    %v288 = vadd.f32 %v286, %v287
    %v289 = vrot.slane %v288, 1
    %v290 = vadd.f32 %v288, %v289
    %v291 = vrcp.pop 32.0
    %v292 = vmul.f32 32.0, %v291
    %v293 = vsub.f32 1.0, %v292
    %v294 = vmul.f32 %v291, %v293
    %v295 = vadd.f32 %v291, %v294
    %vm296 = vweird.f32 %v291
    %v297 = vsel %vm296, %v291, %v295
    %v298 = vmul.f32 %v290, %v297
    %v299 = vsub.f32 %v268, %v298
    %v300 = vsub.f32 %v270, %v298
    %v301 = vsub.f32 %v273, %v298
    %v302 = vsub.f32 %v275, %v298
    %v303 = vmul.f32 %v299, %v299
    %v304 = vmul.f32 %v300, %v300
    %v305 = vmul.f32 %v301, %v301
    %v306 = vmul.f32 %v302, %v302
    %v307 = vsel %vm277, %v303, 0.0
    %v308 = vsel %vm277, %v304, 0.0
    %v309 = vadd.f32 %v307, %v308
    %v310 = vsel %vm277, %v305, 0.0
    %v311 = vadd.f32 %v309, %v310
    %v312 = vsel %vm277, %v306, 0.0
    %v313 = vadd.f32 %v311, %v312
    %v314 = vrot.slane %v313, 4
    %v315 = vadd.f32 %v313, %v314
    %v316 = vrot.slane %v315, 2
    %v317 = vadd.f32 %v315, %v316
    %v318 = vrot.slane %v317, 1
    %v319 = vadd.f32 %v317, %v318
    %v320 = vmul.f32 %v319, %v297
    %v321 = vadd.f32 %v320, 1e-05
    %v322 = vrsqrt.pop %v321
    %v323 = vmul.f32 %v322, %v321
    %v324 = vmul.f32 %v323, %v322
    %v325 = vmul.f32 0.5, %v324
    %v326 = vsub.f32 1.5, %v325
    %v327 = vmul.f32 %v322, %v326
    %vm328 = vweird.f32 %v321
    %vm329 = vweird.f32 %v322
    %vm330 = vmor %vm328, %vm329
    %v331 = vsel %vm330, %v322, %v327
    %v332 = vmul.f32 %v299, %v331
    %v333 = vmul.f32 %v300, %v331
    %v334 = vmul.f32 %v301, %v331
    %v335 = vmul.f32 %v302, %v331
    %v336 = vld [vmem:[%s2] sm:$0x1]
    %v338 = vperm.slane %v336, 0
    %v340 = vmul.f32 %v332, %v338
    %v341 = vmul.f32 %v333, %v338
    %v342 = vmul.f32 %v334, %v338
    %v343 = vmul.f32 %v335, %v338
    %v344 = vld [vmem:[%s3] sm:$0x1]
    %v346 = vperm.slane %v344, 0
    %v348 = vadd.f32 %v340, %v346
    %v349 = vadd.f32 %v341, %v346
    %v350 = vadd.f32 %v342, %v346
    %v351 = vadd.f32 %v343, %v346
    %v352 = vmax.f32 %v348, 0.0
    %v353 = vmax.f32 %v349, 0.0
    %v354 = vmax.f32 %v350, 0.0
    %v355 = vmax.f32 %v351, 0.0
    %vm356 = vcmask 521216
    %357 = vst.msk [vmem:[#allocation2] sm:$0x3f] %vm356, 0.0
    %358 = vst.msk [vmem:[#allocation2 + $0x8] sm:$0x3f] %vm356, 0.0
    %359 = vst.msk [vmem:[#allocation2 + $0x10] sm:$0x3f] %vm356, 0.0
    %360 = vst.msk [vmem:[#allocation2 + $0x18] sm:$0x3f] %vm356, 0.0
    %361 = vst.msk [vmem:[#allocation2 + $0x20] sm:$0x3f] %vm356, 0.0
    %362 = vst.msk [vmem:[#allocation2 + $0x28] sm:$0x3f] %vm356, 0.0
    %363 = vst.msk [vmem:[#allocation2 + $0x30] sm:$0x3f] %vm356, 0.0
    %364 = vst.msk [vmem:[#allocation2 + $0x38] sm:$0x3f] %vm356, 0.0
    %365 = vst.msk [vmem:[#allocation2 + $0x40] sm:$0x3f] %vm356, 0.0
    %366 = vst.msk [vmem:[#allocation2 + $0x48] sm:$0x3f] %vm356, 0.0
    %367 = vst.msk [vmem:[#allocation2 + $0x50] sm:$0x3f] %vm356, 0.0
    %368 = vst.msk [vmem:[#allocation2 + $0x58] sm:$0x3f] %vm356, 0.0
    %v373 = vrot.slane %v352, 4
    %v374 = vrot.slane %v353, 4
    %v375 = vrot.slane %v354, 4
    %v376 = vrot.slane %v355, 4
    %s381 = scalar_lea.vmem [#allocation2], 8
    %vm382 = vcmask 519168
    %383 = vst.msk [vmem:[%s381 + $0x1] sm:$0xf] %vm382, %v352
    %384 = vst.msk [vmem:[%s381 + $0x9] sm:$0xf] %vm382, %v373
    %385 = vst.msk [vmem:[%s381 + $0x11] sm:$0xf] %vm382, %v353
    %386 = vst.msk [vmem:[%s381 + $0x19] sm:$0xf] %vm382, %v374
    %387 = vst.msk [vmem:[%s381 + $0x31] sm:$0xf] %vm382, %v354
    %388 = vst.msk [vmem:[%s381 + $0x39] sm:$0xf] %vm382, %v375
    %389 = vst.msk [vmem:[%s381 + $0x41] sm:$0xf] %vm382, %v355
    %390 = vst.msk [vmem:[%s381 + $0x49] sm:$0xf] %vm382, %v376
    %v391 = vld [vmem:[#allocation2] sm:$0xf]
    %v392 = vld [vmem:[#allocation2 + $0x8] sm:$0xf]
    %v393 = vld [vmem:[#allocation2 + $0x10] sm:$0xf]
    %v394 = vld [vmem:[#allocation2 + $0x18] sm:$0xf]
    %v395 = vld [vmem:[#allocation2 + $0x30] sm:$0xf]
    %v396 = vld [vmem:[#allocation2 + $0x38] sm:$0xf]
    %v397 = vld [vmem:[#allocation2 + $0x40] sm:$0xf]
    %v398 = vld [vmem:[#allocation2 + $0x48] sm:$0xf]
    %v399 = vld [vmem:[#allocation2 + $0x1] sm:$0xf]
    %v400 = vld [vmem:[#allocation2 + $0x9] sm:$0xf]
    %v401 = vld [vmem:[#allocation2 + $0x11] sm:$0xf]
    %v402 = vld [vmem:[#allocation2 + $0x19] sm:$0xf]
    %v403 = vld [vmem:[#allocation2 + $0x31] sm:$0xf]
    %v404 = vld [vmem:[#allocation2 + $0x39] sm:$0xf]
    %v405 = vld [vmem:[#allocation2 + $0x41] sm:$0xf]
    %v406 = vld [vmem:[#allocation2 + $0x49] sm:$0xf]
    %v407 = vld [vmem:[#allocation2 + $0x2] sm:$0xf]
    %v408 = vld [vmem:[#allocation2 + $0xa] sm:$0xf]
    %v409 = vld [vmem:[#allocation2 + $0x12] sm:$0xf]
    %v410 = vld [vmem:[#allocation2 + $0x1a] sm:$0xf]
    %v411 = vld [vmem:[#allocation2 + $0x32] sm:$0xf]
    %v412 = vld [vmem:[#allocation2 + $0x3a] sm:$0xf]
    %v413 = vld [vmem:[#allocation2 + $0x42] sm:$0xf]
    %v414 = vld [vmem:[#allocation2 + $0x4a] sm:$0xf]
    %v415 = vld [vmem:[%s381] sm:$0xf]
    %v416 = vld [vmem:[%s381 + $0x8] sm:$0xf]
    %v417 = vld [vmem:[%s381 + $0x10] sm:$0xf]
    %v418 = vld [vmem:[%s381 + $0x18] sm:$0xf]
    %v419 = vld [vmem:[%s381 + $0x30] sm:$0xf]
    %v420 = vld [vmem:[%s381 + $0x38] sm:$0xf]
    %v421 = vld [vmem:[%s381 + $0x40] sm:$0xf]
    %v422 = vld [vmem:[%s381 + $0x48] sm:$0xf]
    %v423 = vld [vmem:[%s381 + $0x1] sm:$0xf]
    %v424 = vld [vmem:[%s381 + $0x9] sm:$0xf]
    %v425 = vld [vmem:[%s381 + $0x11] sm:$0xf]
    %v426 = vld [vmem:[%s381 + $0x19] sm:$0xf]
    %v427 = vld [vmem:[%s381 + $0x31] sm:$0xf]
    %v428 = vld [vmem:[%s381 + $0x39] sm:$0xf]
    %v429 = vld [vmem:[%s381 + $0x41] sm:$0xf]
    %v430 = vld [vmem:[%s381 + $0x49] sm:$0xf]
    %v431 = vld [vmem:[%s381 + $0x2] sm:$0xf]
    %v432 = vld [vmem:[%s381 + $0xa] sm:$0xf]
    %v433 = vld [vmem:[%s381 + $0x12] sm:$0xf]
    %v434 = vld [vmem:[%s381 + $0x1a] sm:$0xf]
    %v435 = vld [vmem:[%s381 + $0x32] sm:$0xf]
    %v436 = vld [vmem:[%s381 + $0x3a] sm:$0xf]
    %v437 = vld [vmem:[%s381 + $0x42] sm:$0xf]
    %v438 = vld [vmem:[%s381 + $0x4a] sm:$0xf]
    %s439 = scalar_lea.vmem [#allocation2], 16
    %v440 = vld [vmem:[%s439] sm:$0xf]
    %v441 = vld [vmem:[%s439 + $0x8] sm:$0xf]
    %v442 = vld [vmem:[%s439 + $0x10] sm:$0xf]
    %v443 = vld [vmem:[%s439 + $0x18] sm:$0xf]
    %v444 = vld [vmem:[%s439 + $0x30] sm:$0xf]
    %v445 = vld [vmem:[%s439 + $0x38] sm:$0xf]
    %v446 = vld [vmem:[%s439 + $0x40] sm:$0xf]
    %v447 = vld [vmem:[%s439 + $0x48] sm:$0xf]
    %v448 = vld [vmem:[%s439 + $0x1] sm:$0xf]
    %v449 = vld [vmem:[%s439 + $0x9] sm:$0xf]
    %v450 = vld [vmem:[%s439 + $0x11] sm:$0xf]
    %v451 = vld [vmem:[%s439 + $0x19] sm:$0xf]
    %v452 = vld [vmem:[%s439 + $0x31] sm:$0xf]
    %v453 = vld [vmem:[%s439 + $0x39] sm:$0xf]
    %v454 = vld [vmem:[%s439 + $0x41] sm:$0xf]
    %v455 = vld [vmem:[%s439 + $0x49] sm:$0xf]
    %v456 = vld [vmem:[%s439 + $0x2] sm:$0xf]
    %v457 = vld [vmem:[%s439 + $0xa] sm:$0xf]
    %v458 = vld [vmem:[%s439 + $0x12] sm:$0xf]
    %v459 = vld [vmem:[%s439 + $0x1a] sm:$0xf]
    %v460 = vld [vmem:[%s439 + $0x32] sm:$0xf]
    %v461 = vld [vmem:[%s439 + $0x3a] sm:$0xf]
    %v462 = vld [vmem:[%s439 + $0x42] sm:$0xf]
    %v463 = vld [vmem:[%s439 + $0x4a] sm:$0xf]
    %472 = vrot.lane.b32.xlu0 %v399, 64
    %v473 = vpop.permute.xlu0 %472
    %474 = vrot.lane.b32.xlu0 %v400, 64
    %v475 = vpop.permute.xlu0 %474
    %476 = vrot.lane.b32.xlu0 %v401, 64
    %v477 = vpop.permute.xlu0 %476
    %478 = vrot.lane.b32.xlu0 %v402, 64
    %v479 = vpop.permute.xlu0 %478
    %480 = vrot.lane.b32.xlu0 %v403, 64
    %v481 = vpop.permute.xlu0 %480
    %482 = vrot.lane.b32.xlu0 %v404, 64
    %v483 = vpop.permute.xlu0 %482
    %484 = vrot.lane.b32.xlu0 %v405, 64
    %v485 = vpop.permute.xlu0 %484
    %486 = vrot.lane.b32.xlu0 %v406, 64
    %v487 = vpop.permute.xlu0 %486
    %504 = vrot.lane.b32.xlu0 %v415, 64
    %v505 = vpop.permute.xlu0 %504
    %506 = vrot.lane.b32.xlu0 %v416, 64
    %v507 = vpop.permute.xlu0 %506
    %508 = vrot.lane.b32.xlu0 %v417, 64
    %v509 = vpop.permute.xlu0 %508
    %510 = vrot.lane.b32.xlu0 %v418, 64
    %v511 = vpop.permute.xlu0 %510
    %512 = vrot.lane.b32.xlu0 %v419, 64
    %v513 = vpop.permute.xlu0 %512
    %514 = vrot.lane.b32.xlu0 %v420, 64
    %v515 = vpop.permute.xlu0 %514
    %516 = vrot.lane.b32.xlu0 %v421, 64
    %v517 = vpop.permute.xlu0 %516
    %518 = vrot.lane.b32.xlu0 %v422, 64
    %v519 = vpop.permute.xlu0 %518
    %536 = vrot.lane.b32.xlu0 %v431, 64
    %v537 = vpop.permute.xlu0 %536
    %538 = vrot.lane.b32.xlu0 %v432, 64
    %v539 = vpop.permute.xlu0 %538
    %540 = vrot.lane.b32.xlu0 %v433, 64
    %v541 = vpop.permute.xlu0 %540
    %542 = vrot.lane.b32.xlu0 %v434, 64
    %v543 = vpop.permute.xlu0 %542
    %544 = vrot.lane.b32.xlu0 %v435, 64
    %v545 = vpop.permute.xlu0 %544
    %546 = vrot.lane.b32.xlu0 %v436, 64
    %v547 = vpop.permute.xlu0 %546
    %548 = vrot.lane.b32.xlu0 %v437, 64
    %v549 = vpop.permute.xlu0 %548
    %550 = vrot.lane.b32.xlu0 %v438, 64
    %v551 = vpop.permute.xlu0 %550
    %568 = vrot.lane.b32.xlu0 %v448, 64
    %v569 = vpop.permute.xlu0 %568
    %570 = vrot.lane.b32.xlu0 %v449, 64
    %v571 = vpop.permute.xlu0 %570
    %572 = vrot.lane.b32.xlu0 %v450, 64
    %v573 = vpop.permute.xlu0 %572
    %574 = vrot.lane.b32.xlu0 %v451, 64
    %v575 = vpop.permute.xlu0 %574
    %576 = vrot.lane.b32.xlu0 %v452, 64
    %v577 = vpop.permute.xlu0 %576
    %578 = vrot.lane.b32.xlu0 %v453, 64
    %v579 = vpop.permute.xlu0 %578
    %580 = vrot.lane.b32.xlu0 %v454, 64
    %v581 = vpop.permute.xlu0 %580
    %582 = vrot.lane.b32.xlu0 %v455, 64
    %v583 = vpop.permute.xlu0 %582
    %v592 = vsel %vm277, %v391, %v473
    %v593 = vsel %vm277, %v392, %v475
    %v594 = vsel %vm277, %v393, %v477
    %v595 = vsel %vm277, %v394, %v479
    %v596 = vsel %vm277, %v395, %v481
    %v597 = vsel %vm277, %v396, %v483
    %v598 = vsel %vm277, %v397, %v485
    %v599 = vsel %vm277, %v398, %v487
    %v600 = vsel %vm277, %v407, %v505
    %v601 = vsel %vm277, %v408, %v507
    %v602 = vsel %vm277, %v409, %v509
    %v603 = vsel %vm277, %v410, %v511
    %v604 = vsel %vm277, %v411, %v513
    %v605 = vsel %vm277, %v412, %v515
    %v606 = vsel %vm277, %v413, %v517
    %v607 = vsel %vm277, %v414, %v519
    %v608 = vsel %vm277, %v423, %v537
    %v609 = vsel %vm277, %v424, %v539
    %v610 = vsel %vm277, %v425, %v541
    %v611 = vsel %vm277, %v426, %v543
    %v612 = vsel %vm277, %v427, %v545
    %v613 = vsel %vm277, %v428, %v547
    %v614 = vsel %vm277, %v429, %v549
    %v615 = vsel %vm277, %v430, %v551
    %v616 = vsel %vm277, %v440, %v569
    %v617 = vsel %vm277, %v441, %v571
    %v618 = vsel %vm277, %v442, %v573
    %v619 = vsel %vm277, %v443, %v575
    %v620 = vsel %vm277, %v444, %v577
    %v621 = vsel %vm277, %v445, %v579
    %v622 = vsel %vm277, %v446, %v581
    %v623 = vsel %vm277, %v447, %v583
    %v664 = vrot.slane %v600, 4
    %v665 = vrot.slane %v616, 4
    %v666 = vrot.slane %v601, 4
    %v667 = vrot.slane %v617, 4
    %v668 = vrot.slane %v602, 4
    %v669 = vrot.slane %v618, 4
    %v670 = vrot.slane %v603, 4
    %v671 = vrot.slane %v619, 4
    %v672 = vrot.slane %v604, 4
    %v673 = vrot.slane %v620, 4
    %v674 = vrot.slane %v605, 4
    %v675 = vrot.slane %v621, 4
    %v676 = vrot.slane %v606, 4
    %v677 = vrot.slane %v622, 4
    %v678 = vrot.slane %v607, 4
    %v679 = vrot.slane %v623, 4
    %vm680 = vcmask 1043456
    %v681 = vsel %vm680, %v592, %v664
    %v682 = vsel %vm680, %v608, %v665
    %v683 = vsel %vm680, %v593, %v666
    %v684 = vsel %vm680, %v609, %v667
    %v685 = vsel %vm680, %v594, %v668
    %v686 = vsel %vm680, %v610, %v669
    %v687 = vsel %vm680, %v595, %v670
    %v688 = vsel %vm680, %v611, %v671
    %v689 = vsel %vm680, %v596, %v672
    %v690 = vsel %vm680, %v612, %v673
    %v691 = vsel %vm680, %v597, %v674
    %v692 = vsel %vm680, %v613, %v675
    %v693 = vsel %vm680, %v598, %v676
    %v694 = vsel %vm680, %v614, %v677
    %v695 = vsel %vm680, %v599, %v678
    %v696 = vsel %vm680, %v615, %v679
    %697 = vst [vmem:[#allocation1] ss:$2 sm:$0xff] %v681
    %s698 = scalar_lea.vmem [#allocation1], 1
    %699 = vst [vmem:[%s698] ss:$2 sm:$0xff] %v683
    %s700 = scalar_lea.vmem [#allocation1], 16
    %701 = vst [vmem:[%s700] ss:$2 sm:$0xff] %v682
    %s702 = scalar_lea.vmem [#allocation1], 17
    %703 = vst [vmem:[%s702] ss:$2 sm:$0xff] %v684
    %s704 = scalar_lea.vmem [#allocation1], 32
    %705 = vst [vmem:[%s704] ss:$2 sm:$0xff] %v456
    %s706 = scalar_lea.vmem [#allocation1], 33
    %707 = vst [vmem:[%s706] ss:$2 sm:$0xff] %v457
    %s708 = scalar_lea.vmem [#allocation1], 48
    %709 = vst [vmem:[%s708] ss:$2 sm:$0xff] %v685
    %s710 = scalar_lea.vmem [#allocation1], 49
    %711 = vst [vmem:[%s710] ss:$2 sm:$0xff] %v687
    %v712 = vld.sshfl [vmem:[#allocation1] sm:$0xff pattern:$0x75316420]
    %v713 = vld.sshfl [vmem:[#allocation1 + $0x8] sm:$0xff pattern:$0x75316420]
    %v714 = vld.sshfl [vmem:[#allocation1 + $0x10] sm:$0xff pattern:$0x75316420]
    %v715 = vld.sshfl [vmem:[#allocation1 + $0x18] sm:$0xff pattern:$0x75316420]
    %v716 = vld.sshfl [vmem:[#allocation1 + $0x20] sm:$0xff pattern:$0x75316420]
    %v717 = vld.sshfl [vmem:[#allocation1 + $0x30] sm:$0xff pattern:$0x75316420]
    %v718 = vld.sshfl [vmem:[#allocation1 + $0x38] sm:$0xff pattern:$0x75316420]
    %719 = vst [vmem:[#allocation1] ss:$2 sm:$0xff] %v686
    %720 = vst [vmem:[%s698] ss:$2 sm:$0xff] %v688
    %721 = vst [vmem:[%s700] ss:$2 sm:$0xff] %v458
    %722 = vst [vmem:[%s702] ss:$2 sm:$0xff] %v459
    %723 = vst [vmem:[%s704] ss:$2 sm:$0xff] %v689
    %724 = vst [vmem:[%s706] ss:$2 sm:$0xff] %v691
    %725 = vst [vmem:[%s708] ss:$2 sm:$0xff] %v690
    %726 = vst [vmem:[%s710] ss:$2 sm:$0xff] %v692
    %v727 = vld.sshfl [vmem:[#allocation1] sm:$0xff pattern:$0x75316420]
    %v728 = vld.sshfl [vmem:[#allocation1 + $0x8] sm:$0xff pattern:$0x75316420]
    %v729 = vld.sshfl [vmem:[#allocation1 + $0x10] sm:$0xff pattern:$0x75316420]
    %v730 = vld.sshfl [vmem:[#allocation1 + $0x20] sm:$0xff pattern:$0x75316420]
    %v731 = vld.sshfl [vmem:[#allocation1 + $0x28] sm:$0xff pattern:$0x75316420]
    %v732 = vld.sshfl [vmem:[#allocation1 + $0x30] sm:$0xff pattern:$0x75316420]
    %v733 = vld.sshfl [vmem:[#allocation1 + $0x38] sm:$0xff pattern:$0x75316420]
    %734 = vst [vmem:[#allocation1] ss:$2 sm:$0xff] %v460
    %735 = vst [vmem:[%s698] ss:$2 sm:$0xff] %v461
    %736 = vst [vmem:[%s700] ss:$2 sm:$0xff] %v693
    %737 = vst [vmem:[%s702] ss:$2 sm:$0xff] %v695
    %738 = vst [vmem:[%s704] ss:$2 sm:$0xff] %v694
    %739 = vst [vmem:[%s706] ss:$2 sm:$0xff] %v696
    %740 = vst [vmem:[%s708] ss:$2 sm:$0xff] %v462
    %741 = vst [vmem:[%s710] ss:$2 sm:$0xff] %v463
    %v742 = vld.sshfl [vmem:[#allocation1] sm:$0xff pattern:$0x75316420]
    %v743 = vld.sshfl [vmem:[#allocation1 + $0x10] sm:$0xff pattern:$0x75316420]
    %v744 = vld.sshfl [vmem:[#allocation1 + $0x18] sm:$0xff pattern:$0x75316420]
    %v745 = vld.sshfl [vmem:[#allocation1 + $0x20] sm:$0xff pattern:$0x75316420]
    %v746 = vld.sshfl [vmem:[#allocation1 + $0x28] sm:$0xff pattern:$0x75316420]
    %v747 = vld.sshfl [vmem:[#allocation1 + $0x30] sm:$0xff pattern:$0x75316420]
    %v768 = vpack.c.bf16 %v717, %v712
    %v769 = vpack.c.bf16 %v718, %v713
    %v770 = vpack.c.bf16 %v727, %v714
    %v771 = vpack.c.bf16 %v728, %v715
    %v772 = vpack.c.bf16 %v729, %v716
    %v773 = vpack.c.bf16 %v743, %v730
    %v774 = vpack.c.bf16 %v744, %v731
    %v775 = vpack.c.bf16 %v745, %v732
    %v776 = vpack.c.bf16 %v746, %v733
    %v777 = vpack.c.bf16 %v747, %v742
    %v778 = vld [vmem:[%s4] sm:$0xf]
    %v779 = vld [vmem:[%s4 + $0x4] sm:$0xf]
    %v780 = vld [vmem:[%s4 + $0x8] sm:$0xf]
    %v781 = vld [vmem:[%s4 + $0xc] sm:$0xf]
    %v782 = vld [vmem:[%s4 + $0x10] sm:$0xf]
    %v783 = vld [vmem:[%s4 + $0x14] sm:$0xf]
    %v784 = vld [vmem:[%s4 + $0x18] sm:$0xf]
    %v785 = vld [vmem:[%s4 + $0x1c] sm:$0xf]
    %v786 = vld [vmem:[%s4 + $0x20] sm:$0xf]
    %v787 = vld [vmem:[%s4 + $0x24] sm:$0xf]
    %v788 = vld [vmem:[%s4 + $0x28] sm:$0xf]
    %v789 = vld [vmem:[%s4 + $0x2c] sm:$0xf]
    %v790 = vld [vmem:[%s4 + $0x30] sm:$0xf]
    %v791 = vld [vmem:[%s4 + $0x34] sm:$0xf]
    %v792 = vld [vmem:[%s4 + $0x38] sm:$0xf]
    %v793 = vld [vmem:[%s4 + $0x3c] sm:$0xf]
    %v794 = vld [vmem:[%s4 + $0x40] sm:$0xf]
    %v795 = vld [vmem:[%s4 + $0x44] sm:$0xf]
    %v796 = vld [vmem:[%s4 + $0x48] sm:$0xf]
    %v797 = vld [vmem:[%s4 + $0x4c] sm:$0xf]
    %v798 = vld [vmem:[%s4 + $0x50] sm:$0xf]
    %v799 = vld [vmem:[%s4 + $0x54] sm:$0xf]
    %v800 = vld [vmem:[%s4 + $0x58] sm:$0xf]
    %v801 = vld [vmem:[%s4 + $0x5c] sm:$0xf]
    %v802 = vld [vmem:[%s4 + $0x60] sm:$0xf]
    %v803 = vld [vmem:[%s4 + $0x64] sm:$0xf]
    %v804 = vld [vmem:[%s4 + $0x68] sm:$0xf]
    %v805 = vld [vmem:[%s4 + $0x6c] sm:$0xf]
    %v806 = vld [vmem:[%s4 + $0x70] sm:$0xf]
    %v807 = vld [vmem:[%s4 + $0x74] sm:$0xf]
    %v808 = vld [vmem:[%s4 + $0x78] sm:$0xf]
    %v809 = vld [vmem:[%s4 + $0x7c] sm:$0xf]
    %v810 = vld [vmem:[%s4 + $0x80] sm:$0xf]
    %v811 = vld [vmem:[%s4 + $0x84] sm:$0xf]
    %v812 = vld [vmem:[%s4 + $0x88] sm:$0xf]
    %v813 = vld [vmem:[%s4 + $0x8c] sm:$0xf]
    %v814 = vld [vmem:[%s4 + $0x90] sm:$0xf]
    %v815 = vld [vmem:[%s4 + $0x94] sm:$0xf]
    %v816 = vld [vmem:[%s4 + $0x98] sm:$0xf]
    %v817 = vld [vmem:[%s4 + $0x9c] sm:$0xf]
    %v818 = vld [vmem:[%s4 + $0xa0] sm:$0xf]
    %v819 = vld [vmem:[%s4 + $0xa4] sm:$0xf]
    %v820 = vld [vmem:[%s4 + $0xa8] sm:$0xf]
    %v821 = vld [vmem:[%s4 + $0xac] sm:$0xf]
    %v822 = vld [vmem:[%s4 + $0xb0] sm:$0xf]
    %v823 = vld [vmem:[%s4 + $0xb4] sm:$0xf]
    %v824 = vld [vmem:[%s4 + $0xb8] sm:$0xf]
    %v825 = vld [vmem:[%s4 + $0xbc] sm:$0xf]
    %v826 = vld [vmem:[%s4 + $0xc0] sm:$0xf]
    %v827 = vld [vmem:[%s4 + $0xc4] sm:$0xf]
    %v828 = vld [vmem:[%s4 + $0xc8] sm:$0xf]
    %v829 = vld [vmem:[%s4 + $0xcc] sm:$0xf]
    %v830 = vld [vmem:[%s4 + $0xd0] sm:$0xf]
    %v831 = vld [vmem:[%s4 + $0xd4] sm:$0xf]
    %v832 = vld [vmem:[%s4 + $0xd8] sm:$0xf]
    %v833 = vld [vmem:[%s4 + $0xdc] sm:$0xf]
    %v834 = vld [vmem:[%s4 + $0xe0] sm:$0xf]
    %v835 = vld [vmem:[%s4 + $0xe4] sm:$0xf]
    %v836 = vld [vmem:[%s4 + $0xe8] sm:$0xf]
    %v837 = vld [vmem:[%s4 + $0xec] sm:$0xf]
    %v838 = vld [vmem:[%s4 + $0xf0] sm:$0xf]
    %v839 = vld [vmem:[%s4 + $0xf4] sm:$0xf]
    %v840 = vld [vmem:[%s4 + $0xf8] sm:$0xf]
    %v841 = vld [vmem:[%s4 + $0xfc] sm:$0xf]
    %v842 = vld [vmem:[%s4 + $0x100] sm:$0xf]
    %v843 = vld [vmem:[%s4 + $0x104] sm:$0xf]
    %v844 = vld [vmem:[%s4 + $0x108] sm:$0xf]
    %v845 = vld [vmem:[%s4 + $0x10c] sm:$0xf]
    %v846 = vld [vmem:[%s4 + $0x110] sm:$0xf]
    %v847 = vld [vmem:[%s4 + $0x114] sm:$0xf]
    %v848 = vld [vmem:[%s4 + $0x118] sm:$0xf]
    %v849 = vld [vmem:[%s4 + $0x11c] sm:$0xf]
    %v922 = vunpack.c.l.b16 %v778
    %v923 = vunpack.c.l.b16 %v779
    %v924 = vunpack.c.l.b16 %v780
    %v925 = vunpack.c.l.b16 %v781
    %v926 = vunpack.c.l.b16 %v782
    %v927 = vunpack.c.l.b16 %v783
    %v928 = vunpack.c.l.b16 %v784
    %v929 = vunpack.c.l.b16 %v785
    %v930 = vunpack.c.l.b16 %v786
    %v931 = vunpack.c.l.b16 %v787
    %v932 = vunpack.c.l.b16 %v788
    %v933 = vunpack.c.l.b16 %v789
    %v934 = vunpack.c.l.b16 %v790
    %v935 = vunpack.c.l.b16 %v791
    %v936 = vunpack.c.l.b16 %v792
    %v937 = vunpack.c.l.b16 %v793
    %v938 = vunpack.c.l.b16 %v794
    %v939 = vunpack.c.l.b16 %v795
    %v940 = vunpack.c.l.b16 %v796
    %v941 = vunpack.c.l.b16 %v797
    %v942 = vunpack.c.l.b16 %v798
    %v943 = vunpack.c.l.b16 %v799
    %v944 = vunpack.c.l.b16 %v800
    %v945 = vunpack.c.l.b16 %v801
    %v946 = vunpack.c.l.b16 %v802
    %v947 = vunpack.c.l.b16 %v803
    %v948 = vunpack.c.l.b16 %v804
    %v949 = vunpack.c.l.b16 %v805
    %v950 = vunpack.c.l.b16 %v806
    %v951 = vunpack.c.l.b16 %v807
    %v952 = vunpack.c.l.b16 %v808
    %v953 = vunpack.c.l.b16 %v809
    %v954 = vunpack.c.l.b16 %v810
    %v955 = vunpack.c.l.b16 %v811
    %v956 = vunpack.c.l.b16 %v812
    %v957 = vunpack.c.l.b16 %v813
    %v958 = vunpack.c.l.b16 %v814
    %v959 = vunpack.c.l.b16 %v815
    %v960 = vunpack.c.l.b16 %v816
    %v961 = vunpack.c.l.b16 %v817
    %v962 = vunpack.c.l.b16 %v818
    %v963 = vunpack.c.l.b16 %v819
    %v964 = vunpack.c.l.b16 %v820
    %v965 = vunpack.c.l.b16 %v821
    %v966 = vunpack.c.l.b16 %v822
    %v967 = vunpack.c.l.b16 %v823
    %v968 = vunpack.c.l.b16 %v824
    %v969 = vunpack.c.l.b16 %v825
    %v970 = vunpack.c.l.b16 %v826
    %v971 = vunpack.c.l.b16 %v827
    %v972 = vunpack.c.l.b16 %v828
    %v973 = vunpack.c.l.b16 %v829
    %v974 = vunpack.c.l.b16 %v830
    %v975 = vunpack.c.l.b16 %v831
    %v976 = vunpack.c.l.b16 %v832
    %v977 = vunpack.c.l.b16 %v833
    %v978 = vunpack.c.l.b16 %v834
    %v979 = vunpack.c.l.b16 %v835
    %v980 = vunpack.c.l.b16 %v836
    %v981 = vunpack.c.l.b16 %v837
    %v982 = vunpack.c.l.b16 %v838
    %v983 = vunpack.c.l.b16 %v839
    %v984 = vunpack.c.l.b16 %v840
    %v985 = vunpack.c.l.b16 %v841
    %v986 = vunpack.c.l.b16 %v842
    %v987 = vunpack.c.l.b16 %v843
    %v988 = vunpack.c.l.b16 %v844
    %v989 = vunpack.c.l.b16 %v845
    %v990 = vunpack.c.l.b16 %v846
    %v991 = vunpack.c.l.b16 %v847
    %v992 = vunpack.c.l.b16 %v848
    %v993 = vunpack.c.l.b16 %v849
    %v994 = vpack.c.b16 %v923, %v922
    %v995 = vpack.c.b16 %v925, %v924
    %v996 = vpack.c.b16 %v927, %v926
    %v997 = vpack.c.b16 %v929, %v928
    %v998 = vpack.c.b16 %v931, %v930
    %v999 = vpack.c.b16 %v933, %v932
    %v1000 = vpack.c.b16 %v935, %v934
    %v1001 = vpack.c.b16 %v937, %v936
    %v1002 = vpack.c.b16 %v939, %v938
    %v1003 = vpack.c.b16 %v941, %v940
    %v1004 = vpack.c.b16 %v943, %v942
    %v1005 = vpack.c.b16 %v945, %v944
    %v1006 = vpack.c.b16 %v947, %v946
    %v1007 = vpack.c.b16 %v949, %v948
    %v1008 = vpack.c.b16 %v951, %v950
    %v1009 = vpack.c.b16 %v953, %v952
    %v1010 = vpack.c.b16 %v955, %v954
    %v1011 = vpack.c.b16 %v957, %v956
    %v1012 = vpack.c.b16 %v959, %v958
    %v1013 = vpack.c.b16 %v961, %v960
    %v1014 = vpack.c.b16 %v963, %v962
    %v1015 = vpack.c.b16 %v965, %v964
    %v1016 = vpack.c.b16 %v967, %v966
    %v1017 = vpack.c.b16 %v969, %v968
    %v1018 = vpack.c.b16 %v971, %v970
    %v1019 = vpack.c.b16 %v973, %v972
    %v1020 = vpack.c.b16 %v975, %v974
    %v1021 = vpack.c.b16 %v977, %v976
    %v1022 = vpack.c.b16 %v979, %v978
    %v1023 = vpack.c.b16 %v981, %v980
    %v1024 = vpack.c.b16 %v983, %v982
    %v1025 = vpack.c.b16 %v985, %v984
    %v1026 = vpack.c.b16 %v987, %v986
    %v1027 = vpack.c.b16 %v989, %v988
    %v1028 = vpack.c.b16 %v991, %v990
    %v1029 = vpack.c.b16 %v993, %v992
    %v1067 = vsel %vm277, %v772, 0
    %v1070 = vsel %vm277, %v777, 0
    %1072 = vmatpush.bf16.msra.mxu0 %v1001
    %1073 = vmatpush.bf16.msra.mxu0 %v1000
    %1074 = vmatpush.bf16.msra.mxu0 %v999
    %1075 = vmatpush.bf16.msra.mxu0 %v998
    %1076 = vmatpush.bf16.msra.mxu0 %v997
    %1077 = vmatpush.bf16.msra.mxu0 %v996
    %1078 = vmatpush.bf16.msra.mxu0 %v995
    %1079 = vmatpush.bf16.msra.mxu0 %v994
    %1080 = vmatmul.bf16.gmra.mxu0 %v768
    %v1081 = vpop.f32.mrf.mxu0
    %v1082 = vadd.f32 0.0, %v1081
    %v1083 = vpop.f32.mrf.mxu0
    %v1084 = vadd.f32 0.0, %v1083
    %1085 = vmatmul.bf16.gmra.mxu0 %v773
    %v1086 = vpop.f32.mrf.mxu0
    %v1087 = vadd.f32 0.0, %v1086
    %v1088 = vpop.f32.mrf.mxu0
    %v1089 = vadd.f32 0.0, %v1088
    %1090 = vdwg.mxu0
    %1091 = vmatpush.bf16.msra.mxu0 %v1009
    %1092 = vmatpush.bf16.msra.mxu0 %v1008
    %1093 = vmatpush.bf16.msra.mxu0 %v1007
    %1094 = vmatpush.bf16.msra.mxu0 %v1006
    %1095 = vmatpush.bf16.msra.mxu0 %v1005
    %1096 = vmatpush.bf16.msra.mxu0 %v1004
    %1097 = vmatpush.bf16.msra.mxu0 %v1003
    %1098 = vmatpush.bf16.msra.mxu0 %v1002
    %1099 = vmatmul.bf16.gmra.mxu0 %v769
    %v1100 = vpop.f32.mrf.mxu0
    %v1101 = vadd.f32 %v1082, %v1100
    %v1102 = vpop.f32.mrf.mxu0
    %v1103 = vadd.f32 %v1084, %v1102
    %1104 = vmatmul.bf16.gmra.mxu0 %v774
    %v1105 = vpop.f32.mrf.mxu0
    %v1106 = vadd.f32 %v1087, %v1105
    %v1107 = vpop.f32.mrf.mxu0
    %v1108 = vadd.f32 %v1089, %v1107
    %1109 = vdwg.mxu0
    %1110 = vmatpush.bf16.msra.mxu0 %v1017
    %1111 = vmatpush.bf16.msra.mxu0 %v1016
    %1112 = vmatpush.bf16.msra.mxu0 %v1015
    %1113 = vmatpush.bf16.msra.mxu0 %v1014
    %1114 = vmatpush.bf16.msra.mxu0 %v1013
    %1115 = vmatpush.bf16.msra.mxu0 %v1012
    %1116 = vmatpush.bf16.msra.mxu0 %v1011
    %1117 = vmatpush.bf16.msra.mxu0 %v1010
    %1118 = vmatmul.bf16.gmra.mxu0 %v770
    %v1119 = vpop.f32.mrf.mxu0
    %v1120 = vadd.f32 %v1101, %v1119
    %v1121 = vpop.f32.mrf.mxu0
    %v1122 = vadd.f32 %v1103, %v1121
    %1123 = vmatmul.bf16.gmra.mxu0 %v775
    %v1124 = vpop.f32.mrf.mxu0
    %v1125 = vadd.f32 %v1106, %v1124
    %v1126 = vpop.f32.mrf.mxu0
    %v1127 = vadd.f32 %v1108, %v1126
    %1128 = vdwg.mxu0
    %1129 = vmatpush.bf16.msra.mxu0 %v1025
    %1130 = vmatpush.bf16.msra.mxu0 %v1024
    %1131 = vmatpush.bf16.msra.mxu0 %v1023
    %1132 = vmatpush.bf16.msra.mxu0 %v1022
    %1133 = vmatpush.bf16.msra.mxu0 %v1021
    %1134 = vmatpush.bf16.msra.mxu0 %v1020
    %1135 = vmatpush.bf16.msra.mxu0 %v1019
    %1136 = vmatpush.bf16.msra.mxu0 %v1018
    %1137 = vmatmul.bf16.gmra.mxu0 %v771
    %v1138 = vpop.f32.mrf.mxu0
    %v1139 = vadd.f32 %v1120, %v1138
    %v1140 = vpop.f32.mrf.mxu0
    %v1141 = vadd.f32 %v1122, %v1140
    %1142 = vmatmul.bf16.gmra.mxu0 %v776
    %v1143 = vpop.f32.mrf.mxu0
    %v1144 = vadd.f32 %v1125, %v1143
    %v1145 = vpop.f32.mrf.mxu0
    %v1146 = vadd.f32 %v1127, %v1145
    %1147 = vdwg.mxu0
    %1148 = vmatpush.bf16.msra.mxu0 0
    %1149 = vmatpush.bf16.msra.mxu0 0
    %1150 = vmatpush.bf16.msra.mxu0 0
    %1151 = vmatpush.bf16.msra.mxu0 0
    %1152 = vmatpush.bf16.msra.mxu0 %v1029
    %1153 = vmatpush.bf16.msra.mxu0 %v1028
    %1154 = vmatpush.bf16.msra.mxu0 %v1027
    %1155 = vmatpush.bf16.msra.mxu0 %v1026
    %1156 = vmatmul.bf16.gmra.mxu0 %v1067
    %v1157 = vpop.f32.mrf.mxu0
    %v1158 = vadd.f32 %v1139, %v1157
    %v1159 = vpop.f32.mrf.mxu0
    %v1160 = vadd.f32 %v1141, %v1159
    %1161 = vmatmul.bf16.gmra.mxu0 %v1070
    %v1162 = vpop.f32.mrf.mxu0
    %v1163 = vadd.f32 %v1144, %v1162
    %v1164 = vpop.f32.mrf.mxu0
    %v1165 = vadd.f32 %v1146, %v1164
    %1166 = vdwg.mxu0
    %v1167 = vsel %vm277, %v1158, 0.0
    %v1168 = vsel %vm277, %v1160, 0.0
    %v1169 = vadd.f32 %v1167, %v1168
    %v1170 = vsel %vm277, %v1163, 0.0
    %v1171 = vadd.f32 %v1169, %v1170
    %v1172 = vsel %vm277, %v1165, 0.0
    %v1173 = vadd.f32 %v1171, %v1172
    %v1174 = vrot.slane %v1173, 4
    %v1175 = vadd.f32 %v1173, %v1174
    %v1176 = vrot.slane %v1175, 2
    %v1177 = vadd.f32 %v1175, %v1176
    %v1178 = vrot.slane %v1177, 1
    %v1179 = vadd.f32 %v1177, %v1178
    %v1180 = vmul.f32 %v1179, %v297
    %v1181 = vsub.f32 %v1158, %v1180
    %v1182 = vsub.f32 %v1160, %v1180
    %v1183 = vsub.f32 %v1163, %v1180
    %v1184 = vsub.f32 %v1165, %v1180
    %v1185 = vmul.f32 %v1181, %v1181
    %v1186 = vmul.f32 %v1182, %v1182
    %v1187 = vmul.f32 %v1183, %v1183
    %v1188 = vmul.f32 %v1184, %v1184
    %v1189 = vsel %vm277, %v1185, 0.0
    %v1190 = vsel %vm277, %v1186, 0.0
    %v1191 = vadd.f32 %v1189, %v1190
    %v1192 = vsel %vm277, %v1187, 0.0
    %v1193 = vadd.f32 %v1191, %v1192
    %v1194 = vsel %vm277, %v1188, 0.0
    %v1195 = vadd.f32 %v1193, %v1194
    %v1196 = vrot.slane %v1195, 4
    %v1197 = vadd.f32 %v1195, %v1196
    %v1198 = vrot.slane %v1197, 2
    %v1199 = vadd.f32 %v1197, %v1198
    %v1200 = vrot.slane %v1199, 1
    %v1201 = vadd.f32 %v1199, %v1200
    %v1202 = vmul.f32 %v1201, %v297
    %v1203 = vadd.f32 %v1202, 1e-05
    %v1204 = vrsqrt.pop %v1203
    %v1205 = vmul.f32 %v1204, %v1203
    %v1206 = vmul.f32 %v1205, %v1204
    %v1207 = vmul.f32 0.5, %v1206
    %v1208 = vsub.f32 1.5, %v1207
    %v1209 = vmul.f32 %v1204, %v1208
    %vm1210 = vweird.f32 %v1203
    %vm1211 = vweird.f32 %v1204
    %vm1212 = vmor %vm1210, %vm1211
    %v1213 = vsel %vm1212, %v1204, %v1209
    %v1214 = vmul.f32 %v1181, %v1213
    %v1215 = vmul.f32 %v1182, %v1213
    %v1216 = vmul.f32 %v1183, %v1213
    %v1217 = vmul.f32 %v1184, %v1213
    %v1218 = vld [vmem:[%s5] sm:$0x1]
    %v1220 = vperm.slane %v1218, 0
    %v1222 = vmul.f32 %v1214, %v1220
    %v1223 = vmul.f32 %v1215, %v1220
    %v1224 = vmul.f32 %v1216, %v1220
    %v1225 = vmul.f32 %v1217, %v1220
    %v1226 = vld [vmem:[%s6] sm:$0x1]
    %v1228 = vperm.slane %v1226, 0
    %v1230 = vadd.f32 %v1222, %v1228
    %v1231 = vadd.f32 %v1223, %v1228
    %v1232 = vadd.f32 %v1224, %v1228
    %v1233 = vadd.f32 %v1225, %v1228
    %v1234 = vld [vmem:[%s7] sm:$0xff]
    %v1235 = vld [vmem:[%s7 + $0x8] sm:$0xff]
    %v1236 = vld [vmem:[%s7 + $0x10] sm:$0xff]
    %v1237 = vld [vmem:[%s7 + $0x18] sm:$0xff]
    %v1238 = vadd.f32 %v1230, %v1234
    %v1239 = vadd.f32 %v1231, %v1235
    %v1240 = vadd.f32 %v1232, %v1236
    %v1241 = vadd.f32 %v1233, %v1237
    %v1242 = vmax.f32 %v1238, 0.0
    %v1243 = vmax.f32 %v1239, 0.0
    %v1244 = vmax.f32 %v1240, 0.0
    %v1245 = vmax.f32 %v1241, 0.0
    %1246 = vst.msk [vmem:[#allocation3] sm:$0xff] %vm277, %v1242
    %1247 = vst.msk [vmem:[#allocation3 + $0x8] sm:$0xff] %vm277, %v1243
    %1248 = vst.msk [vmem:[#allocation3 + $0x10] sm:$0xff] %vm277, %v1244
    %1249 = vst.msk [vmem:[#allocation3 + $0x18] sm:$0xff] %vm277, %v1245
    // Predicated region
    $region34: #{_lambda_.5} parent=1 // pred_check
      _
    $region35: #{_lambda_.5} parent=1 // pred_check_branch
      %1251 = sbr.rel (0) target = $region37
    $region36: #{_lambda_.5} parent=1 // pred_region
      %1253 = vsyncadd [#allocation4], 0
      %s1254 = sshll.u32 [#allocation3], 4
      %s1255 = int_to_ptr.vmem [resolvable:$true] %s1254
      %s1256 = sshll.u32 %s8, 4
      %s1257 = int_to_ptr.hbm [resolvable:$true] %s1256
      %1262 = dma.vmem_to_hbm [thread:$0]  %s1255, 512, %s1257, [#allocation4], 128, 128, 8
    $region37: #{_lambda_.5} parent=1 // pred_fallthru
      _
    // Predicated region
    $region38: #{_lambda_.5} parent=1 // pred_check
      _
    $region39: #{_lambda_.5} parent=1 // pred_check_branch
      %1264 = sbr.rel (0) target = $region41
    $region40: #{_lambda_.5} parent=1 // pred_region
      %1266 = dma.done [#allocation4], 512
    $region41: #{_lambda_.5} parent=1 // pred_fallthru
      _
    %1267 = vsyncpa [#allocation4], 1

</llo_original>
